<compile_context>
chip_gen: v5e
topology: v5e:2x2
jax: 0.10.0
libtpu: 0.0.40
codegen_flags: <defaults>
</compile_context>

<pallas_src>
import numpy as np
import jax
import jax.numpy as jnp
from jax import lax
from jax.experimental import pallas as pl
from jax.experimental.pallas import tpu as pltpu


# ------------------------------ Pallas kernel ------------------------------ #

def _make_bottleneck_kernel(H, W, planes, stride, has_down):
    HW = H * W
    Ho, Wo = H // stride, W // stride

    def kernel(*refs):
        it = iter(refs)
        x_ref = next(it)                                    # (HW, Cin) bf16
        pool_ref = next(it) if stride > 1 else None         # (Ho*Wo, HW) bf16
        w1_ref, b1_ref = next(it), next(it)                 # (Cin,P) bf16 / (1,P) f32
        w2_ref, b2_ref = next(it), next(it)                 # (9,P,P) bf16 / (1,P) f32
        w3_ref, b3_ref = next(it), next(it)                 # (P,4P) bf16 / (1,4P) f32
        if has_down:
            wd_ref, bd_ref = next(it), next(it)             # (Cin,4P) bf16 / (1,4P) f32
        o_ref = next(it)                                    # (Ho*Wo, 4P) f32
        ypad_ref = next(it)                                 # VMEM (H+2, W+2, P) f32

        x = x_ref[...]                                      # bf16

        # ---- conv1 (1x1) + bn1 (scale folded into w1) + relu ----
        y1 = jnp.dot(x, w1_ref[...], preferred_element_type=jnp.float32)
        y1 = jnp.maximum(y1 + b1_ref[...], 0.0)             # (HW, P) f32

        # ---- conv2 (3x3, pad 1): keep y1 resident in a padded VMEM scratch ----
        ypad_ref[...] = jnp.zeros_like(ypad_ref)
        ypad_ref[pl.ds(1, H), pl.ds(1, W), :] = y1.reshape(H, W, planes)

        acc = jnp.zeros((HW, planes), jnp.float32)
        for dh in range(3):
            for dw in range(3):
                patch = ypad_ref[pl.ds(dh, H), pl.ds(dw, W), :]
                patch = patch.reshape(HW, planes).astype(jnp.bfloat16)
                acc = acc + jnp.dot(patch, w2_ref[3 * dh + dw],
                                    preferred_element_type=jnp.float32)
        y2 = jnp.maximum(acc + b2_ref[...], 0.0).astype(jnp.bfloat16)   # (HW, P)

        # ---- AvgPool2d(stride) as a matmul (pools both branches) ----
        if stride > 1:
            pm = pool_ref[...]                              # (Ho*Wo, HW) bf16
            p2 = jnp.dot(pm, y2, preferred_element_type=jnp.float32).astype(jnp.bfloat16)
            xi = jnp.dot(pm, x, preferred_element_type=jnp.float32).astype(jnp.bfloat16)
        else:
            p2 = y2
            xi = x

        # ---- conv3 (1x1) + bn3 ----
        out = jnp.dot(p2, w3_ref[...], preferred_element_type=jnp.float32) + b3_ref[...]

        # ---- identity / downsample branch, fused (never written to HBM) ----
        if has_down:
            ident = jnp.dot(xi, wd_ref[...],
                            preferred_element_type=jnp.float32) + bd_ref[...]
        else:
            ident = xi.astype(jnp.float32)

        # ---- residual add + relu3 ----
        o_ref[...] = jnp.maximum(out + ident, 0.0).astype(o_ref.dtype)

    return kernel


# ------------------------------ Pallas wrapper ------------------------------ #

def bottleneck_forward(x_nchw, p, stride):
    """Fused Pallas implementation of Bottleneck.forward (input/output NCHW)."""
    N, Cin, H, W = x_nchw.shape
    planes = p['w1'].shape[1]
    cout = p['w3'].shape[1]
    has_down = (stride > 1) or (Cin != cout)
    assert H % stride == 0 and W % stride == 0
    assert W % 8 == 0  # keeps in-kernel (H,W,P)<->(H*W,P) reshapes layout-preserving
    Ho, Wo = H // stride, W // stride
    HW, HoWo = H * W, Ho * Wo

    # NCHW -> per-image matmul layout (N, H*W, Cin), stored bf16 (halves HBM traffic)
    x2d = jnp.transpose(x_nchw, (0, 2, 3, 1)).reshape(N, HW, Cin).astype(jnp.bfloat16)

    inputs = [x2d]
    in_specs = [pl.BlockSpec((None, HW, Cin), lambda n: (n, 0, 0))]

    if stride > 1:
        inputs.append(p['pool'])
        in_specs.append(pl.BlockSpec((HoWo, HW), lambda n: (0, 0)))

    def add_const(arr):
        inputs.append(arr)
        nd = arr.ndim
        in_specs.append(pl.BlockSpec(arr.shape, lambda n, _nd=nd: (0,) * _nd))

    add_const(p['w1']); add_const(p['b1'])
    add_const(p['w2']); add_const(p['b2'])
    add_const(p['w3']); add_const(p['b3'])
    if has_down:
        add_const(p['wd']); add_const(p['bd'])

    kernel = _make_bottleneck_kernel(H, W, planes, stride, has_down)

    out = pl.pallas_call(
        kernel,
        out_shape=jax.ShapeDtypeStruct((N, HoWo, cout), jnp.float32),
        grid=(N,),
        in_specs=in_specs,
        out_specs=pl.BlockSpec((None, HoWo, cout), lambda n: (n, 0, 0)),
        scratch_shapes=[pltpu.VMEM((H + 2, W + 2, planes), jnp.float32)],
        compiler_params=pltpu.CompilerParams(
            dimension_semantics=("parallel",),
            vmem_limit_bytes=32 * 1024 * 1024),
    )(*inputs)

    return out.reshape(N, Ho, Wo, cout).transpose(0, 3, 1, 2)   # back to NCHW


# ------------------------- parameters & reference -------------------------- #

def init_params(key, inplanes, planes, stride, H, W):
    exp = 4
    cout = planes * exp
    ks = jax.random.split(key, 20)

    def conv_w(k, shape):
        return 0.1 * jax.random.normal(k, shape, jnp.float32)

    def bn_fold(kg, kb, km, kv, c):
        gamma = 1.0 + 0.1 * jax.random.normal(kg, (c,), jnp.float32)
        beta = 0.1 * jax.random.normal(kb, (c,), jnp.float32)
        mean = 0.05 * jax.random.normal(km, (c,), jnp.float32)
        var = 1.0 + 0.1 * jnp.abs(jax.random.normal(kv, (c,), jnp.float32))
        eps = 1e-5
        scale = gamma / jnp.sqrt(var + eps)
        bias = beta - mean * scale
        return scale, bias

    raw = {}
    raw['w1_oihw'] = conv_w(ks[0], (planes, inplanes, 1, 1))
    raw['w2_oihw'] = conv_w(ks[1], (planes, planes, 3, 3))
    raw['w3_oihw'] = conv_w(ks[2], (cout, planes, 1, 1))
    raw['wd_oihw'] = conv_w(ks[3], (cout, inplanes, 1, 1))
    raw['s1'], raw['b1'] = bn_fold(ks[4], ks[5], ks[6], ks[7], planes)
    raw['s2'], raw['b2'] = bn_fold(ks[8], ks[9], ks[10], ks[11], planes)
    raw['s3'], raw['b3'] = bn_fold(ks[12], ks[13], ks[14], ks[15], cout)
    raw['sd'], raw['bd'] = bn_fold(ks[16], ks[17], ks[18], ks[19], cout)

    # Kernel-layout params: BN scale folded into weights, bf16 weights, f32 biases.
    w1 = (raw['w1_oihw'][:, :, 0, 0].T * raw['s1'][None, :]).astype(jnp.bfloat16)
    w2 = (raw['w2_oihw'].transpose(2, 3, 1, 0)
          * raw['s2'][None, None, None, :]).reshape(9, planes, planes).astype(jnp.bfloat16)
    w3 = (raw['w3_oihw'][:, :, 0, 0].T * raw['s3'][None, :]).astype(jnp.bfloat16)
    wd = (raw['wd_oihw'][:, :, 0, 0].T * raw['sd'][None, :]).astype(jnp.bfloat16)

    # Pooling matrix for AvgPool2d(stride): (Ho*Wo, H*W). 1/s^2 is exact in bf16
    # for power-of-two strides.
    pool = None
    if stride > 1:
        Ho, Wo = H // stride, W // stride
        pm = np.zeros((Ho * Wo, H * W), np.float32)
        inv = 1.0 / (stride * stride)
        for h in range(H):
            for w in range(W):
                pm[(h // stride) * Wo + (w // stride), h * W + w] = inv
        pool = jnp.asarray(pm, jnp.bfloat16)

    p = {
        'w1': w1, 'w2': w2, 'w3': w3, 'wd': wd,
        'b1': raw['b1'].reshape(1, -1), 'b2': raw['b2'].reshape(1, -1),
        'b3': raw['b3'].reshape(1, -1), 'bd': raw['bd'].reshape(1, -1),
        'pool': pool,
    }
    return p, raw


def ref_forward(x_nchw, raw, stride):
    """Pure-JAX f32 NCHW reference (mirrors the PyTorch forward, eval-mode BN)."""
    def conv(x, w, padding):
        return lax.conv_general_dilated(
            x, w, (1, 1), padding, dimension_numbers=('NCHW', 'OIHW', 'NCHW'))

    def bn(x, scale, bias):
        return x * scale[None, :, None, None] + bias[None, :, None, None]

    def pool(x, s):
        if s == 1:
            return x
        N, C, H, W = x.shape
        return x.reshape(N, C, H // s, s, W // s, s).mean(axis=(3, 5))

    out = jax.nn.relu(bn(conv(x_nchw, raw['w1_oihw'], 'VALID'), raw['s1'], raw['b1']))
    out = jax.nn.relu(bn(conv(out, raw['w2_oihw'], ((1, 1), (1, 1))), raw['s2'], raw['b2']))
    out = pool(out, stride)
    out = bn(conv(out, raw['w3_oihw'], 'VALID'), raw['s3'], raw['b3'])
    ident = bn(conv(pool(x_nchw, stride), raw['wd_oihw'], 'VALID'), raw['sd'], raw['bd'])
    return jax.nn.relu(out + ident)


# ---------------------------------- main ----------------------------------- #

if __name__ == "__main__":
    N, inplanes, H, W = 2, 4, 16, 16
    planes, stride = 4, 2          # exercises avgpool + downsample branch

    key = jax.random.PRNGKey(0)
    kx, kp = jax.random.split(key)
    x = jax.random.normal(kx, (N, inplanes, H, W), jnp.float32)   # NCHW, like PyTorch

    params, raw = init_params(kp, inplanes, planes, stride, H, W)

    out = jax.block_until_ready(bottleneck_forward(x, params, stride))
    ref = jax.block_until_ready(ref_forward(x, raw, stride))

    # bf16 activations/weights with f32 accumulation -> loosened tolerances.
    np.testing.assert_allclose(np.asarray(out), np.asarray(ref), rtol=2e-2, atol=2e-2)

    print("KERNEL_OK")
</pallas_src>

<mosaic_0001>
module attributes {stable_mosaic.version = 11 : i64} {
  func.func @kernel(%arg0: i32, %arg1: memref<1x256x4xbf16, #tpu.memory_space<vmem>>, %arg2: memref<64x256xbf16, #tpu.memory_space<vmem>>, %arg3: memref<4x4xbf16, #tpu.memory_space<vmem>>, %arg4: memref<1x4xf32, #tpu.memory_space<vmem>>, %arg5: memref<9x4x4xbf16, #tpu.memory_space<vmem>>, %arg6: memref<1x4xf32, #tpu.memory_space<vmem>>, %arg7: memref<4x16xbf16, #tpu.memory_space<vmem>>, %arg8: memref<1x16xf32, #tpu.memory_space<vmem>>, %arg9: memref<4x16xbf16, #tpu.memory_space<vmem>>, %arg10: memref<1x16xf32, #tpu.memory_space<vmem>>, %arg11: memref<1x64x16xf32, #tpu.memory_space<vmem>>, %arg12: memref<18x18x4xf32, #tpu.memory_space<vmem>>) attributes {dimension_semantics = [#tpu.dimension_semantics<parallel>], iteration_bounds = array<i64: 2>, scalar_prefetch = 0 : i64, scratch_operands = 1 : i64, tpu.core_type = #tpu.core_type<tc>, window_params = [{transform_indices = @transform_0, window_bounds = array<i64: 1, 256, 4>}, {pipeline_mode = #tpu.pipeline_mode<synchronous>, transform_indices = @transform_1, window_bounds = array<i64: 64, 256>}, {pipeline_mode = #tpu.pipeline_mode<synchronous>, transform_indices = @transform_2, window_bounds = array<i64: 4, 4>}, {pipeline_mode = #tpu.pipeline_mode<synchronous>, transform_indices = @transform_3, window_bounds = array<i64: 1, 4>}, {pipeline_mode = #tpu.pipeline_mode<synchronous>, transform_indices = @transform_4, window_bounds = array<i64: 9, 4, 4>}, {pipeline_mode = #tpu.pipeline_mode<synchronous>, transform_indices = @transform_5, window_bounds = array<i64: 1, 4>}, {pipeline_mode = #tpu.pipeline_mode<synchronous>, transform_indices = @transform_6, window_bounds = array<i64: 4, 16>}, {pipeline_mode = #tpu.pipeline_mode<synchronous>, transform_indices = @transform_7, window_bounds = array<i64: 1, 16>}, {pipeline_mode = #tpu.pipeline_mode<synchronous>, transform_indices = @transform_8, window_bounds = array<i64: 4, 16>}, {pipeline_mode = #tpu.pipeline_mode<synchronous>, transform_indices = @transform_9, window_bounds = array<i64: 1, 16>}, {transform_indices = @transform_10, window_bounds = array<i64: 1, 64, 16>}]} {
    %c0 = arith.constant 0 : index
    %c0_0 = arith.constant 0 : index
    %c0_1 = arith.constant 0 : index
    %0 = vector.load %arg1[%c0, %c0_0, %c0_1] : memref<1x256x4xbf16, #tpu.memory_space<vmem>>, vector<1x256x4xbf16>
    %1 = vector.shape_cast %0 : vector<1x256x4xbf16> to vector<256x4xbf16>
    %c0_2 = arith.constant 0 : index
    %c0_3 = arith.constant 0 : index
    %2 = vector.load %arg3[%c0_2, %c0_3] : memref<4x4xbf16, #tpu.memory_space<vmem>>, vector<4x4xbf16>
    %cst = arith.constant dense<0.000000e+00> : vector<256x4xf32>
    %3 = tpu.matmul %1, %2, %cst {dimension_numbers = #tpu.dot_dimension_numbers<[1], [0], [0], [1], [0, 0, 1, 1], [], []>} : vector<256x4xbf16>, vector<4x4xbf16>, vector<256x4xf32> -> vector<256x4xf32>
    %c0_4 = arith.constant 0 : index
    %c0_5 = arith.constant 0 : index
    %4 = vector.load %arg4[%c0_4, %c0_5] : memref<1x4xf32, #tpu.memory_space<vmem>>, vector<1x4xf32>
    %5 = vector.broadcast %4 : vector<1x4xf32> to vector<256x4xf32>
    %6 = arith.addf %3, %5 : vector<256x4xf32>
    %cst_6 = arith.constant 0.000000e+00 : f32
    %7 = vector.broadcast %cst_6 : f32 to vector<256x4xf32>
    %8 = arith.maximumf %6, %7 : vector<256x4xf32>
    %cst_7 = arith.constant 0.000000e+00 : f32
    %9 = vector.broadcast %cst_7 : f32 to vector<18x18x4xf32>
    %c0_8 = arith.constant 0 : index
    %c0_9 = arith.constant 0 : index
    %c0_10 = arith.constant 0 : index
    %10 = vector.load %arg12[%c0_8, %c0_9, %c0_10] : memref<18x18x4xf32, #tpu.memory_space<vmem>>, vector<18x18x4xf32>
    tpu.vector_store %arg12[%c0_8, %c0_9, %c0_10], %9 {strides = array<i32>} : memref<18x18x4xf32, #tpu.memory_space<vmem>>, vector<18x18x4xf32>,
    %11 = vector.shape_cast %8 : vector<256x4xf32> to vector<16x16x4xf32>
    %c1 = arith.constant 1 : index
    %c1_11 = arith.constant 1 : index
    %c0_12 = arith.constant 0 : index
    %12 = vector.load %arg12[%c1, %c1_11, %c0_12] : memref<18x18x4xf32, #tpu.memory_space<vmem>>, vector<16x16x4xf32>
    tpu.vector_store %arg12[%c1, %c1_11, %c0_12], %11 {strides = array<i32>} : memref<18x18x4xf32, #tpu.memory_space<vmem>>, vector<16x16x4xf32>,
    %cst_13 = arith.constant 0.000000e+00 : f32
    %13 = vector.broadcast %cst_13 : f32 to vector<256x4xf32>
    %c0_14 = arith.constant 0 : index
    %c0_15 = arith.constant 0 : index
    %c0_16 = arith.constant 0 : index
    %14 = vector.load %arg12[%c0_14, %c0_15, %c0_16] : memref<18x18x4xf32, #tpu.memory_space<vmem>>, vector<16x16x4xf32>
    %15 = vector.shape_cast %14 : vector<16x16x4xf32> to vector<256x4xf32>
    %16 = arith.truncf %15 : vector<256x4xf32> to vector<256x4xbf16>
    %c0_17 = arith.constant 0 : index
    %c0_18 = arith.constant 0 : index
    %c0_19 = arith.constant 0 : index
    %17 = vector.load %arg5[%c0_17, %c0_18, %c0_19] : memref<9x4x4xbf16, #tpu.memory_space<vmem>>, vector<1x4x4xbf16>
    %18 = vector.shape_cast %17 : vector<1x4x4xbf16> to vector<4x4xbf16>
    %cst_20 = arith.constant dense<0.000000e+00> : vector<256x4xf32>
    %19 = tpu.matmul %16, %18, %cst_20 {dimension_numbers = #tpu.dot_dimension_numbers<[1], [0], [0], [1], [0, 0, 1, 1], [], []>} : vector<256x4xbf16>, vector<4x4xbf16>, vector<256x4xf32> -> vector<256x4xf32>
    %20 = arith.addf %13, %19 : vector<256x4xf32>
    %c0_21 = arith.constant 0 : index
    %c1_22 = arith.constant 1 : index
    %c0_23 = arith.constant 0 : index
    %21 = vector.load %arg12[%c0_21, %c1_22, %c0_23] : memref<18x18x4xf32, #tpu.memory_space<vmem>>, vector<16x16x4xf32>
    %22 = vector.shape_cast %21 : vector<16x16x4xf32> to vector<256x4xf32>
    %23 = arith.truncf %22 : vector<256x4xf32> to vector<256x4xbf16>
    %c1_24 = arith.constant 1 : index
    %c0_25 = arith.constant 0 : index
    %c0_26 = arith.constant 0 : index
    %24 = vector.load %arg5[%c1_24, %c0_25, %c0_26] : memref<9x4x4xbf16, #tpu.memory_space<vmem>>, vector<1x4x4xbf16>
    %25 = vector.shape_cast %24 : vector<1x4x4xbf16> to vector<4x4xbf16>
    %cst_27 = arith.constant dense<0.000000e+00> : vector<256x4xf32>
    %26 = tpu.matmul %23, %25, %cst_27 {dimension_numbers = #tpu.dot_dimension_numbers<[1], [0], [0], [1], [0, 0, 1, 1], [], []>} : vector<256x4xbf16>, vector<4x4xbf16>, vector<256x4xf32> -> vector<256x4xf32>
    %27 = arith.addf %20, %26 : vector<256x4xf32>
    %c0_28 = arith.constant 0 : index
    %c2 = arith.constant 2 : index
    %c0_29 = arith.constant 0 : index
    %28 = vector.load %arg12[%c0_28, %c2, %c0_29] : memref<18x18x4xf32, #tpu.memory_space<vmem>>, vector<16x16x4xf32>
    %29 = vector.shape_cast %28 : vector<16x16x4xf32> to vector<256x4xf32>
    %30 = arith.truncf %29 : vector<256x4xf32> to vector<256x4xbf16>
    %c2_30 = arith.constant 2 : index
    %c0_31 = arith.constant 0 : index
    %c0_32 = arith.constant 0 : index
    %31 = vector.load %arg5[%c2_30, %c0_31, %c0_32] : memref<9x4x4xbf16, #tpu.memory_space<vmem>>, vector<1x4x4xbf16>
    %32 = vector.shape_cast %31 : vector<1x4x4xbf16> to vector<4x4xbf16>
    %cst_33 = arith.constant dense<0.000000e+00> : vector<256x4xf32>
    %33 = tpu.matmul %30, %32, %cst_33 {dimension_numbers = #tpu.dot_dimension_numbers<[1], [0], [0], [1], [0, 0, 1, 1], [], []>} : vector<256x4xbf16>, vector<4x4xbf16>, vector<256x4xf32> -> vector<256x4xf32>
    %34 = arith.addf %27, %33 : vector<256x4xf32>
    %c1_34 = arith.constant 1 : index
    %c0_35 = arith.constant 0 : index
    %c0_36 = arith.constant 0 : index
    %35 = vector.load %arg12[%c1_34, %c0_35, %c0_36] : memref<18x18x4xf32, #tpu.memory_space<vmem>>, vector<16x16x4xf32>
    %36 = vector.shape_cast %35 : vector<16x16x4xf32> to vector<256x4xf32>
    %37 = arith.truncf %36 : vector<256x4xf32> to vector<256x4xbf16>
    %c3 = arith.constant 3 : index
    %c0_37 = arith.constant 0 : index
    %c0_38 = arith.constant 0 : index
    %38 = vector.load %arg5[%c3, %c0_37, %c0_38] : memref<9x4x4xbf16, #tpu.memory_space<vmem>>, vector<1x4x4xbf16>
    %39 = vector.shape_cast %38 : vector<1x4x4xbf16> to vector<4x4xbf16>
    %cst_39 = arith.constant dense<0.000000e+00> : vector<256x4xf32>
    %40 = tpu.matmul %37, %39, %cst_39 {dimension_numbers = #tpu.dot_dimension_numbers<[1], [0], [0], [1], [0, 0, 1, 1], [], []>} : vector<256x4xbf16>, vector<4x4xbf16>, vector<256x4xf32> -> vector<256x4xf32>
    %41 = arith.addf %34, %40 : vector<256x4xf32>
    %c1_40 = arith.constant 1 : index
    %c1_41 = arith.constant 1 : index
    %c0_42 = arith.constant 0 : index
    %42 = vector.load %arg12[%c1_40, %c1_41, %c0_42] : memref<18x18x4xf32, #tpu.memory_space<vmem>>, vector<16x16x4xf32>
    %43 = vector.shape_cast %42 : vector<16x16x4xf32> to vector<256x4xf32>
    %44 = arith.truncf %43 : vector<256x4xf32> to vector<256x4xbf16>
    %c4 = arith.constant 4 : index
    %c0_43 = arith.constant 0 : index
    %c0_44 = arith.constant 0 : index
    %45 = vector.load %arg5[%c4, %c0_43, %c0_44] : memref<9x4x4xbf16, #tpu.memory_space<vmem>>, vector<1x4x4xbf16>
    %46 = vector.shape_cast %45 : vector<1x4x4xbf16> to vector<4x4xbf16>
    %cst_45 = arith.constant dense<0.000000e+00> : vector<256x4xf32>
    %47 = tpu.matmul %44, %46, %cst_45 {dimension_numbers = #tpu.dot_dimension_numbers<[1], [0], [0], [1], [0, 0, 1, 1], [], []>} : vector<256x4xbf16>, vector<4x4xbf16>, vector<256x4xf32> -> vector<256x4xf32>
    %48 = arith.addf %41, %47 : vector<256x4xf32>
    %c1_46 = arith.constant 1 : index
    %c2_47 = arith.constant 2 : index
    %c0_48 = arith.constant 0 : index
    %49 = vector.load %arg12[%c1_46, %c2_47, %c0_48] : memref<18x18x4xf32, #tpu.memory_space<vmem>>, vector<16x16x4xf32>
    %50 = vector.shape_cast %49 : vector<16x16x4xf32> to vector<256x4xf32>
    %51 = arith.truncf %50 : vector<256x4xf32> to vector<256x4xbf16>
    %c5 = arith.constant 5 : index
    %c0_49 = arith.constant 0 : index
    %c0_50 = arith.constant 0 : index
    %52 = vector.load %arg5[%c5, %c0_49, %c0_50] : memref<9x4x4xbf16, #tpu.memory_space<vmem>>, vector<1x4x4xbf16>
    %53 = vector.shape_cast %52 : vector<1x4x4xbf16> to vector<4x4xbf16>
    %cst_51 = arith.constant dense<0.000000e+00> : vector<256x4xf32>
    %54 = tpu.matmul %51, %53, %cst_51 {dimension_numbers = #tpu.dot_dimension_numbers<[1], [0], [0], [1], [0, 0, 1, 1], [], []>} : vector<256x4xbf16>, vector<4x4xbf16>, vector<256x4xf32> -> vector<256x4xf32>
    %55 = arith.addf %48, %54 : vector<256x4xf32>
    %c2_52 = arith.constant 2 : index
    %c0_53 = arith.constant 0 : index
    %c0_54 = arith.constant 0 : index
    %56 = vector.load %arg12[%c2_52, %c0_53, %c0_54] : memref<18x18x4xf32, #tpu.memory_space<vmem>>, vector<16x16x4xf32>
    %57 = vector.shape_cast %56 : vector<16x16x4xf32> to vector<256x4xf32>
    %58 = arith.truncf %57 : vector<256x4xf32> to vector<256x4xbf16>
    %c6 = arith.constant 6 : index
    %c0_55 = arith.constant 0 : index
    %c0_56 = arith.constant 0 : index
    %59 = vector.load %arg5[%c6, %c0_55, %c0_56] : memref<9x4x4xbf16, #tpu.memory_space<vmem>>, vector<1x4x4xbf16>
    %60 = vector.shape_cast %59 : vector<1x4x4xbf16> to vector<4x4xbf16>
    %cst_57 = arith.constant dense<0.000000e+00> : vector<256x4xf32>
    %61 = tpu.matmul %58, %60, %cst_57 {dimension_numbers = #tpu.dot_dimension_numbers<[1], [0], [0], [1], [0, 0, 1, 1], [], []>} : vector<256x4xbf16>, vector<4x4xbf16>, vector<256x4xf32> -> vector<256x4xf32>
    %62 = arith.addf %55, %61 : vector<256x4xf32>
    %c2_58 = arith.constant 2 : index
    %c1_59 = arith.constant 1 : index
    %c0_60 = arith.constant 0 : index
    %63 = vector.load %arg12[%c2_58, %c1_59, %c0_60] : memref<18x18x4xf32, #tpu.memory_space<vmem>>, vector<16x16x4xf32>
    %64 = vector.shape_cast %63 : vector<16x16x4xf32> to vector<256x4xf32>
    %65 = arith.truncf %64 : vector<256x4xf32> to vector<256x4xbf16>
    %c7 = arith.constant 7 : index
    %c0_61 = arith.constant 0 : index
    %c0_62 = arith.constant 0 : index
    %66 = vector.load %arg5[%c7, %c0_61, %c0_62] : memref<9x4x4xbf16, #tpu.memory_space<vmem>>, vector<1x4x4xbf16>
    %67 = vector.shape_cast %66 : vector<1x4x4xbf16> to vector<4x4xbf16>
    %cst_63 = arith.constant dense<0.000000e+00> : vector<256x4xf32>
    %68 = tpu.matmul %65, %67, %cst_63 {dimension_numbers = #tpu.dot_dimension_numbers<[1], [0], [0], [1], [0, 0, 1, 1], [], []>} : vector<256x4xbf16>, vector<4x4xbf16>, vector<256x4xf32> -> vector<256x4xf32>
    %69 = arith.addf %62, %68 : vector<256x4xf32>
    %c2_64 = arith.constant 2 : index
    %c2_65 = arith.constant 2 : index
    %c0_66 = arith.constant 0 : index
    %70 = vector.load %arg12[%c2_64, %c2_65, %c0_66] : memref<18x18x4xf32, #tpu.memory_space<vmem>>, vector<16x16x4xf32>
    %71 = vector.shape_cast %70 : vector<16x16x4xf32> to vector<256x4xf32>
    %72 = arith.truncf %71 : vector<256x4xf32> to vector<256x4xbf16>
    %c8 = arith.constant 8 : index
    %c0_67 = arith.constant 0 : index
    %c0_68 = arith.constant 0 : index
    %73 = vector.load %arg5[%c8, %c0_67, %c0_68] : memref<9x4x4xbf16, #tpu.memory_space<vmem>>, vector<1x4x4xbf16>
    %74 = vector.shape_cast %73 : vector<1x4x4xbf16> to vector<4x4xbf16>
    %cst_69 = arith.constant dense<0.000000e+00> : vector<256x4xf32>
    %75 = tpu.matmul %72, %74, %cst_69 {dimension_numbers = #tpu.dot_dimension_numbers<[1], [0], [0], [1], [0, 0, 1, 1], [], []>} : vector<256x4xbf16>, vector<4x4xbf16>, vector<256x4xf32> -> vector<256x4xf32>
    %76 = arith.addf %69, %75 : vector<256x4xf32>
    %c0_70 = arith.constant 0 : index
    %c0_71 = arith.constant 0 : index
    %77 = vector.load %arg6[%c0_70, %c0_71] : memref<1x4xf32, #tpu.memory_space<vmem>>, vector<1x4xf32>
    %78 = vector.broadcast %77 : vector<1x4xf32> to vector<256x4xf32>
    %79 = arith.addf %76, %78 : vector<256x4xf32>
    %cst_72 = arith.constant 0.000000e+00 : f32
    %80 = vector.broadcast %cst_72 : f32 to vector<256x4xf32>
    %81 = arith.maximumf %79, %80 : vector<256x4xf32>
    %82 = arith.truncf %81 : vector<256x4xf32> to vector<256x4xbf16>
    %c0_73 = arith.constant 0 : index
    %c0_74 = arith.constant 0 : index
    %83 = vector.load %arg2[%c0_73, %c0_74] : memref<64x256xbf16, #tpu.memory_space<vmem>>, vector<64x256xbf16>
    %cst_75 = arith.constant dense<0.000000e+00> : vector<64x4xf32>
    %84 = tpu.matmul %83, %82, %cst_75 {dimension_numbers = #tpu.dot_dimension_numbers<[1], [0], [0], [1], [0, 0, 1, 1], [], []>} : vector<64x256xbf16>, vector<256x4xbf16>, vector<64x4xf32> -> vector<64x4xf32>
    %85 = arith.truncf %84 : vector<64x4xf32> to vector<64x4xbf16>
    %cst_76 = arith.constant dense<0.000000e+00> : vector<64x4xf32>
    %86 = tpu.matmul %83, %1, %cst_76 {dimension_numbers = #tpu.dot_dimension_numbers<[1], [0], [0], [1], [0, 0, 1, 1], [], []>} : vector<64x256xbf16>, vector<256x4xbf16>, vector<64x4xf32> -> vector<64x4xf32>
    %87 = arith.truncf %86 : vector<64x4xf32> to vector<64x4xbf16>
    %c0_77 = arith.constant 0 : index
    %c0_78 = arith.constant 0 : index
    %88 = vector.load %arg7[%c0_77, %c0_78] : memref<4x16xbf16, #tpu.memory_space<vmem>>, vector<4x16xbf16>
    %cst_79 = arith.constant dense<0.000000e+00> : vector<64x16xf32>
    %89 = tpu.matmul %85, %88, %cst_79 {dimension_numbers = #tpu.dot_dimension_numbers<[1], [0], [0], [1], [0, 0, 1, 1], [], []>} : vector<64x4xbf16>, vector<4x16xbf16>, vector<64x16xf32> -> vector<64x16xf32>
    %c0_80 = arith.constant 0 : index
    %c0_81 = arith.constant 0 : index
    %90 = vector.load %arg8[%c0_80, %c0_81] : memref<1x16xf32, #tpu.memory_space<vmem>>, vector<1x16xf32>
    %91 = vector.broadcast %90 : vector<1x16xf32> to vector<64x16xf32>
    %92 = arith.addf %89, %91 : vector<64x16xf32>
    %c0_82 = arith.constant 0 : index
    %c0_83 = arith.constant 0 : index
    %93 = vector.load %arg9[%c0_82, %c0_83] : memref<4x16xbf16, #tpu.memory_space<vmem>>, vector<4x16xbf16>
    %cst_84 = arith.constant dense<0.000000e+00> : vector<64x16xf32>
    %94 = tpu.matmul %87, %93, %cst_84 {dimension_numbers = #tpu.dot_dimension_numbers<[1], [0], [0], [1], [0, 0, 1, 1], [], []>} : vector<64x4xbf16>, vector<4x16xbf16>, vector<64x16xf32> -> vector<64x16xf32>
    %c0_85 = arith.constant 0 : index
    %c0_86 = arith.constant 0 : index
    %95 = vector.load %arg10[%c0_85, %c0_86] : memref<1x16xf32, #tpu.memory_space<vmem>>, vector<1x16xf32>
    %96 = vector.broadcast %95 : vector<1x16xf32> to vector<64x16xf32>
    %97 = arith.addf %94, %96 : vector<64x16xf32>
    %98 = arith.addf %92, %97 : vector<64x16xf32>
    %cst_87 = arith.constant 0.000000e+00 : f32
    %99 = vector.broadcast %cst_87 : f32 to vector<64x16xf32>
    %100 = arith.maximumf %98, %99 : vector<64x16xf32>
    %c0_88 = arith.constant 0 : index
    %c0_89 = arith.constant 0 : index
    %c0_90 = arith.constant 0 : index
    %101 = vector.load %arg11[%c0_88, %c0_89, %c0_90] : memref<1x64x16xf32, #tpu.memory_space<vmem>>, vector<1x64x16xf32>
    %102 = vector.shape_cast %101 : vector<1x64x16xf32> to vector<64x16xf32>
    %103 = vector.shape_cast %100 : vector<64x16xf32> to vector<1x64x16xf32>
    tpu.vector_store %arg11[%c0_88, %c0_89, %c0_90], %103 {strides = array<i32>} : memref<1x64x16xf32, #tpu.memory_space<vmem>>, vector<1x64x16xf32>,
    return
  }
  func.func @transform_0(%arg0: i32) -> (i32, i32, i32) {
    %c0_i32 = arith.constant 0 : i32
    %c0_i32_0 = arith.constant 0 : i32
    %c0_i32_1 = arith.constant 0 : i32
    return %arg0, %c0_i32, %c0_i32_0 : i32, i32, i32
  }
  func.func @transform_1(%arg0: i32) -> (i32, i32) {
    %c0_i32 = arith.constant 0 : i32
    %c0_i32_0 = arith.constant 0 : i32
    %c0_i32_1 = arith.constant 0 : i32
    return %c0_i32, %c0_i32_0 : i32, i32
  }
  func.func @transform_2(%arg0: i32) -> (i32, i32) {
    %c0_i32 = arith.constant 0 : i32
    %c0_i32_0 = arith.constant 0 : i32
    %c0_i32_1 = arith.constant 0 : i32
    return %c0_i32, %c0_i32_0 : i32, i32
  }
  func.func @transform_3(%arg0: i32) -> (i32, i32) {
    %c0_i32 = arith.constant 0 : i32
    %c0_i32_0 = arith.constant 0 : i32
    %c0_i32_1 = arith.constant 0 : i32
    return %c0_i32, %c0_i32_0 : i32, i32
  }
  func.func @transform_4(%arg0: i32) -> (i32, i32, i32) {
    %c0_i32 = arith.constant 0 : i32
    %c0_i32_0 = arith.constant 0 : i32
    %c0_i32_1 = arith.constant 0 : i32
    %c0_i32_2 = arith.constant 0 : i32
    return %c0_i32, %c0_i32_0, %c0_i32_1 : i32, i32, i32
  }
  func.func @transform_5(%arg0: i32) -> (i32, i32) {
    %c0_i32 = arith.constant 0 : i32
    %c0_i32_0 = arith.constant 0 : i32
    %c0_i32_1 = arith.constant 0 : i32
    return %c0_i32, %c0_i32_0 : i32, i32
  }
  func.func @transform_6(%arg0: i32) -> (i32, i32) {
    %c0_i32 = arith.constant 0 : i32
    %c0_i32_0 = arith.constant 0 : i32
    %c0_i32_1 = arith.constant 0 : i32
    return %c0_i32, %c0_i32_0 : i32, i32
  }
  func.func @transform_7(%arg0: i32) -> (i32, i32) {
    %c0_i32 = arith.constant 0 : i32
    %c0_i32_0 = arith.constant 0 : i32
    %c0_i32_1 = arith.constant 0 : i32
    return %c0_i32, %c0_i32_0 : i32, i32
  }
  func.func @transform_8(%arg0: i32) -> (i32, i32) {
    %c0_i32 = arith.constant 0 : i32
    %c0_i32_0 = arith.constant 0 : i32
    %c0_i32_1 = arith.constant 0 : i32
    return %c0_i32, %c0_i32_0 : i32, i32
  }
  func.func @transform_9(%arg0: i32) -> (i32, i32) {
    %c0_i32 = arith.constant 0 : i32
    %c0_i32_0 = arith.constant 0 : i32
    %c0_i32_1 = arith.constant 0 : i32
    return %c0_i32, %c0_i32_0 : i32, i32
  }
  func.func @transform_10(%arg0: i32) -> (i32, i32, i32) {
    %c0_i32 = arith.constant 0 : i32
    %c0_i32_0 = arith.constant 0 : i32
    %c0_i32_1 = arith.constant 0 : i32
    return %arg0, %c0_i32, %c0_i32_0 : i32, i32, i32
  }
}

</mosaic_0001>

<llo_original>
// kernel: tpu_custom_call.1
$region0: #{tpu_custom_call.1}
  #allocation0 [shape = 'u32[]', space=smem, size = 0x4, offset = 0x4, fixed_abs, tag = 'smem constant byte address 0x4 - core index']
  #allocation1 [shape = 'u32[72,128]{1,0:T(1,128)}', space=vmem, size = 0x9000, scoped, tag = 'internal scratch']
  #allocation2 [shape = 'f32[18,18,4]{2,1,0:T(8,128)}', space=vmem, size = 0x36000, scoped, tag = 'scratch operand']
  %s0 = inlined_call_operand.vmem [shape: bf16[2,256,4], index: 0, kind: input, shape index: {}]
  %s1 = inlined_call_operand.vmem [shape: bf16[64,256], index: 1, kind: input, shape index: {}]
  %s2 = inlined_call_operand.vmem [shape: bf16[4,4], index: 2, kind: input, shape index: {}]
  %s3 = inlined_call_operand.vmem [shape: f32[1,4], index: 3, kind: input, shape index: {}]
  %s4 = inlined_call_operand.vmem [shape: bf16[9,4,4], index: 4, kind: input, shape index: {}]
  %s5 = inlined_call_operand.vmem [shape: f32[1,4], index: 5, kind: input, shape index: {}]
  %s6 = inlined_call_operand.vmem [shape: bf16[4,16], index: 6, kind: input, shape index: {}]
  %s7 = inlined_call_operand.vmem [shape: f32[1,16], index: 7, kind: input, shape index: {}]
  %s8 = inlined_call_operand.vmem [shape: bf16[4,16], index: 8, kind: input, shape index: {}]
  %s9 = inlined_call_operand.vmem [shape: f32[1,16], index: 9, kind: input, shape index: {}]
  %s10 = inlined_call_operand.vmem [shape: f32[2,64,16], index: 10, kind: output, shape index: {}]
  %s11 = sld [smem:[#allocation0]]
  $region73: #{tpu_custom_call.1} parent=0
    _
  %s13 = ssub.s32 1, %s11
  %s14 = scalar_select 0, %s13, %s11
  loop: start=0, step=1, limit=4
  $region2: #{tpu_custom_call.1} parent=0 // loop_pre_header
    _
  $region3: #{tpu_custom_call.1} parent=0 // loop_header
    %s16 = sphi 0, %s20
    %p17 = scmp.ge.s32.totalorder %s16, 4
    %s26 = sphi 0, %s28
    %s29 = sphi 0, %s26
    %s30 = sphi 0, %s29
    %s46 = sphi 0, %s30
    %s50 = sphi 0, %s50
    %s52 = sphi 0, %s50
    %s53 = sphi 0, %s52
    %s67 = sphi 0, %s53
    %s71 = sphi 0, %s71
    %s73 = sphi 0, %s71
    %s74 = sphi 0, %s73
    %s88 = sphi 0, %s74
    %s92 = sphi 0, %s92
    %s94 = sphi 0, %s92
    %s95 = sphi 0, %s94
    %s109 = sphi 0, %s95
    %s113 = sphi 0, %s113
    %s115 = sphi 0, %s113
    %s116 = sphi 0, %s115
    %s130 = sphi 0, %s116
    %s134 = sphi 0, %s134
    %s136 = sphi 0, %s134
    %s137 = sphi 0, %s136
    %s151 = sphi 0, %s137
    %s155 = sphi 0, %s155
    %s157 = sphi 0, %s155
    %s158 = sphi 0, %s157
    %s172 = sphi 0, %s158
    %s176 = sphi 0, %s176
    %s178 = sphi 0, %s176
    %s179 = sphi 0, %s178
    %s193 = sphi 0, %s179
    %s197 = sphi 0, %s197
    %s199 = sphi 0, %s197
    %s200 = sphi 0, %s199
    %s214 = sphi 0, %s200
    %s218 = sphi 0, %s218
    %s220 = sphi 0, %s218
    %s221 = sphi 0, %s220
    %s235 = sphi 0, %s221
    %s241 = sphi 0, %s243
    %s244 = sphi 0, %s241
    %s245 = sphi 0, %s244
    %s261 = sphi 0, %s245
  $region4: #{tpu_custom_call.1} parent=0 // loop_header_branch
    %19 = sbr.rel (%p17) target = $region8
  $region5: #{tpu_custom_call.1} parent=0 // loop_body
    %s21 = ssub.s32 %s16, 1
    %s22 = ssub.s32 %s16, 2
    %s23 = sadd.s32 %s16, 1
    %s24 = ssub.s32 %s16, %s23
    %p25 = scmp.eq.s32.totalorder %s24, 0
    %s27 = sadd.s32 %s26, 1
    %s28 = scalar_select %p25, %s26, %s27
    %p31 = pneg %p25
    %p32 = scmp.eq.s32.totalorder %s16, 1
    %p33 = por %p31, %p32
    %p34 = scmp.ne.s32.totalorder %s26, %s29
    %p35 = scmp.eq.s32.totalorder %s16, 0
    %p36 = por %p34, %p35
    %p37 = scmp.ne.s32.totalorder %s26, %s29
    %p38 = scmp.eq.s32.totalorder %s21, 1
    %p39 = por %p37, %p38
    %p40 = scmp.ne.s32.totalorder %s29, %s30
    %p41 = scmp.eq.s32.totalorder %s21, 0
    %p42 = por %p40, %p41
    %p43 = scmp.ne.s32.totalorder %s29, %s30
    %p44 = scmp.eq.s32.totalorder %s22, 1
    %p45 = por %p43, %p44
    %p47 = scmp.ne.s32.totalorder %s30, %s46
    %p48 = scmp.eq.s32.totalorder %s22, 0
    %p49 = por %p47, %p48
    %s51 = sadd.s32 %s50, 1
    %p54 = scmp.eq.s32.totalorder %s16, 1
    %p55 = scmp.ne.s32.totalorder %s50, %s52
    %p56 = scmp.eq.s32.totalorder %s16, 0
    %p57 = por %p55, %p56
    %p58 = scmp.ne.s32.totalorder %s50, %s52
    %p59 = scmp.eq.s32.totalorder %s21, 1
    %p60 = por %p58, %p59
    %p61 = scmp.ne.s32.totalorder %s52, %s53
    %p62 = scmp.eq.s32.totalorder %s21, 0
    %p63 = por %p61, %p62
    %p64 = scmp.ne.s32.totalorder %s52, %s53
    %p65 = scmp.eq.s32.totalorder %s22, 1
    %p66 = por %p64, %p65
    %p68 = scmp.ne.s32.totalorder %s53, %s67
    %p69 = scmp.eq.s32.totalorder %s22, 0
    %p70 = por %p68, %p69
    %s72 = sadd.s32 %s71, 1
    %p75 = scmp.eq.s32.totalorder %s16, 1
    %p76 = scmp.ne.s32.totalorder %s71, %s73
    %p77 = scmp.eq.s32.totalorder %s16, 0
    %p78 = por %p76, %p77
    %p79 = scmp.ne.s32.totalorder %s71, %s73
    %p80 = scmp.eq.s32.totalorder %s21, 1
    %p81 = por %p79, %p80
    %p82 = scmp.ne.s32.totalorder %s73, %s74
    %p83 = scmp.eq.s32.totalorder %s21, 0
    %p84 = por %p82, %p83
    %p85 = scmp.ne.s32.totalorder %s73, %s74
    %p86 = scmp.eq.s32.totalorder %s22, 1
    %p87 = por %p85, %p86
    %p89 = scmp.ne.s32.totalorder %s74, %s88
    %p90 = scmp.eq.s32.totalorder %s22, 0
    %p91 = por %p89, %p90
    %s93 = sadd.s32 %s92, 1
    %p96 = scmp.eq.s32.totalorder %s16, 1
    %p97 = scmp.ne.s32.totalorder %s92, %s94
    %p98 = scmp.eq.s32.totalorder %s16, 0
    %p99 = por %p97, %p98
    %p100 = scmp.ne.s32.totalorder %s92, %s94
    %p101 = scmp.eq.s32.totalorder %s21, 1
    %p102 = por %p100, %p101
    %p103 = scmp.ne.s32.totalorder %s94, %s95
    %p104 = scmp.eq.s32.totalorder %s21, 0
    %p105 = por %p103, %p104
    %p106 = scmp.ne.s32.totalorder %s94, %s95
    %p107 = scmp.eq.s32.totalorder %s22, 1
    %p108 = por %p106, %p107
    %p110 = scmp.ne.s32.totalorder %s95, %s109
    %p111 = scmp.eq.s32.totalorder %s22, 0
    %p112 = por %p110, %p111
    %s114 = sadd.s32 %s113, 1
    %p117 = scmp.eq.s32.totalorder %s16, 1
    %p118 = scmp.ne.s32.totalorder %s113, %s115
    %p119 = scmp.eq.s32.totalorder %s16, 0
    %p120 = por %p118, %p119
    %p121 = scmp.ne.s32.totalorder %s113, %s115
    %p122 = scmp.eq.s32.totalorder %s21, 1
    %p123 = por %p121, %p122
    %p124 = scmp.ne.s32.totalorder %s115, %s116
    %p125 = scmp.eq.s32.totalorder %s21, 0
    %p126 = por %p124, %p125
    %p127 = scmp.ne.s32.totalorder %s115, %s116
    %p128 = scmp.eq.s32.totalorder %s22, 1
    %p129 = por %p127, %p128
    %p131 = scmp.ne.s32.totalorder %s116, %s130
    %p132 = scmp.eq.s32.totalorder %s22, 0
    %p133 = por %p131, %p132
    %s135 = sadd.s32 %s134, 1
    %p138 = scmp.eq.s32.totalorder %s16, 1
    %p139 = scmp.ne.s32.totalorder %s134, %s136
    %p140 = scmp.eq.s32.totalorder %s16, 0
    %p141 = por %p139, %p140
    %p142 = scmp.ne.s32.totalorder %s134, %s136
    %p143 = scmp.eq.s32.totalorder %s21, 1
    %p144 = por %p142, %p143
    %p145 = scmp.ne.s32.totalorder %s136, %s137
    %p146 = scmp.eq.s32.totalorder %s21, 0
    %p147 = por %p145, %p146
    %p148 = scmp.ne.s32.totalorder %s136, %s137
    %p149 = scmp.eq.s32.totalorder %s22, 1
    %p150 = por %p148, %p149
    %p152 = scmp.ne.s32.totalorder %s137, %s151
    %p153 = scmp.eq.s32.totalorder %s22, 0
    %p154 = por %p152, %p153
    %s156 = sadd.s32 %s155, 1
    %p159 = scmp.eq.s32.totalorder %s16, 1
    %p160 = scmp.ne.s32.totalorder %s155, %s157
    %p161 = scmp.eq.s32.totalorder %s16, 0
    %p162 = por %p160, %p161
    %p163 = scmp.ne.s32.totalorder %s155, %s157
    %p164 = scmp.eq.s32.totalorder %s21, 1
    %p165 = por %p163, %p164
    %p166 = scmp.ne.s32.totalorder %s157, %s158
    %p167 = scmp.eq.s32.totalorder %s21, 0
    %p168 = por %p166, %p167
    %p169 = scmp.ne.s32.totalorder %s157, %s158
    %p170 = scmp.eq.s32.totalorder %s22, 1
    %p171 = por %p169, %p170
    %p173 = scmp.ne.s32.totalorder %s158, %s172
    %p174 = scmp.eq.s32.totalorder %s22, 0
    %p175 = por %p173, %p174
    %s177 = sadd.s32 %s176, 1
    %p180 = scmp.eq.s32.totalorder %s16, 1
    %p181 = scmp.ne.s32.totalorder %s176, %s178
    %p182 = scmp.eq.s32.totalorder %s16, 0
    %p183 = por %p181, %p182
    %p184 = scmp.ne.s32.totalorder %s176, %s178
    %p185 = scmp.eq.s32.totalorder %s21, 1
    %p186 = por %p184, %p185
    %p187 = scmp.ne.s32.totalorder %s178, %s179
    %p188 = scmp.eq.s32.totalorder %s21, 0
    %p189 = por %p187, %p188
    %p190 = scmp.ne.s32.totalorder %s178, %s179
    %p191 = scmp.eq.s32.totalorder %s22, 1
    %p192 = por %p190, %p191
    %p194 = scmp.ne.s32.totalorder %s179, %s193
    %p195 = scmp.eq.s32.totalorder %s22, 0
    %p196 = por %p194, %p195
    %s198 = sadd.s32 %s197, 1
    %p201 = scmp.eq.s32.totalorder %s16, 1
    %p202 = scmp.ne.s32.totalorder %s197, %s199
    %p203 = scmp.eq.s32.totalorder %s16, 0
    %p204 = por %p202, %p203
    %p205 = scmp.ne.s32.totalorder %s197, %s199
    %p206 = scmp.eq.s32.totalorder %s21, 1
    %p207 = por %p205, %p206
    %p208 = scmp.ne.s32.totalorder %s199, %s200
    %p209 = scmp.eq.s32.totalorder %s21, 0
    %p210 = por %p208, %p209
    %p211 = scmp.ne.s32.totalorder %s199, %s200
    %p212 = scmp.eq.s32.totalorder %s22, 1
    %p213 = por %p211, %p212
    %p215 = scmp.ne.s32.totalorder %s200, %s214
    %p216 = scmp.eq.s32.totalorder %s22, 0
    %p217 = por %p215, %p216
    %s219 = sadd.s32 %s218, 1
    %p222 = scmp.eq.s32.totalorder %s16, 1
    %p223 = scmp.ne.s32.totalorder %s218, %s220
    %p224 = scmp.eq.s32.totalorder %s16, 0
    %p225 = por %p223, %p224
    %p226 = scmp.ne.s32.totalorder %s218, %s220
    %p227 = scmp.eq.s32.totalorder %s21, 1
    %p228 = por %p226, %p227
    %p229 = scmp.ne.s32.totalorder %s220, %s221
    %p230 = scmp.eq.s32.totalorder %s21, 0
    %p231 = por %p229, %p230
    %p232 = scmp.ne.s32.totalorder %s220, %s221
    %p233 = scmp.eq.s32.totalorder %s22, 1
    %p234 = por %p232, %p233
    %p236 = scmp.ne.s32.totalorder %s221, %s235
    %p237 = scmp.eq.s32.totalorder %s22, 0
    %p238 = por %p236, %p237
    %s239 = ssub.s32 %s16, %s23
    %p240 = scmp.eq.s32.totalorder %s239, 0
    %s242 = sadd.s32 %s241, 1
    %s243 = scalar_select %p240, %s241, %s242
    %p246 = pneg %p240
    %p247 = scmp.eq.s32.totalorder %s16, 1
    %p248 = por %p246, %p247
    %p249 = scmp.ne.s32.totalorder %s241, %s244
    %p250 = scmp.eq.s32.totalorder %s16, 0
    %p251 = por %p249, %p250
    %p252 = scmp.ne.s32.totalorder %s241, %s244
    %p253 = scmp.eq.s32.totalorder %s21, 1
    %p254 = por %p252, %p253
    %p255 = scmp.ne.s32.totalorder %s244, %s245
    %p256 = scmp.eq.s32.totalorder %s21, 0
    %p257 = por %p255, %p256
    %p258 = scmp.ne.s32.totalorder %s244, %s245
    %p259 = scmp.eq.s32.totalorder %s22, 1
    %p260 = por %p258, %p259
    %p262 = scmp.ne.s32.totalorder %s245, %s261
    %p263 = scmp.eq.s32.totalorder %s22, 0
    %p264 = por %p262, %p263
    %p265 = scmp.le.s32.totalorder 1, %s16
    %p266 = scmp.lt.s32.totalorder %s16, 3
    %p267 = pnand %p265, %p266
    %p268 = pneg %p267
    // Predicated region
    $region9: #{tpu_custom_call.1} parent=5 // pred_check
      _
    $region10: #{tpu_custom_call.1} parent=5 // pred_check_branch
      %270 = sbr.rel (%p267) target = $region12
    $region11: #{tpu_custom_call.1} parent=5 // pred_region
      %s271 = ssub.s32 %s16, 1
      // Predicated region
      $region13: #{tpu_custom_call.1} parent=11 // pred_check
        %p272 = pneg %p63
      $region14: #{tpu_custom_call.1} parent=11 // pred_check_branch
        %274 = sbr.rel (%p272) target = $region16
      $region15: #{tpu_custom_call.1} parent=11 // pred_region
        _
      $region16: #{tpu_custom_call.1} parent=11 // pred_fallthru
        _
      // Predicated region
      $region17: #{tpu_custom_call.1} parent=11 // pred_check
        %p275 = pneg %p84
      $region18: #{tpu_custom_call.1} parent=11 // pred_check_branch
        %277 = sbr.rel (%p275) target = $region20
      $region19: #{tpu_custom_call.1} parent=11 // pred_region
        _
      $region20: #{tpu_custom_call.1} parent=11 // pred_fallthru
        _
      // Predicated region
      $region21: #{tpu_custom_call.1} parent=11 // pred_check
        %p278 = pneg %p105
      $region22: #{tpu_custom_call.1} parent=11 // pred_check_branch
        %280 = sbr.rel (%p278) target = $region24
      $region23: #{tpu_custom_call.1} parent=11 // pred_region
        _
      $region24: #{tpu_custom_call.1} parent=11 // pred_fallthru
        _
      // Predicated region
      $region25: #{tpu_custom_call.1} parent=11 // pred_check
        %p281 = pneg %p126
      $region26: #{tpu_custom_call.1} parent=11 // pred_check_branch
        %283 = sbr.rel (%p281) target = $region28
      $region27: #{tpu_custom_call.1} parent=11 // pred_region
        _
      $region28: #{tpu_custom_call.1} parent=11 // pred_fallthru
        _
      // Predicated region
      $region29: #{tpu_custom_call.1} parent=11 // pred_check
        %p284 = pneg %p147
      $region30: #{tpu_custom_call.1} parent=11 // pred_check_branch
        %286 = sbr.rel (%p284) target = $region32
      $region31: #{tpu_custom_call.1} parent=11 // pred_region
        _
      $region32: #{tpu_custom_call.1} parent=11 // pred_fallthru
        _
      // Predicated region
      $region33: #{tpu_custom_call.1} parent=11 // pred_check
        %p287 = pneg %p168
      $region34: #{tpu_custom_call.1} parent=11 // pred_check_branch
        %289 = sbr.rel (%p287) target = $region36
      $region35: #{tpu_custom_call.1} parent=11 // pred_region
        _
      $region36: #{tpu_custom_call.1} parent=11 // pred_fallthru
        _
      // Predicated region
      $region37: #{tpu_custom_call.1} parent=11 // pred_check
        %p290 = pneg %p189
      $region38: #{tpu_custom_call.1} parent=11 // pred_check_branch
        %292 = sbr.rel (%p290) target = $region40
      $region39: #{tpu_custom_call.1} parent=11 // pred_region
        _
      $region40: #{tpu_custom_call.1} parent=11 // pred_fallthru
        _
      // Predicated region
      $region41: #{tpu_custom_call.1} parent=11 // pred_check
        %p293 = pneg %p210
      $region42: #{tpu_custom_call.1} parent=11 // pred_check_branch
        %295 = sbr.rel (%p293) target = $region44
      $region43: #{tpu_custom_call.1} parent=11 // pred_region
        _
      $region44: #{tpu_custom_call.1} parent=11 // pred_fallthru
        _
      // Predicated region
      $region45: #{tpu_custom_call.1} parent=11 // pred_check
        %p296 = pneg %p231
      $region46: #{tpu_custom_call.1} parent=11 // pred_check_branch
        %298 = sbr.rel (%p296) target = $region48
      $region47: #{tpu_custom_call.1} parent=11 // pred_region
        _
      $region48: #{tpu_custom_call.1} parent=11 // pred_fallthru
        _
    $region12: #{tpu_custom_call.1} parent=5 // pred_fallthru
      _
    %p299 = scmp.lt.s32.totalorder %s16, 2
    // Predicated region
    $region49: #{tpu_custom_call.1} parent=5 // pred_check
      %p300 = pneg %p299
    $region50: #{tpu_custom_call.1} parent=5 // pred_check_branch
      %302 = sbr.rel (%p300) target = $region52
    $region51: #{tpu_custom_call.1} parent=5 // pred_region
      // Predicated region
      $region53: #{tpu_custom_call.1} parent=51 // pred_check
        %p303 = pneg %p36
      $region54: #{tpu_custom_call.1} parent=51 // pred_check_branch
        %305 = sbr.rel (%p303) target = $region56
      $region55: #{tpu_custom_call.1} parent=51 // pred_region
        %p306 = scmp.lt.s32.totalorder %s16, 1
        %s307 = scalar_select %p306, %s16, 1
        %s308 = smul.addr %s307, 32
        %s309 = smul.addr %s308, 4
        %s310 = scalar_lea.vmem %s0, %s309
      $region56: #{tpu_custom_call.1} parent=51 // pred_fallthru
        _
    $region52: #{tpu_custom_call.1} parent=5 // pred_fallthru
      _
    %p311 = scmp.le.s32.totalorder 1, %s16
    %p312 = scmp.lt.s32.totalorder %s16, 3
    %p313 = pnand %p311, %p312
    %p314 = pneg %p313
    // Predicated region
    $region57: #{tpu_custom_call.1} parent=5 // pred_check
      _
    $region58: #{tpu_custom_call.1} parent=5 // pred_check_branch
      %316 = sbr.rel (%p313) target = $region60
    $region59: #{tpu_custom_call.1} parent=5 // pred_region
      %s317 = ssub.s32 %s16, 1
      %p318 = scmp.lt.s32.totalorder %s21, 1
      %s319 = scalar_select %p318, %s21, 1
      %s320 = smul.addr %s319, 32
      %s321 = smul.addr %s320, 4
      %s322 = scalar_lea.vmem %s0, %s321
      %p323 = pneg %p42
      %p324 = pneg %p39
      %p325 = pneg %p63
      %p326 = pneg %p60
      %p327 = pneg %p84
      %p328 = pneg %p81
      %p329 = pneg %p105
      %p330 = pneg %p102
      %p331 = pneg %p126
      %p332 = pneg %p123
      %p333 = pneg %p147
      %p334 = pneg %p144
      %p335 = pneg %p168
      %p336 = pneg %p165
      %p337 = pneg %p189
      %p338 = pneg %p186
      %p339 = pneg %p210
      %p340 = pneg %p207
      %p341 = pneg %p231
      %p342 = pneg %p228
      %p343 = pneg %p257
      %p344 = pneg %p254
      %p345 = scmp.lt.s32.totalorder %s21, 1
      %s346 = scalar_select %p345, %s21, 1
      %s347 = smul.addr %s346, 8
      %s348 = smul.addr %s347, 8
      %s349 = scalar_lea.vmem %s10, %s348
      %p350 = scmp.lt.s32.totalorder %s21, 1
      %s351 = scalar_select %p350, %s21, 1
      %s352 = smul.addr %s351, 32
      %s353 = smul.addr %s352, 4
      %s354 = scalar_lea.vmem %s0, %s353
      %p355 = scmp.lt.s32.totalorder %s21, 1
      %s356 = scalar_select %p355, %s21, 1
      %s357 = smul.addr %s356, 8
      %s358 = smul.addr %s357, 8
      %s359 = scalar_lea.vmem %s10, %s358
      %v361 = vld [vmem:[%s354] sm:$0xf]
      %v362 = vld [vmem:[%s354 + $0x4] sm:$0xf]
      %v363 = vld [vmem:[%s354 + $0x8] sm:$0xf]
      %v364 = vld [vmem:[%s354 + $0xc] sm:$0xf]
      %v365 = vld [vmem:[%s354 + $0x10] sm:$0xf]
      %v366 = vld [vmem:[%s354 + $0x14] sm:$0xf]
      %v367 = vld [vmem:[%s354 + $0x18] sm:$0xf]
      %v368 = vld [vmem:[%s354 + $0x1c] sm:$0xf]
      %v369 = vld [vmem:[%s354 + $0x20] sm:$0xf]
      %v370 = vld [vmem:[%s354 + $0x24] sm:$0xf]
      %v371 = vld [vmem:[%s354 + $0x28] sm:$0xf]
      %v372 = vld [vmem:[%s354 + $0x2c] sm:$0xf]
      %v373 = vld [vmem:[%s354 + $0x30] sm:$0xf]
      %v374 = vld [vmem:[%s354 + $0x34] sm:$0xf]
      %v375 = vld [vmem:[%s354 + $0x38] sm:$0xf]
      %v376 = vld [vmem:[%s354 + $0x3c] sm:$0xf]
      %v377 = vld [vmem:[%s354 + $0x40] sm:$0xf]
      %v378 = vld [vmem:[%s354 + $0x44] sm:$0xf]
      %v379 = vld [vmem:[%s354 + $0x48] sm:$0xf]
      %v380 = vld [vmem:[%s354 + $0x4c] sm:$0xf]
      %v381 = vld [vmem:[%s354 + $0x50] sm:$0xf]
      %v382 = vld [vmem:[%s354 + $0x54] sm:$0xf]
      %v383 = vld [vmem:[%s354 + $0x58] sm:$0xf]
      %v384 = vld [vmem:[%s354 + $0x5c] sm:$0xf]
      %v385 = vld [vmem:[%s354 + $0x60] sm:$0xf]
      %v386 = vld [vmem:[%s354 + $0x64] sm:$0xf]
      %v387 = vld [vmem:[%s354 + $0x68] sm:$0xf]
      %v388 = vld [vmem:[%s354 + $0x6c] sm:$0xf]
      %v389 = vld [vmem:[%s354 + $0x70] sm:$0xf]
      %v390 = vld [vmem:[%s354 + $0x74] sm:$0xf]
      %v391 = vld [vmem:[%s354 + $0x78] sm:$0xf]
      %v392 = vld [vmem:[%s354 + $0x7c] sm:$0xf]
      %v393 = vld [vmem:[%s2] sm:$0x3]
      %v394 = vld [vmem:[%s3] sm:$0x1]
      %v396 = vperm.slane %v394, 0
      %v430 = vunpack.c.l.b16 %v361
      %v431 = vunpack.c.l.b16 %v362
      %v432 = vunpack.c.l.b16 %v363
      %v433 = vunpack.c.l.b16 %v364
      %v434 = vunpack.c.l.b16 %v365
      %v435 = vunpack.c.l.b16 %v366
      %v436 = vunpack.c.l.b16 %v367
      %v437 = vunpack.c.l.b16 %v368
      %v438 = vunpack.c.l.b16 %v369
      %v439 = vunpack.c.l.b16 %v370
      %v440 = vunpack.c.l.b16 %v371
      %v441 = vunpack.c.l.b16 %v372
      %v442 = vunpack.c.l.b16 %v373
      %v443 = vunpack.c.l.b16 %v374
      %v444 = vunpack.c.l.b16 %v375
      %v445 = vunpack.c.l.b16 %v376
      %v446 = vunpack.c.l.b16 %v377
      %v447 = vunpack.c.l.b16 %v378
      %v448 = vunpack.c.l.b16 %v379
      %v449 = vunpack.c.l.b16 %v380
      %v450 = vunpack.c.l.b16 %v381
      %v451 = vunpack.c.l.b16 %v382
      %v452 = vunpack.c.l.b16 %v383
      %v453 = vunpack.c.l.b16 %v384
      %v454 = vunpack.c.l.b16 %v385
      %v455 = vunpack.c.l.b16 %v386
      %v456 = vunpack.c.l.b16 %v387
      %v457 = vunpack.c.l.b16 %v388
      %v458 = vunpack.c.l.b16 %v389
      %v459 = vunpack.c.l.b16 %v390
      %v460 = vunpack.c.l.b16 %v391
      %v461 = vunpack.c.l.b16 %v392
      %v462 = vpack.c.b16 %v431, %v430
      %v463 = vpack.c.b16 %v433, %v432
      %v464 = vpack.c.b16 %v435, %v434
      %v465 = vpack.c.b16 %v437, %v436
      %v466 = vpack.c.b16 %v439, %v438
      %v467 = vpack.c.b16 %v441, %v440
      %v468 = vpack.c.b16 %v443, %v442
      %v469 = vpack.c.b16 %v445, %v444
      %v470 = vpack.c.b16 %v447, %v446
      %v471 = vpack.c.b16 %v449, %v448
      %v472 = vpack.c.b16 %v451, %v450
      %v473 = vpack.c.b16 %v453, %v452
      %v474 = vpack.c.b16 %v455, %v454
      %v475 = vpack.c.b16 %v457, %v456
      %v476 = vpack.c.b16 %v459, %v458
      %v477 = vpack.c.b16 %v461, %v460
      %vm478 = vcmask 31744
      %v480 = vsel %vm478, %v462, 0
      %v483 = vsel %vm478, %v463, 0
      %v486 = vsel %vm478, %v464, 0
      %v489 = vsel %vm478, %v465, 0
      %v492 = vsel %vm478, %v466, 0
      %v495 = vsel %vm478, %v467, 0
      %v498 = vsel %vm478, %v468, 0
      %v501 = vsel %vm478, %v469, 0
      %v504 = vsel %vm478, %v470, 0
      %v507 = vsel %vm478, %v471, 0
      %v510 = vsel %vm478, %v472, 0
      %v513 = vsel %vm478, %v473, 0
      %v516 = vsel %vm478, %v474, 0
      %v519 = vsel %vm478, %v475, 0
      %v522 = vsel %vm478, %v476, 0
      %v525 = vsel %vm478, %v477, 0
      %vm527 = vcmask 1041408
      %v529 = vsel %vm527, %v393, 0
      %531 = vmatpush.bf16.msra.mxu0 0
      %532 = vmatpush.bf16.msra.mxu0 0
      %533 = vmatpush.bf16.msra.mxu0 0
      %534 = vmatpush.bf16.msra.mxu0 0
      %535 = vmatpush.bf16.msra.mxu0 0
      %536 = vmatpush.bf16.msra.mxu0 0
      %537 = vmatpush.bf16.msra.mxu0 0
      %538 = vmatpush.bf16.msra.mxu0 %v529
      %539 = vmatmul.bf16.gmra.mxu0 %v480
      %v540 = vpop.f32.mrf.mxu0
      %v541 = vadd.f32 %v396, %v540
      %v542 = vpop.f32.mrf.mxu0
      %v543 = vadd.f32 %v396, %v542
      %544 = vmatmul.bf16.gmra.mxu0 %v483
      %v545 = vpop.f32.mrf.mxu0
      %v546 = vadd.f32 %v396, %v545
      %v547 = vpop.f32.mrf.mxu0
      %v548 = vadd.f32 %v396, %v547
      %549 = vmatmul.bf16.gmra.mxu0 %v486
      %v550 = vpop.f32.mrf.mxu0
      %v551 = vadd.f32 %v396, %v550
      %v552 = vpop.f32.mrf.mxu0
      %v553 = vadd.f32 %v396, %v552
      %554 = vmatmul.bf16.gmra.mxu0 %v489
      %v555 = vpop.f32.mrf.mxu0
      %v556 = vadd.f32 %v396, %v555
      %v557 = vpop.f32.mrf.mxu0
      %v558 = vadd.f32 %v396, %v557
      %559 = vmatmul.bf16.gmra.mxu0 %v492
      %v560 = vpop.f32.mrf.mxu0
      %v561 = vadd.f32 %v396, %v560
      %v562 = vpop.f32.mrf.mxu0
      %v563 = vadd.f32 %v396, %v562
      %564 = vmatmul.bf16.gmra.mxu0 %v495
      %v565 = vpop.f32.mrf.mxu0
      %v566 = vadd.f32 %v396, %v565
      %v567 = vpop.f32.mrf.mxu0
      %v568 = vadd.f32 %v396, %v567
      %569 = vmatmul.bf16.gmra.mxu0 %v498
      %v570 = vpop.f32.mrf.mxu0
      %v571 = vadd.f32 %v396, %v570
      %v572 = vpop.f32.mrf.mxu0
      %v573 = vadd.f32 %v396, %v572
      %574 = vmatmul.bf16.gmra.mxu0 %v501
      %v575 = vpop.f32.mrf.mxu0
      %v576 = vadd.f32 %v396, %v575
      %v577 = vpop.f32.mrf.mxu0
      %v578 = vadd.f32 %v396, %v577
      %579 = vmatmul.bf16.gmra.mxu0 %v504
      %v580 = vpop.f32.mrf.mxu0
      %v581 = vadd.f32 %v396, %v580
      %v582 = vpop.f32.mrf.mxu0
      %v583 = vadd.f32 %v396, %v582
      %584 = vmatmul.bf16.gmra.mxu0 %v507
      %v585 = vpop.f32.mrf.mxu0
      %v586 = vadd.f32 %v396, %v585
      %v587 = vpop.f32.mrf.mxu0
      %v588 = vadd.f32 %v396, %v587
      %589 = vmatmul.bf16.gmra.mxu0 %v510
      %v590 = vpop.f32.mrf.mxu0
      %v591 = vadd.f32 %v396, %v590
      %v592 = vpop.f32.mrf.mxu0
      %v593 = vadd.f32 %v396, %v592
      %594 = vmatmul.bf16.gmra.mxu0 %v513
      %v595 = vpop.f32.mrf.mxu0
      %v596 = vadd.f32 %v396, %v595
      %v597 = vpop.f32.mrf.mxu0
      %v598 = vadd.f32 %v396, %v597
      %599 = vmatmul.bf16.gmra.mxu0 %v516
      %v600 = vpop.f32.mrf.mxu0
      %v601 = vadd.f32 %v396, %v600
      %v602 = vpop.f32.mrf.mxu0
      %v603 = vadd.f32 %v396, %v602
      %604 = vmatmul.bf16.gmra.mxu0 %v519
      %v605 = vpop.f32.mrf.mxu0
      %v606 = vadd.f32 %v396, %v605
      %v607 = vpop.f32.mrf.mxu0
      %v608 = vadd.f32 %v396, %v607
      %609 = vmatmul.bf16.gmra.mxu0 %v522
      %v610 = vpop.f32.mrf.mxu0
      %v611 = vadd.f32 %v396, %v610
      %v612 = vpop.f32.mrf.mxu0
      %v613 = vadd.f32 %v396, %v612
      %614 = vmatmul.bf16.gmra.mxu0 %v525
      %v615 = vpop.f32.mrf.mxu0
      %v616 = vadd.f32 %v396, %v615
      %v617 = vpop.f32.mrf.mxu0
      %v618 = vadd.f32 %v396, %v617
      %619 = vdwg.mxu0
      %v620 = vmax.f32 %v541, 0.0
      %v621 = vmax.f32 %v543, 0.0
      %v622 = vmax.f32 %v546, 0.0
      %v623 = vmax.f32 %v548, 0.0
      %v624 = vmax.f32 %v551, 0.0
      %v625 = vmax.f32 %v553, 0.0
      %v626 = vmax.f32 %v556, 0.0
      %v627 = vmax.f32 %v558, 0.0
      %v628 = vmax.f32 %v561, 0.0
      %v629 = vmax.f32 %v563, 0.0
      %v630 = vmax.f32 %v566, 0.0
      %v631 = vmax.f32 %v568, 0.0
      %v632 = vmax.f32 %v571, 0.0
      %v633 = vmax.f32 %v573, 0.0
      %v634 = vmax.f32 %v576, 0.0
      %v635 = vmax.f32 %v578, 0.0
      %v636 = vmax.f32 %v581, 0.0
      %v637 = vmax.f32 %v583, 0.0
      %v638 = vmax.f32 %v586, 0.0
      %v639 = vmax.f32 %v588, 0.0
      %v640 = vmax.f32 %v591, 0.0
      %v641 = vmax.f32 %v593, 0.0
      %v642 = vmax.f32 %v596, 0.0
      %v643 = vmax.f32 %v598, 0.0
      %v644 = vmax.f32 %v601, 0.0
      %v645 = vmax.f32 %v603, 0.0
      %v646 = vmax.f32 %v606, 0.0
      %v647 = vmax.f32 %v608, 0.0
      %v648 = vmax.f32 %v611, 0.0
      %v649 = vmax.f32 %v613, 0.0
      %v650 = vmax.f32 %v616, 0.0
      %v651 = vmax.f32 %v618, 0.0
      %652 = vst.msk [vmem:[#allocation2] sm:$0xff] %vm478, 0.0
      %653 = vst.msk [vmem:[#allocation2 + $0x8] sm:$0xff] %vm478, 0.0
      %vm654 = vcmask 25600
      %655 = vst.msk [vmem:[#allocation2 + $0x10] sm:$0x3] %vm654, 0.0
      %656 = vst.msk [vmem:[#allocation2 + $0x18] sm:$0xff] %vm478, 0.0
      %657 = vst.msk [vmem:[#allocation2 + $0x20] sm:$0xff] %vm478, 0.0
      %658 = vst.msk [vmem:[#allocation2 + $0x28] sm:$0x3] %vm654, 0.0
      %659 = vst.msk [vmem:[#allocation2 + $0x30] sm:$0xff] %vm478, 0.0
      %660 = vst.msk [vmem:[#allocation2 + $0x38] sm:$0xff] %vm478, 0.0
      %661 = vst.msk [vmem:[#allocation2 + $0x40] sm:$0x3] %vm654, 0.0
      %662 = vst.msk [vmem:[#allocation2 + $0x48] sm:$0xff] %vm478, 0.0
      %663 = vst.msk [vmem:[#allocation2 + $0x50] sm:$0xff] %vm478, 0.0
      %664 = vst.msk [vmem:[#allocation2 + $0x58] sm:$0x3] %vm654, 0.0
      %665 = vst.msk [vmem:[#allocation2 + $0x60] sm:$0xff] %vm478, 0.0
      %666 = vst.msk [vmem:[#allocation2 + $0x68] sm:$0xff] %vm478, 0.0
      %667 = vst.msk [vmem:[#allocation2 + $0x70] sm:$0x3] %vm654, 0.0
      %668 = vst.msk [vmem:[#allocation2 + $0x78] sm:$0xff] %vm478, 0.0
      %669 = vst.msk [vmem:[#allocation2 + $0x80] sm:$0xff] %vm478, 0.0
      %670 = vst.msk [vmem:[#allocation2 + $0x88] sm:$0x3] %vm654, 0.0
      %671 = vst.msk [vmem:[#allocation2 + $0x90] sm:$0xff] %vm478, 0.0
      %672 = vst.msk [vmem:[#allocation2 + $0x98] sm:$0xff] %vm478, 0.0
      %673 = vst.msk [vmem:[#allocation2 + $0xa0] sm:$0x3] %vm654, 0.0
      %674 = vst.msk [vmem:[#allocation2 + $0xa8] sm:$0xff] %vm478, 0.0
      %675 = vst.msk [vmem:[#allocation2 + $0xb0] sm:$0xff] %vm478, 0.0
      %676 = vst.msk [vmem:[#allocation2 + $0xb8] sm:$0x3] %vm654, 0.0
      %677 = vst.msk [vmem:[#allocation2 + $0xc0] sm:$0xff] %vm478, 0.0
      %678 = vst.msk [vmem:[#allocation2 + $0xc8] sm:$0xff] %vm478, 0.0
      %679 = vst.msk [vmem:[#allocation2 + $0xd0] sm:$0x3] %vm654, 0.0
      %680 = vst.msk [vmem:[#allocation2 + $0xd8] sm:$0xff] %vm478, 0.0
      %681 = vst.msk [vmem:[#allocation2 + $0xe0] sm:$0xff] %vm478, 0.0
      %682 = vst.msk [vmem:[#allocation2 + $0xe8] sm:$0x3] %vm654, 0.0
      %683 = vst.msk [vmem:[#allocation2 + $0xf0] sm:$0xff] %vm478, 0.0
      %684 = vst.msk [vmem:[#allocation2 + $0xf8] sm:$0xff] %vm478, 0.0
      %685 = vst.msk [vmem:[#allocation2 + $0x100] sm:$0x3] %vm654, 0.0
      %686 = vst.msk [vmem:[#allocation2 + $0x108] sm:$0xff] %vm478, 0.0
      %687 = vst.msk [vmem:[#allocation2 + $0x110] sm:$0xff] %vm478, 0.0
      %688 = vst.msk [vmem:[#allocation2 + $0x118] sm:$0x3] %vm654, 0.0
      %689 = vst.msk [vmem:[#allocation2 + $0x120] sm:$0xff] %vm478, 0.0
      %690 = vst.msk [vmem:[#allocation2 + $0x128] sm:$0xff] %vm478, 0.0
      %691 = vst.msk [vmem:[#allocation2 + $0x130] sm:$0x3] %vm654, 0.0
      %692 = vst.msk [vmem:[#allocation2 + $0x138] sm:$0xff] %vm478, 0.0
      %693 = vst.msk [vmem:[#allocation2 + $0x140] sm:$0xff] %vm478, 0.0
      %694 = vst.msk [vmem:[#allocation2 + $0x148] sm:$0x3] %vm654, 0.0
      %695 = vst.msk [vmem:[#allocation2 + $0x150] sm:$0xff] %vm478, 0.0
      %696 = vst.msk [vmem:[#allocation2 + $0x158] sm:$0xff] %vm478, 0.0
      %697 = vst.msk [vmem:[#allocation2 + $0x160] sm:$0x3] %vm654, 0.0
      %698 = vst.msk [vmem:[#allocation2 + $0x168] sm:$0xff] %vm478, 0.0
      %699 = vst.msk [vmem:[#allocation2 + $0x170] sm:$0xff] %vm478, 0.0
      %700 = vst.msk [vmem:[#allocation2 + $0x178] sm:$0x3] %vm654, 0.0
      %701 = vst.msk [vmem:[#allocation2 + $0x180] sm:$0xff] %vm478, 0.0
      %702 = vst.msk [vmem:[#allocation2 + $0x188] sm:$0xff] %vm478, 0.0
      %703 = vst.msk [vmem:[#allocation2 + $0x190] sm:$0x3] %vm654, 0.0
      %704 = vst.msk [vmem:[#allocation2 + $0x198] sm:$0xff] %vm478, 0.0
      %705 = vst.msk [vmem:[#allocation2 + $0x1a0] sm:$0xff] %vm478, 0.0
      %706 = vst.msk [vmem:[#allocation2 + $0x1a8] sm:$0x3] %vm654, 0.0
      %s707 = scalar_lea.vmem [#allocation2], 24
      %708 = vst.msk [vmem:[%s707 + $0x1] sm:$0xff] %vm478, %v620
      %709 = vst.msk [vmem:[%s707 + $0x9] sm:$0xff] %vm478, %v621
      %710 = vst.msk [vmem:[%s707 + $0x19] sm:$0xff] %vm478, %v622
      %711 = vst.msk [vmem:[%s707 + $0x21] sm:$0xff] %vm478, %v623
      %712 = vst.msk [vmem:[%s707 + $0x31] sm:$0xff] %vm478, %v624
      %713 = vst.msk [vmem:[%s707 + $0x39] sm:$0xff] %vm478, %v625
      %714 = vst.msk [vmem:[%s707 + $0x49] sm:$0xff] %vm478, %v626
      %715 = vst.msk [vmem:[%s707 + $0x51] sm:$0xff] %vm478, %v627
      %716 = vst.msk [vmem:[%s707 + $0x61] sm:$0xff] %vm478, %v628
      %717 = vst.msk [vmem:[%s707 + $0x69] sm:$0xff] %vm478, %v629
      %718 = vst.msk [vmem:[%s707 + $0x79] sm:$0xff] %vm478, %v630
      %719 = vst.msk [vmem:[%s707 + $0x81] sm:$0xff] %vm478, %v631
      %720 = vst.msk [vmem:[%s707 + $0x91] sm:$0xff] %vm478, %v632
      %721 = vst.msk [vmem:[%s707 + $0x99] sm:$0xff] %vm478, %v633
      %722 = vst.msk [vmem:[%s707 + $0xa9] sm:$0xff] %vm478, %v634
      %723 = vst.msk [vmem:[%s707 + $0xb1] sm:$0xff] %vm478, %v635
      %724 = vst.msk [vmem:[%s707 + $0xc1] sm:$0xff] %vm478, %v636
      %725 = vst.msk [vmem:[%s707 + $0xc9] sm:$0xff] %vm478, %v637
      %726 = vst.msk [vmem:[%s707 + $0xd9] sm:$0xff] %vm478, %v638
      %727 = vst.msk [vmem:[%s707 + $0xe1] sm:$0xff] %vm478, %v639
      %728 = vst.msk [vmem:[%s707 + $0xf1] sm:$0xff] %vm478, %v640
      %729 = vst.msk [vmem:[%s707 + $0xf9] sm:$0xff] %vm478, %v641
      %730 = vst.msk [vmem:[%s707 + $0x109] sm:$0xff] %vm478, %v642
      %731 = vst.msk [vmem:[%s707 + $0x111] sm:$0xff] %vm478, %v643
      %732 = vst.msk [vmem:[%s707 + $0x121] sm:$0xff] %vm478, %v644
      %733 = vst.msk [vmem:[%s707 + $0x129] sm:$0xff] %vm478, %v645
      %734 = vst.msk [vmem:[%s707 + $0x139] sm:$0xff] %vm478, %v646
      %735 = vst.msk [vmem:[%s707 + $0x141] sm:$0xff] %vm478, %v647
      %736 = vst.msk [vmem:[%s707 + $0x151] sm:$0xff] %vm478, %v648
      %737 = vst.msk [vmem:[%s707 + $0x159] sm:$0xff] %vm478, %v649
      %738 = vst.msk [vmem:[%s707 + $0x169] sm:$0xff] %vm478, %v650
      %739 = vst.msk [vmem:[%s707 + $0x171] sm:$0xff] %vm478, %v651
      %v740 = vld [vmem:[#allocation2] sm:$0xff]
      %v741 = vld [vmem:[#allocation2 + $0x8] sm:$0xff]
      %v742 = vld [vmem:[#allocation2 + $0x18] sm:$0xff]
      %v743 = vld [vmem:[#allocation2 + $0x20] sm:$0xff]
      %v744 = vld [vmem:[#allocation2 + $0x30] sm:$0xff]
      %v745 = vld [vmem:[#allocation2 + $0x38] sm:$0xff]
      %v746 = vld [vmem:[#allocation2 + $0x48] sm:$0xff]
      %v747 = vld [vmem:[#allocation2 + $0x50] sm:$0xff]
      %v748 = vld [vmem:[#allocation2 + $0x60] sm:$0xff]
      %v749 = vld [vmem:[#allocation2 + $0x68] sm:$0xff]
      %v750 = vld [vmem:[#allocation2 + $0x78] sm:$0xff]
      %v751 = vld [vmem:[#allocation2 + $0x80] sm:$0xff]
      %v752 = vld [vmem:[#allocation2 + $0x90] sm:$0xff]
      %v753 = vld [vmem:[#allocation2 + $0x98] sm:$0xff]
      %v754 = vld [vmem:[#allocation2 + $0xa8] sm:$0xff]
      %v755 = vld [vmem:[#allocation2 + $0xb0] sm:$0xff]
      %v756 = vld [vmem:[#allocation2 + $0xc0] sm:$0xff]
      %v757 = vld [vmem:[#allocation2 + $0xc8] sm:$0xff]
      %v758 = vld [vmem:[#allocation2 + $0xd8] sm:$0xff]
      %v759 = vld [vmem:[#allocation2 + $0xe0] sm:$0xff]
      %v760 = vld [vmem:[#allocation2 + $0xf0] sm:$0xff]
      %v761 = vld [vmem:[#allocation2 + $0xf8] sm:$0xff]
      %v762 = vld [vmem:[#allocation2 + $0x108] sm:$0xff]
      %v763 = vld [vmem:[#allocation2 + $0x110] sm:$0xff]
      %v764 = vld [vmem:[#allocation2 + $0x120] sm:$0xff]
      %v765 = vld [vmem:[#allocation2 + $0x128] sm:$0xff]
      %v766 = vld [vmem:[#allocation2 + $0x138] sm:$0xff]
      %v767 = vld [vmem:[#allocation2 + $0x140] sm:$0xff]
      %v768 = vld [vmem:[#allocation2 + $0x150] sm:$0xff]
      %v769 = vld [vmem:[#allocation2 + $0x158] sm:$0xff]
      %v770 = vld [vmem:[#allocation2 + $0x168] sm:$0xff]
      %v771 = vld [vmem:[#allocation2 + $0x170] sm:$0xff]
      %v772 = vpack.c.bf16 %v741, %v740
      %v773 = vpack.c.bf16 %v743, %v742
      %v774 = vpack.c.bf16 %v745, %v744
      %v775 = vpack.c.bf16 %v747, %v746
      %v776 = vpack.c.bf16 %v749, %v748
      %v777 = vpack.c.bf16 %v751, %v750
      %v778 = vpack.c.bf16 %v753, %v752
      %v779 = vpack.c.bf16 %v755, %v754
      %v780 = vpack.c.bf16 %v757, %v756
      %v781 = vpack.c.bf16 %v759, %v758
      %v782 = vpack.c.bf16 %v761, %v760
      %v783 = vpack.c.bf16 %v763, %v762
      %v784 = vpack.c.bf16 %v765, %v764
      %v785 = vpack.c.bf16 %v767, %v766
      %v786 = vpack.c.bf16 %v769, %v768
      %v787 = vpack.c.bf16 %v771, %v770
      %v788 = vld [vmem:[%s4] sm:$0x3]
      %v789 = vld [vmem:[#allocation2 + $0x1] sm:$0xff]
      %v790 = vld [vmem:[#allocation2 + $0x9] sm:$0xff]
      %v791 = vld [vmem:[#allocation2 + $0x19] sm:$0xff]
      %v792 = vld [vmem:[#allocation2 + $0x21] sm:$0xff]
      %v793 = vld [vmem:[#allocation2 + $0x31] sm:$0xff]
      %v794 = vld [vmem:[#allocation2 + $0x39] sm:$0xff]
      %v795 = vld [vmem:[#allocation2 + $0x49] sm:$0xff]
      %v796 = vld [vmem:[#allocation2 + $0x51] sm:$0xff]
      %v797 = vld [vmem:[#allocation2 + $0x61] sm:$0xff]
      %v798 = vld [vmem:[#allocation2 + $0x69] sm:$0xff]
      %v799 = vld [vmem:[#allocation2 + $0x79] sm:$0xff]
      %v800 = vld [vmem:[#allocation2 + $0x81] sm:$0xff]
      %v801 = vld [vmem:[#allocation2 + $0x91] sm:$0xff]
      %v802 = vld [vmem:[#allocation2 + $0x99] sm:$0xff]
      %v803 = vld [vmem:[#allocation2 + $0xa9] sm:$0xff]
      %v804 = vld [vmem:[#allocation2 + $0xb1] sm:$0xff]
      %v805 = vld [vmem:[#allocation2 + $0xc1] sm:$0xff]
      %v806 = vld [vmem:[#allocation2 + $0xc9] sm:$0xff]
      %v807 = vld [vmem:[#allocation2 + $0xd9] sm:$0xff]
      %v808 = vld [vmem:[#allocation2 + $0xe1] sm:$0xff]
      %v809 = vld [vmem:[#allocation2 + $0xf1] sm:$0xff]
      %v810 = vld [vmem:[#allocation2 + $0xf9] sm:$0xff]
      %v811 = vld [vmem:[#allocation2 + $0x109] sm:$0xff]
      %v812 = vld [vmem:[#allocation2 + $0x111] sm:$0xff]
      %v813 = vld [vmem:[#allocation2 + $0x121] sm:$0xff]
      %v814 = vld [vmem:[#allocation2 + $0x129] sm:$0xff]
      %v815 = vld [vmem:[#allocation2 + $0x139] sm:$0xff]
      %v816 = vld [vmem:[#allocation2 + $0x141] sm:$0xff]
      %v817 = vld [vmem:[#allocation2 + $0x151] sm:$0xff]
      %v818 = vld [vmem:[#allocation2 + $0x159] sm:$0xff]
      %v819 = vld [vmem:[#allocation2 + $0x169] sm:$0xff]
      %v820 = vld [vmem:[#allocation2 + $0x171] sm:$0xff]
      %v821 = vpack.c.bf16 %v790, %v789
      %v822 = vpack.c.bf16 %v792, %v791
      %v823 = vpack.c.bf16 %v794, %v793
      %v824 = vpack.c.bf16 %v796, %v795
      %v825 = vpack.c.bf16 %v798, %v797
      %v826 = vpack.c.bf16 %v800, %v799
      %v827 = vpack.c.bf16 %v802, %v801
      %v828 = vpack.c.bf16 %v804, %v803
      %v829 = vpack.c.bf16 %v806, %v805
      %v830 = vpack.c.bf16 %v808, %v807
      %v831 = vpack.c.bf16 %v810, %v809
      %v832 = vpack.c.bf16 %v812, %v811
      %v833 = vpack.c.bf16 %v814, %v813
      %v834 = vpack.c.bf16 %v816, %v815
      %v835 = vpack.c.bf16 %v818, %v817
      %v836 = vpack.c.bf16 %v820, %v819
      %s837 = scalar_lea.vmem %s4, 2
      %v838 = vld [vmem:[%s837] sm:$0x3]
      %v840 = vsel %vm478, %v821, 0
      %v843 = vsel %vm478, %v822, 0
      %v846 = vsel %vm478, %v823, 0
      %v849 = vsel %vm478, %v824, 0
      %v852 = vsel %vm478, %v825, 0
      %v855 = vsel %vm478, %v826, 0
      %v858 = vsel %vm478, %v827, 0
      %v861 = vsel %vm478, %v828, 0
      %v864 = vsel %vm478, %v829, 0
      %v867 = vsel %vm478, %v830, 0
      %v870 = vsel %vm478, %v831, 0
      %v873 = vsel %vm478, %v832, 0
      %v876 = vsel %vm478, %v833, 0
      %v879 = vsel %vm478, %v834, 0
      %v882 = vsel %vm478, %v835, 0
      %v885 = vsel %vm478, %v836, 0
      %v888 = vsel %vm527, %v838, 0
      %890 = vmatpush.bf16.msra.mxu0 0
      %891 = vmatpush.bf16.msra.mxu0 0
      %892 = vmatpush.bf16.msra.mxu0 0
      %893 = vmatpush.bf16.msra.mxu0 0
      %894 = vmatpush.bf16.msra.mxu0 0
      %895 = vmatpush.bf16.msra.mxu0 0
      %896 = vmatpush.bf16.msra.mxu0 0
      %897 = vmatpush.bf16.msra.mxu0 %v888
      %898 = vmatmul.bf16.gmra.mxu0 %v840
      %v899 = vpop.f32.mrf.mxu0
      %v900 = vadd.f32 0.0, %v899
      %v901 = vpop.f32.mrf.mxu0
      %v902 = vadd.f32 0.0, %v901
      %903 = vmatmul.bf16.gmra.mxu0 %v843
      %v904 = vpop.f32.mrf.mxu0
      %v905 = vadd.f32 0.0, %v904
      %v906 = vpop.f32.mrf.mxu0
      %v907 = vadd.f32 0.0, %v906
      %908 = vmatmul.bf16.gmra.mxu0 %v846
      %v909 = vpop.f32.mrf.mxu0
      %v910 = vadd.f32 0.0, %v909
      %v911 = vpop.f32.mrf.mxu0
      %v912 = vadd.f32 0.0, %v911
      %913 = vmatmul.bf16.gmra.mxu0 %v849
      %v914 = vpop.f32.mrf.mxu0
      %v915 = vadd.f32 0.0, %v914
      %v916 = vpop.f32.mrf.mxu0
      %v917 = vadd.f32 0.0, %v916
      %918 = vmatmul.bf16.gmra.mxu0 %v852
      %v919 = vpop.f32.mrf.mxu0
      %v920 = vadd.f32 0.0, %v919
      %v921 = vpop.f32.mrf.mxu0
      %v922 = vadd.f32 0.0, %v921
      %923 = vmatmul.bf16.gmra.mxu0 %v855
      %v924 = vpop.f32.mrf.mxu0
      %v925 = vadd.f32 0.0, %v924
      %v926 = vpop.f32.mrf.mxu0
      %v927 = vadd.f32 0.0, %v926
      %928 = vmatmul.bf16.gmra.mxu0 %v858
      %v929 = vpop.f32.mrf.mxu0
      %v930 = vadd.f32 0.0, %v929
      %v931 = vpop.f32.mrf.mxu0
      %v932 = vadd.f32 0.0, %v931
      %933 = vmatmul.bf16.gmra.mxu0 %v861
      %v934 = vpop.f32.mrf.mxu0
      %v935 = vadd.f32 0.0, %v934
      %v936 = vpop.f32.mrf.mxu0
      %v937 = vadd.f32 0.0, %v936
      %938 = vmatmul.bf16.gmra.mxu0 %v864
      %v939 = vpop.f32.mrf.mxu0
      %v940 = vadd.f32 0.0, %v939
      %v941 = vpop.f32.mrf.mxu0
      %v942 = vadd.f32 0.0, %v941
      %943 = vmatmul.bf16.gmra.mxu0 %v867
      %v944 = vpop.f32.mrf.mxu0
      %v945 = vadd.f32 0.0, %v944
      %v946 = vpop.f32.mrf.mxu0
      %v947 = vadd.f32 0.0, %v946
      %948 = vmatmul.bf16.gmra.mxu0 %v870
      %v949 = vpop.f32.mrf.mxu0
      %v950 = vadd.f32 0.0, %v949
      %v951 = vpop.f32.mrf.mxu0
      %v952 = vadd.f32 0.0, %v951
      %953 = vmatmul.bf16.gmra.mxu0 %v873
      %v954 = vpop.f32.mrf.mxu0
      %v955 = vadd.f32 0.0, %v954
      %v956 = vpop.f32.mrf.mxu0
      %v957 = vadd.f32 0.0, %v956
      %958 = vmatmul.bf16.gmra.mxu0 %v876
      %v959 = vpop.f32.mrf.mxu0
      %v960 = vadd.f32 0.0, %v959
      %v961 = vpop.f32.mrf.mxu0
      %v962 = vadd.f32 0.0, %v961
      %963 = vmatmul.bf16.gmra.mxu0 %v879
      %v964 = vpop.f32.mrf.mxu0
      %v965 = vadd.f32 0.0, %v964
      %v966 = vpop.f32.mrf.mxu0
      %v967 = vadd.f32 0.0, %v966
      %968 = vmatmul.bf16.gmra.mxu0 %v882
      %v969 = vpop.f32.mrf.mxu0
      %v970 = vadd.f32 0.0, %v969
      %v971 = vpop.f32.mrf.mxu0
      %v972 = vadd.f32 0.0, %v971
      %973 = vmatmul.bf16.gmra.mxu0 %v885
      %v974 = vpop.f32.mrf.mxu0
      %v975 = vadd.f32 0.0, %v974
      %v976 = vpop.f32.mrf.mxu0
      %v977 = vadd.f32 0.0, %v976
      %978 = vdwg.mxu0
      %v980 = vsel %vm478, %v772, 0
      %v983 = vsel %vm478, %v773, 0
      %v986 = vsel %vm478, %v774, 0
      %v989 = vsel %vm478, %v775, 0
      %v992 = vsel %vm478, %v776, 0
      %v995 = vsel %vm478, %v777, 0
      %v998 = vsel %vm478, %v778, 0
      %v1001 = vsel %vm478, %v779, 0
      %v1004 = vsel %vm478, %v780, 0
      %v1007 = vsel %vm478, %v781, 0
      %v1010 = vsel %vm478, %v782, 0
      %v1013 = vsel %vm478, %v783, 0
      %v1016 = vsel %vm478, %v784, 0
      %v1019 = vsel %vm478, %v785, 0
      %v1022 = vsel %vm478, %v786, 0
      %v1025 = vsel %vm478, %v787, 0
      %v1028 = vsel %vm527, %v788, 0
      %1030 = vmatpush.bf16.msra.mxu0 0
      %1031 = vmatpush.bf16.msra.mxu0 0
      %1032 = vmatpush.bf16.msra.mxu0 0
      %1033 = vmatpush.bf16.msra.mxu0 0
      %1034 = vmatpush.bf16.msra.mxu0 0
      %1035 = vmatpush.bf16.msra.mxu0 0
      %1036 = vmatpush.bf16.msra.mxu0 0
      %1037 = vmatpush.bf16.msra.mxu0 %v1028
      %1038 = vmatmul.bf16.gmra.mxu0 %v980
      %v1039 = vpop.f32.mrf.mxu0
      %v1040 = vadd.f32 %v900, %v1039
      %v1041 = vpop.f32.mrf.mxu0
      %v1042 = vadd.f32 %v902, %v1041
      %1043 = vmatmul.bf16.gmra.mxu0 %v983
      %v1044 = vpop.f32.mrf.mxu0
      %v1045 = vadd.f32 %v905, %v1044
      %v1046 = vpop.f32.mrf.mxu0
      %v1047 = vadd.f32 %v907, %v1046
      %1048 = vmatmul.bf16.gmra.mxu0 %v986
      %v1049 = vpop.f32.mrf.mxu0
      %v1050 = vadd.f32 %v910, %v1049
      %v1051 = vpop.f32.mrf.mxu0
      %v1052 = vadd.f32 %v912, %v1051
      %1053 = vmatmul.bf16.gmra.mxu0 %v989
      %v1054 = vpop.f32.mrf.mxu0
      %v1055 = vadd.f32 %v915, %v1054
      %v1056 = vpop.f32.mrf.mxu0
      %v1057 = vadd.f32 %v917, %v1056
      %1058 = vmatmul.bf16.gmra.mxu0 %v992
      %v1059 = vpop.f32.mrf.mxu0
      %v1060 = vadd.f32 %v920, %v1059
      %v1061 = vpop.f32.mrf.mxu0
      %v1062 = vadd.f32 %v922, %v1061
      %1063 = vmatmul.bf16.gmra.mxu0 %v995
      %v1064 = vpop.f32.mrf.mxu0
      %v1065 = vadd.f32 %v925, %v1064
      %v1066 = vpop.f32.mrf.mxu0
      %v1067 = vadd.f32 %v927, %v1066
      %1068 = vmatmul.bf16.gmra.mxu0 %v998
      %v1069 = vpop.f32.mrf.mxu0
      %v1070 = vadd.f32 %v930, %v1069
      %v1071 = vpop.f32.mrf.mxu0
      %v1072 = vadd.f32 %v932, %v1071
      %1073 = vmatmul.bf16.gmra.mxu0 %v1001
      %v1074 = vpop.f32.mrf.mxu0
      %v1075 = vadd.f32 %v935, %v1074
      %v1076 = vpop.f32.mrf.mxu0
      %v1077 = vadd.f32 %v937, %v1076
      %1078 = vmatmul.bf16.gmra.mxu0 %v1004
      %v1079 = vpop.f32.mrf.mxu0
      %v1080 = vadd.f32 %v940, %v1079
      %v1081 = vpop.f32.mrf.mxu0
      %v1082 = vadd.f32 %v942, %v1081
      %1083 = vmatmul.bf16.gmra.mxu0 %v1007
      %v1084 = vpop.f32.mrf.mxu0
      %v1085 = vadd.f32 %v945, %v1084
      %v1086 = vpop.f32.mrf.mxu0
      %v1087 = vadd.f32 %v947, %v1086
      %1088 = vmatmul.bf16.gmra.mxu0 %v1010
      %v1089 = vpop.f32.mrf.mxu0
      %v1090 = vadd.f32 %v950, %v1089
      %v1091 = vpop.f32.mrf.mxu0
      %v1092 = vadd.f32 %v952, %v1091
      %1093 = vmatmul.bf16.gmra.mxu0 %v1013
      %v1094 = vpop.f32.mrf.mxu0
      %v1095 = vadd.f32 %v955, %v1094
      %v1096 = vpop.f32.mrf.mxu0
      %v1097 = vadd.f32 %v957, %v1096
      %1098 = vmatmul.bf16.gmra.mxu0 %v1016
      %v1099 = vpop.f32.mrf.mxu0
      %v1100 = vadd.f32 %v960, %v1099
      %v1101 = vpop.f32.mrf.mxu0
      %v1102 = vadd.f32 %v962, %v1101
      %1103 = vmatmul.bf16.gmra.mxu0 %v1019
      %v1104 = vpop.f32.mrf.mxu0
      %v1105 = vadd.f32 %v965, %v1104
      %v1106 = vpop.f32.mrf.mxu0
      %v1107 = vadd.f32 %v967, %v1106
      %1108 = vmatmul.bf16.gmra.mxu0 %v1022
      %v1109 = vpop.f32.mrf.mxu0
      %v1110 = vadd.f32 %v970, %v1109
      %v1111 = vpop.f32.mrf.mxu0
      %v1112 = vadd.f32 %v972, %v1111
      %1113 = vmatmul.bf16.gmra.mxu0 %v1025
      %v1114 = vpop.f32.mrf.mxu0
      %v1115 = vadd.f32 %v975, %v1114
      %v1116 = vpop.f32.mrf.mxu0
      %v1117 = vadd.f32 %v977, %v1116
      %1118 = vdwg.mxu0
      %v1119 = vld [vmem:[#allocation2 + $0x2] sm:$0xff]
      %v1120 = vld [vmem:[#allocation2 + $0xa] sm:$0xff]
      %v1121 = vld [vmem:[#allocation2 + $0x1a] sm:$0xff]
      %v1122 = vld [vmem:[#allocation2 + $0x22] sm:$0xff]
      %v1123 = vld [vmem:[#allocation2 + $0x32] sm:$0xff]
      %v1124 = vld [vmem:[#allocation2 + $0x3a] sm:$0xff]
      %v1125 = vld [vmem:[#allocation2 + $0x4a] sm:$0xff]
      %v1126 = vld [vmem:[#allocation2 + $0x52] sm:$0xff]
      %v1127 = vld [vmem:[#allocation2 + $0x62] sm:$0xff]
      %v1128 = vld [vmem:[#allocation2 + $0x6a] sm:$0xff]
      %v1129 = vld [vmem:[#allocation2 + $0x7a] sm:$0xff]
      %v1130 = vld [vmem:[#allocation2 + $0x82] sm:$0xff]
      %v1131 = vld [vmem:[#allocation2 + $0x92] sm:$0xff]
      %v1132 = vld [vmem:[#allocation2 + $0x9a] sm:$0xff]
      %v1133 = vld [vmem:[#allocation2 + $0xaa] sm:$0xff]
      %v1134 = vld [vmem:[#allocation2 + $0xb2] sm:$0xff]
      %v1135 = vld [vmem:[#allocation2 + $0xc2] sm:$0xff]
      %v1136 = vld [vmem:[#allocation2 + $0xca] sm:$0xff]
      %v1137 = vld [vmem:[#allocation2 + $0xda] sm:$0xff]
      %v1138 = vld [vmem:[#allocation2 + $0xe2] sm:$0xff]
      %v1139 = vld [vmem:[#allocation2 + $0xf2] sm:$0xff]
      %v1140 = vld [vmem:[#allocation2 + $0xfa] sm:$0xff]
      %v1141 = vld [vmem:[#allocation2 + $0x10a] sm:$0xff]
      %v1142 = vld [vmem:[#allocation2 + $0x112] sm:$0xff]
      %v1143 = vld [vmem:[#allocation2 + $0x122] sm:$0xff]
      %v1144 = vld [vmem:[#allocation2 + $0x12a] sm:$0xff]
      %v1145 = vld [vmem:[#allocation2 + $0x13a] sm:$0xff]
      %v1146 = vld [vmem:[#allocation2 + $0x142] sm:$0xff]
      %v1147 = vld [vmem:[#allocation2 + $0x152] sm:$0xff]
      %v1148 = vld [vmem:[#allocation2 + $0x15a] sm:$0xff]
      %v1149 = vld [vmem:[#allocation2 + $0x16a] sm:$0xff]
      %v1150 = vld [vmem:[#allocation2 + $0x172] sm:$0xff]
      %v1151 = vpack.c.bf16 %v1120, %v1119
      %v1152 = vpack.c.bf16 %v1122, %v1121
      %v1153 = vpack.c.bf16 %v1124, %v1123
      %v1154 = vpack.c.bf16 %v1126, %v1125
      %v1155 = vpack.c.bf16 %v1128, %v1127
      %v1156 = vpack.c.bf16 %v1130, %v1129
      %v1157 = vpack.c.bf16 %v1132, %v1131
      %v1158 = vpack.c.bf16 %v1134, %v1133
      %v1159 = vpack.c.bf16 %v1136, %v1135
      %v1160 = vpack.c.bf16 %v1138, %v1137
      %v1161 = vpack.c.bf16 %v1140, %v1139
      %v1162 = vpack.c.bf16 %v1142, %v1141
      %v1163 = vpack.c.bf16 %v1144, %v1143
      %v1164 = vpack.c.bf16 %v1146, %v1145
      %v1165 = vpack.c.bf16 %v1148, %v1147
      %v1166 = vpack.c.bf16 %v1150, %v1149
      %s1167 = scalar_lea.vmem %s4, 4
      %v1168 = vld [vmem:[%s1167] sm:$0x3]
      %v1170 = vsel %vm478, %v1151, 0
      %v1173 = vsel %vm478, %v1152, 0
      %v1176 = vsel %vm478, %v1153, 0
      %v1179 = vsel %vm478, %v1154, 0
      %v1182 = vsel %vm478, %v1155, 0
      %v1185 = vsel %vm478, %v1156, 0
      %v1188 = vsel %vm478, %v1157, 0
      %v1191 = vsel %vm478, %v1158, 0
      %v1194 = vsel %vm478, %v1159, 0
      %v1197 = vsel %vm478, %v1160, 0
      %v1200 = vsel %vm478, %v1161, 0
      %v1203 = vsel %vm478, %v1162, 0
      %v1206 = vsel %vm478, %v1163, 0
      %v1209 = vsel %vm478, %v1164, 0
      %v1212 = vsel %vm478, %v1165, 0
      %v1215 = vsel %vm478, %v1166, 0
      %v1218 = vsel %vm527, %v1168, 0
      %1220 = vmatpush.bf16.msra.mxu0 0
      %1221 = vmatpush.bf16.msra.mxu0 0
      %1222 = vmatpush.bf16.msra.mxu0 0
      %1223 = vmatpush.bf16.msra.mxu0 0
      %1224 = vmatpush.bf16.msra.mxu0 0
      %1225 = vmatpush.bf16.msra.mxu0 0
      %1226 = vmatpush.bf16.msra.mxu0 0
      %1227 = vmatpush.bf16.msra.mxu0 %v1218
      %1228 = vmatmul.bf16.gmra.mxu0 %v1170
      %v1229 = vpop.f32.mrf.mxu0
      %v1230 = vadd.f32 0.0, %v1229
      %v1231 = vpop.f32.mrf.mxu0
      %v1232 = vadd.f32 0.0, %v1231
      %1233 = vmatmul.bf16.gmra.mxu0 %v1173
      %v1234 = vpop.f32.mrf.mxu0
      %v1235 = vadd.f32 0.0, %v1234
      %v1236 = vpop.f32.mrf.mxu0
      %v1237 = vadd.f32 0.0, %v1236
      %1238 = vmatmul.bf16.gmra.mxu0 %v1176
      %v1239 = vpop.f32.mrf.mxu0
      %v1240 = vadd.f32 0.0, %v1239
      %v1241 = vpop.f32.mrf.mxu0
      %v1242 = vadd.f32 0.0, %v1241
      %1243 = vmatmul.bf16.gmra.mxu0 %v1179
      %v1244 = vpop.f32.mrf.mxu0
      %v1245 = vadd.f32 0.0, %v1244
      %v1246 = vpop.f32.mrf.mxu0
      %v1247 = vadd.f32 0.0, %v1246
      %1248 = vmatmul.bf16.gmra.mxu0 %v1182
      %v1249 = vpop.f32.mrf.mxu0
      %v1250 = vadd.f32 0.0, %v1249
      %v1251 = vpop.f32.mrf.mxu0
      %v1252 = vadd.f32 0.0, %v1251
      %1253 = vmatmul.bf16.gmra.mxu0 %v1185
      %v1254 = vpop.f32.mrf.mxu0
      %v1255 = vadd.f32 0.0, %v1254
      %v1256 = vpop.f32.mrf.mxu0
      %v1257 = vadd.f32 0.0, %v1256
      %1258 = vmatmul.bf16.gmra.mxu0 %v1188
      %v1259 = vpop.f32.mrf.mxu0
      %v1260 = vadd.f32 0.0, %v1259
      %v1261 = vpop.f32.mrf.mxu0
      %v1262 = vadd.f32 0.0, %v1261
      %1263 = vmatmul.bf16.gmra.mxu0 %v1191
      %v1264 = vpop.f32.mrf.mxu0
      %v1265 = vadd.f32 0.0, %v1264
      %v1266 = vpop.f32.mrf.mxu0
      %v1267 = vadd.f32 0.0, %v1266
      %1268 = vmatmul.bf16.gmra.mxu0 %v1194
      %v1269 = vpop.f32.mrf.mxu0
      %v1270 = vadd.f32 0.0, %v1269
      %v1271 = vpop.f32.mrf.mxu0
      %v1272 = vadd.f32 0.0, %v1271
      %1273 = vmatmul.bf16.gmra.mxu0 %v1197
      %v1274 = vpop.f32.mrf.mxu0
      %v1275 = vadd.f32 0.0, %v1274
      %v1276 = vpop.f32.mrf.mxu0
      %v1277 = vadd.f32 0.0, %v1276
      %1278 = vmatmul.bf16.gmra.mxu0 %v1200
      %v1279 = vpop.f32.mrf.mxu0
      %v1280 = vadd.f32 0.0, %v1279
      %v1281 = vpop.f32.mrf.mxu0
      %v1282 = vadd.f32 0.0, %v1281
      %1283 = vmatmul.bf16.gmra.mxu0 %v1203
      %v1284 = vpop.f32.mrf.mxu0
      %v1285 = vadd.f32 0.0, %v1284
      %v1286 = vpop.f32.mrf.mxu0
      %v1287 = vadd.f32 0.0, %v1286
      %1288 = vmatmul.bf16.gmra.mxu0 %v1206
      %v1289 = vpop.f32.mrf.mxu0
      %v1290 = vadd.f32 0.0, %v1289
      %v1291 = vpop.f32.mrf.mxu0
      %v1292 = vadd.f32 0.0, %v1291
      %1293 = vmatmul.bf16.gmra.mxu0 %v1209
      %v1294 = vpop.f32.mrf.mxu0
      %v1295 = vadd.f32 0.0, %v1294
      %v1296 = vpop.f32.mrf.mxu0
      %v1297 = vadd.f32 0.0, %v1296
      %1298 = vmatmul.bf16.gmra.mxu0 %v1212
      %v1299 = vpop.f32.mrf.mxu0
      %v1300 = vadd.f32 0.0, %v1299
      %v1301 = vpop.f32.mrf.mxu0
      %v1302 = vadd.f32 0.0, %v1301
      %1303 = vmatmul.bf16.gmra.mxu0 %v1215
      %v1304 = vpop.f32.mrf.mxu0
      %v1305 = vadd.f32 0.0, %v1304
      %v1306 = vpop.f32.mrf.mxu0
      %v1307 = vadd.f32 0.0, %v1306
      %1308 = vdwg.mxu0
      %v1309 = vadd.f32 %v1040, %v1230
      %v1310 = vadd.f32 %v1042, %v1232
      %v1311 = vadd.f32 %v1045, %v1235
      %v1312 = vadd.f32 %v1047, %v1237
      %v1313 = vadd.f32 %v1050, %v1240
      %v1314 = vadd.f32 %v1052, %v1242
      %v1315 = vadd.f32 %v1055, %v1245
      %v1316 = vadd.f32 %v1057, %v1247
      %v1317 = vadd.f32 %v1060, %v1250
      %v1318 = vadd.f32 %v1062, %v1252
      %v1319 = vadd.f32 %v1065, %v1255
      %v1320 = vadd.f32 %v1067, %v1257
      %v1321 = vadd.f32 %v1070, %v1260
      %v1322 = vadd.f32 %v1072, %v1262
      %v1323 = vadd.f32 %v1075, %v1265
      %v1324 = vadd.f32 %v1077, %v1267
      %v1325 = vadd.f32 %v1080, %v1270
      %v1326 = vadd.f32 %v1082, %v1272
      %v1327 = vadd.f32 %v1085, %v1275
      %v1328 = vadd.f32 %v1087, %v1277
      %v1329 = vadd.f32 %v1090, %v1280
      %v1330 = vadd.f32 %v1092, %v1282
      %v1331 = vadd.f32 %v1095, %v1285
      %v1332 = vadd.f32 %v1097, %v1287
      %v1333 = vadd.f32 %v1100, %v1290
      %v1334 = vadd.f32 %v1102, %v1292
      %v1335 = vadd.f32 %v1105, %v1295
      %v1336 = vadd.f32 %v1107, %v1297
      %v1337 = vadd.f32 %v1110, %v1300
      %v1338 = vadd.f32 %v1112, %v1302
      %v1339 = vadd.f32 %v1115, %v1305
      %v1340 = vadd.f32 %v1117, %v1307
      %v1341 = vld [vmem:[%s707] sm:$0xff]
      %v1342 = vld [vmem:[%s707 + $0x8] sm:$0xff]
      %v1343 = vld [vmem:[%s707 + $0x18] sm:$0xff]
      %v1344 = vld [vmem:[%s707 + $0x20] sm:$0xff]
      %v1345 = vld [vmem:[%s707 + $0x30] sm:$0xff]
      %v1346 = vld [vmem:[%s707 + $0x38] sm:$0xff]
      %v1347 = vld [vmem:[%s707 + $0x48] sm:$0xff]
      %v1348 = vld [vmem:[%s707 + $0x50] sm:$0xff]
      %v1349 = vld [vmem:[%s707 + $0x60] sm:$0xff]
      %v1350 = vld [vmem:[%s707 + $0x68] sm:$0xff]
      %v1351 = vld [vmem:[%s707 + $0x78] sm:$0xff]
      %v1352 = vld [vmem:[%s707 + $0x80] sm:$0xff]
      %v1353 = vld [vmem:[%s707 + $0x90] sm:$0xff]
      %v1354 = vld [vmem:[%s707 + $0x98] sm:$0xff]
      %v1355 = vld [vmem:[%s707 + $0xa8] sm:$0xff]
      %v1356 = vld [vmem:[%s707 + $0xb0] sm:$0xff]
      %v1357 = vld [vmem:[%s707 + $0xc0] sm:$0xff]
      %v1358 = vld [vmem:[%s707 + $0xc8] sm:$0xff]
      %v1359 = vld [vmem:[%s707 + $0xd8] sm:$0xff]
      %v1360 = vld [vmem:[%s707 + $0xe0] sm:$0xff]
      %v1361 = vld [vmem:[%s707 + $0xf0] sm:$0xff]
      %v1362 = vld [vmem:[%s707 + $0xf8] sm:$0xff]
      %v1363 = vld [vmem:[%s707 + $0x108] sm:$0xff]
      %v1364 = vld [vmem:[%s707 + $0x110] sm:$0xff]
      %v1365 = vld [vmem:[%s707 + $0x120] sm:$0xff]
      %v1366 = vld [vmem:[%s707 + $0x128] sm:$0xff]
      %v1367 = vld [vmem:[%s707 + $0x138] sm:$0xff]
      %v1368 = vld [vmem:[%s707 + $0x140] sm:$0xff]
      %v1369 = vld [vmem:[%s707 + $0x150] sm:$0xff]
      %v1370 = vld [vmem:[%s707 + $0x158] sm:$0xff]
      %v1371 = vld [vmem:[%s707 + $0x168] sm:$0xff]
      %v1372 = vld [vmem:[%s707 + $0x170] sm:$0xff]
      %v1373 = vpack.c.bf16 %v1342, %v1341
      %v1374 = vpack.c.bf16 %v1344, %v1343
      %v1375 = vpack.c.bf16 %v1346, %v1345
      %v1376 = vpack.c.bf16 %v1348, %v1347
      %v1377 = vpack.c.bf16 %v1350, %v1349
      %v1378 = vpack.c.bf16 %v1352, %v1351
      %v1379 = vpack.c.bf16 %v1354, %v1353
      %v1380 = vpack.c.bf16 %v1356, %v1355
      %v1381 = vpack.c.bf16 %v1358, %v1357
      %v1382 = vpack.c.bf16 %v1360, %v1359
      %v1383 = vpack.c.bf16 %v1362, %v1361
      %v1384 = vpack.c.bf16 %v1364, %v1363
      %v1385 = vpack.c.bf16 %v1366, %v1365
      %v1386 = vpack.c.bf16 %v1368, %v1367
      %v1387 = vpack.c.bf16 %v1370, %v1369
      %v1388 = vpack.c.bf16 %v1372, %v1371
      %s1389 = scalar_lea.vmem %s4, 6
      %v1390 = vld [vmem:[%s1389] sm:$0x3]
      %v1392 = vsel %vm478, %v1373, 0
      %v1395 = vsel %vm478, %v1374, 0
      %v1398 = vsel %vm478, %v1375, 0
      %v1401 = vsel %vm478, %v1376, 0
      %v1404 = vsel %vm478, %v1377, 0
      %v1407 = vsel %vm478, %v1378, 0
      %v1410 = vsel %vm478, %v1379, 0
      %v1413 = vsel %vm478, %v1380, 0
      %v1416 = vsel %vm478, %v1381, 0
      %v1419 = vsel %vm478, %v1382, 0
      %v1422 = vsel %vm478, %v1383, 0
      %v1425 = vsel %vm478, %v1384, 0
      %v1428 = vsel %vm478, %v1385, 0
      %v1431 = vsel %vm478, %v1386, 0
      %v1434 = vsel %vm478, %v1387, 0
      %v1437 = vsel %vm478, %v1388, 0
      %v1440 = vsel %vm527, %v1390, 0
      %1442 = vmatpush.bf16.msra.mxu0 0
      %1443 = vmatpush.bf16.msra.mxu0 0
      %1444 = vmatpush.bf16.msra.mxu0 0
      %1445 = vmatpush.bf16.msra.mxu0 0
      %1446 = vmatpush.bf16.msra.mxu0 0
      %1447 = vmatpush.bf16.msra.mxu0 0
      %1448 = vmatpush.bf16.msra.mxu0 0
      %1449 = vmatpush.bf16.msra.mxu0 %v1440
      %1450 = vmatmul.bf16.gmra.mxu0 %v1392
      %v1451 = vpop.f32.mrf.mxu0
      %v1452 = vadd.f32 0.0, %v1451
      %v1453 = vpop.f32.mrf.mxu0
      %v1454 = vadd.f32 0.0, %v1453
      %1455 = vmatmul.bf16.gmra.mxu0 %v1395
      %v1456 = vpop.f32.mrf.mxu0
      %v1457 = vadd.f32 0.0, %v1456
      %v1458 = vpop.f32.mrf.mxu0
      %v1459 = vadd.f32 0.0, %v1458
      %1460 = vmatmul.bf16.gmra.mxu0 %v1398
      %v1461 = vpop.f32.mrf.mxu0
      %v1462 = vadd.f32 0.0, %v1461
      %v1463 = vpop.f32.mrf.mxu0
      %v1464 = vadd.f32 0.0, %v1463
      %1465 = vmatmul.bf16.gmra.mxu0 %v1401
      %v1466 = vpop.f32.mrf.mxu0
      %v1467 = vadd.f32 0.0, %v1466
      %v1468 = vpop.f32.mrf.mxu0
      %v1469 = vadd.f32 0.0, %v1468
      %1470 = vmatmul.bf16.gmra.mxu0 %v1404
      %v1471 = vpop.f32.mrf.mxu0
      %v1472 = vadd.f32 0.0, %v1471
      %v1473 = vpop.f32.mrf.mxu0
      %v1474 = vadd.f32 0.0, %v1473
      %1475 = vmatmul.bf16.gmra.mxu0 %v1407
      %v1476 = vpop.f32.mrf.mxu0
      %v1477 = vadd.f32 0.0, %v1476
      %v1478 = vpop.f32.mrf.mxu0
      %v1479 = vadd.f32 0.0, %v1478
      %1480 = vmatmul.bf16.gmra.mxu0 %v1410
      %v1481 = vpop.f32.mrf.mxu0
      %v1482 = vadd.f32 0.0, %v1481
      %v1483 = vpop.f32.mrf.mxu0
      %v1484 = vadd.f32 0.0, %v1483
      %1485 = vmatmul.bf16.gmra.mxu0 %v1413
      %v1486 = vpop.f32.mrf.mxu0
      %v1487 = vadd.f32 0.0, %v1486
      %v1488 = vpop.f32.mrf.mxu0
      %v1489 = vadd.f32 0.0, %v1488
      %1490 = vmatmul.bf16.gmra.mxu0 %v1416
      %v1491 = vpop.f32.mrf.mxu0
      %v1492 = vadd.f32 0.0, %v1491
      %v1493 = vpop.f32.mrf.mxu0
      %v1494 = vadd.f32 0.0, %v1493
      %1495 = vmatmul.bf16.gmra.mxu0 %v1419
      %v1496 = vpop.f32.mrf.mxu0
      %v1497 = vadd.f32 0.0, %v1496
      %v1498 = vpop.f32.mrf.mxu0
      %v1499 = vadd.f32 0.0, %v1498
      %1500 = vmatmul.bf16.gmra.mxu0 %v1422
      %v1501 = vpop.f32.mrf.mxu0
      %v1502 = vadd.f32 0.0, %v1501
      %v1503 = vpop.f32.mrf.mxu0
      %v1504 = vadd.f32 0.0, %v1503
      %1505 = vmatmul.bf16.gmra.mxu0 %v1425
      %v1506 = vpop.f32.mrf.mxu0
      %v1507 = vadd.f32 0.0, %v1506
      %v1508 = vpop.f32.mrf.mxu0
      %v1509 = vadd.f32 0.0, %v1508
      %1510 = vmatmul.bf16.gmra.mxu0 %v1428
      %v1511 = vpop.f32.mrf.mxu0
      %v1512 = vadd.f32 0.0, %v1511
      %v1513 = vpop.f32.mrf.mxu0
      %v1514 = vadd.f32 0.0, %v1513
      %1515 = vmatmul.bf16.gmra.mxu0 %v1431
      %v1516 = vpop.f32.mrf.mxu0
      %v1517 = vadd.f32 0.0, %v1516
      %v1518 = vpop.f32.mrf.mxu0
      %v1519 = vadd.f32 0.0, %v1518
      %1520 = vmatmul.bf16.gmra.mxu0 %v1434
      %v1521 = vpop.f32.mrf.mxu0
      %v1522 = vadd.f32 0.0, %v1521
      %v1523 = vpop.f32.mrf.mxu0
      %v1524 = vadd.f32 0.0, %v1523
      %1525 = vmatmul.bf16.gmra.mxu0 %v1437
      %v1526 = vpop.f32.mrf.mxu0
      %v1527 = vadd.f32 0.0, %v1526
      %v1528 = vpop.f32.mrf.mxu0
      %v1529 = vadd.f32 0.0, %v1528
      %1530 = vdwg.mxu0
      %v1531 = vadd.f32 %v1309, %v1452
      %v1532 = vadd.f32 %v1310, %v1454
      %v1533 = vadd.f32 %v1311, %v1457
      %v1534 = vadd.f32 %v1312, %v1459
      %v1535 = vadd.f32 %v1313, %v1462
      %v1536 = vadd.f32 %v1314, %v1464
      %v1537 = vadd.f32 %v1315, %v1467
      %v1538 = vadd.f32 %v1316, %v1469
      %v1539 = vadd.f32 %v1317, %v1472
      %v1540 = vadd.f32 %v1318, %v1474
      %v1541 = vadd.f32 %v1319, %v1477
      %v1542 = vadd.f32 %v1320, %v1479
      %v1543 = vadd.f32 %v1321, %v1482
      %v1544 = vadd.f32 %v1322, %v1484
      %v1545 = vadd.f32 %v1323, %v1487
      %v1546 = vadd.f32 %v1324, %v1489
      %v1547 = vadd.f32 %v1325, %v1492
      %v1548 = vadd.f32 %v1326, %v1494
      %v1549 = vadd.f32 %v1327, %v1497
      %v1550 = vadd.f32 %v1328, %v1499
      %v1551 = vadd.f32 %v1329, %v1502
      %v1552 = vadd.f32 %v1330, %v1504
      %v1553 = vadd.f32 %v1331, %v1507
      %v1554 = vadd.f32 %v1332, %v1509
      %v1555 = vadd.f32 %v1333, %v1512
      %v1556 = vadd.f32 %v1334, %v1514
      %v1557 = vadd.f32 %v1335, %v1517
      %v1558 = vadd.f32 %v1336, %v1519
      %v1559 = vadd.f32 %v1337, %v1522
      %v1560 = vadd.f32 %v1338, %v1524
      %v1561 = vadd.f32 %v1339, %v1527
      %v1562 = vadd.f32 %v1340, %v1529
      %v1563 = vld [vmem:[%s707 + $0x1] sm:$0xff]
      %v1564 = vld [vmem:[%s707 + $0x9] sm:$0xff]
      %v1565 = vld [vmem:[%s707 + $0x19] sm:$0xff]
      %v1566 = vld [vmem:[%s707 + $0x21] sm:$0xff]
      %v1567 = vld [vmem:[%s707 + $0x31] sm:$0xff]
      %v1568 = vld [vmem:[%s707 + $0x39] sm:$0xff]
      %v1569 = vld [vmem:[%s707 + $0x49] sm:$0xff]
      %v1570 = vld [vmem:[%s707 + $0x51] sm:$0xff]
      %v1571 = vld [vmem:[%s707 + $0x61] sm:$0xff]
      %v1572 = vld [vmem:[%s707 + $0x69] sm:$0xff]
      %v1573 = vld [vmem:[%s707 + $0x79] sm:$0xff]
      %v1574 = vld [vmem:[%s707 + $0x81] sm:$0xff]
      %v1575 = vld [vmem:[%s707 + $0x91] sm:$0xff]
      %v1576 = vld [vmem:[%s707 + $0x99] sm:$0xff]
      %v1577 = vld [vmem:[%s707 + $0xa9] sm:$0xff]
      %v1578 = vld [vmem:[%s707 + $0xb1] sm:$0xff]
      %v1579 = vld [vmem:[%s707 + $0xc1] sm:$0xff]
      %v1580 = vld [vmem:[%s707 + $0xc9] sm:$0xff]
      %v1581 = vld [vmem:[%s707 + $0xd9] sm:$0xff]
      %v1582 = vld [vmem:[%s707 + $0xe1] sm:$0xff]
      %v1583 = vld [vmem:[%s707 + $0xf1] sm:$0xff]
      %v1584 = vld [vmem:[%s707 + $0xf9] sm:$0xff]
      %v1585 = vld [vmem:[%s707 + $0x109] sm:$0xff]
      %v1586 = vld [vmem:[%s707 + $0x111] sm:$0xff]
      %v1587 = vld [vmem:[%s707 + $0x121] sm:$0xff]
      %v1588 = vld [vmem:[%s707 + $0x129] sm:$0xff]
      %v1589 = vld [vmem:[%s707 + $0x139] sm:$0xff]
      %v1590 = vld [vmem:[%s707 + $0x141] sm:$0xff]
      %v1591 = vld [vmem:[%s707 + $0x151] sm:$0xff]
      %v1592 = vld [vmem:[%s707 + $0x159] sm:$0xff]
      %v1593 = vld [vmem:[%s707 + $0x169] sm:$0xff]
      %v1594 = vld [vmem:[%s707 + $0x171] sm:$0xff]
      %v1595 = vpack.c.bf16 %v1564, %v1563
      %v1596 = vpack.c.bf16 %v1566, %v1565
      %v1597 = vpack.c.bf16 %v1568, %v1567
      %v1598 = vpack.c.bf16 %v1570, %v1569
      %v1599 = vpack.c.bf16 %v1572, %v1571
      %v1600 = vpack.c.bf16 %v1574, %v1573
      %v1601 = vpack.c.bf16 %v1576, %v1575
      %v1602 = vpack.c.bf16 %v1578, %v1577
      %v1603 = vpack.c.bf16 %v1580, %v1579
      %v1604 = vpack.c.bf16 %v1582, %v1581
      %v1605 = vpack.c.bf16 %v1584, %v1583
      %v1606 = vpack.c.bf16 %v1586, %v1585
      %v1607 = vpack.c.bf16 %v1588, %v1587
      %v1608 = vpack.c.bf16 %v1590, %v1589
      %v1609 = vpack.c.bf16 %v1592, %v1591
      %v1610 = vpack.c.bf16 %v1594, %v1593
      %s1611 = scalar_lea.vmem %s4, 8
      %v1612 = vld [vmem:[%s1611] sm:$0x3]
      %v1614 = vsel %vm478, %v1595, 0
      %v1617 = vsel %vm478, %v1596, 0
      %v1620 = vsel %vm478, %v1597, 0
      %v1623 = vsel %vm478, %v1598, 0
      %v1626 = vsel %vm478, %v1599, 0
      %v1629 = vsel %vm478, %v1600, 0
      %v1632 = vsel %vm478, %v1601, 0
      %v1635 = vsel %vm478, %v1602, 0
      %v1638 = vsel %vm478, %v1603, 0
      %v1641 = vsel %vm478, %v1604, 0
      %v1644 = vsel %vm478, %v1605, 0
      %v1647 = vsel %vm478, %v1606, 0
      %v1650 = vsel %vm478, %v1607, 0
      %v1653 = vsel %vm478, %v1608, 0
      %v1656 = vsel %vm478, %v1609, 0
      %v1659 = vsel %vm478, %v1610, 0
      %v1662 = vsel %vm527, %v1612, 0
      %1664 = vmatpush.bf16.msra.mxu0 0
      %1665 = vmatpush.bf16.msra.mxu0 0
      %1666 = vmatpush.bf16.msra.mxu0 0
      %1667 = vmatpush.bf16.msra.mxu0 0
      %1668 = vmatpush.bf16.msra.mxu0 0
      %1669 = vmatpush.bf16.msra.mxu0 0
      %1670 = vmatpush.bf16.msra.mxu0 0
      %1671 = vmatpush.bf16.msra.mxu0 %v1662
      %1672 = vmatmul.bf16.gmra.mxu0 %v1614
      %v1673 = vpop.f32.mrf.mxu0
      %v1674 = vadd.f32 0.0, %v1673
      %v1675 = vpop.f32.mrf.mxu0
      %v1676 = vadd.f32 0.0, %v1675
      %1677 = vmatmul.bf16.gmra.mxu0 %v1617
      %v1678 = vpop.f32.mrf.mxu0
      %v1679 = vadd.f32 0.0, %v1678
      %v1680 = vpop.f32.mrf.mxu0
      %v1681 = vadd.f32 0.0, %v1680
      %1682 = vmatmul.bf16.gmra.mxu0 %v1620
      %v1683 = vpop.f32.mrf.mxu0
      %v1684 = vadd.f32 0.0, %v1683
      %v1685 = vpop.f32.mrf.mxu0
      %v1686 = vadd.f32 0.0, %v1685
      %1687 = vmatmul.bf16.gmra.mxu0 %v1623
      %v1688 = vpop.f32.mrf.mxu0
      %v1689 = vadd.f32 0.0, %v1688
      %v1690 = vpop.f32.mrf.mxu0
      %v1691 = vadd.f32 0.0, %v1690
      %1692 = vmatmul.bf16.gmra.mxu0 %v1626
      %v1693 = vpop.f32.mrf.mxu0
      %v1694 = vadd.f32 0.0, %v1693
      %v1695 = vpop.f32.mrf.mxu0
      %v1696 = vadd.f32 0.0, %v1695
      %1697 = vmatmul.bf16.gmra.mxu0 %v1629
      %v1698 = vpop.f32.mrf.mxu0
      %v1699 = vadd.f32 0.0, %v1698
      %v1700 = vpop.f32.mrf.mxu0
      %v1701 = vadd.f32 0.0, %v1700
      %1702 = vmatmul.bf16.gmra.mxu0 %v1632
      %v1703 = vpop.f32.mrf.mxu0
      %v1704 = vadd.f32 0.0, %v1703
      %v1705 = vpop.f32.mrf.mxu0
      %v1706 = vadd.f32 0.0, %v1705
      %1707 = vmatmul.bf16.gmra.mxu0 %v1635
      %v1708 = vpop.f32.mrf.mxu0
      %v1709 = vadd.f32 0.0, %v1708
      %v1710 = vpop.f32.mrf.mxu0
      %v1711 = vadd.f32 0.0, %v1710
      %1712 = vmatmul.bf16.gmra.mxu0 %v1638
      %v1713 = vpop.f32.mrf.mxu0
      %v1714 = vadd.f32 0.0, %v1713
      %v1715 = vpop.f32.mrf.mxu0
      %v1716 = vadd.f32 0.0, %v1715
      %1717 = vmatmul.bf16.gmra.mxu0 %v1641
      %v1718 = vpop.f32.mrf.mxu0
      %v1719 = vadd.f32 0.0, %v1718
      %v1720 = vpop.f32.mrf.mxu0
      %v1721 = vadd.f32 0.0, %v1720
      %1722 = vmatmul.bf16.gmra.mxu0 %v1644
      %v1723 = vpop.f32.mrf.mxu0
      %v1724 = vadd.f32 0.0, %v1723
      %v1725 = vpop.f32.mrf.mxu0
      %v1726 = vadd.f32 0.0, %v1725
      %1727 = vmatmul.bf16.gmra.mxu0 %v1647
      %v1728 = vpop.f32.mrf.mxu0
      %v1729 = vadd.f32 0.0, %v1728
      %v1730 = vpop.f32.mrf.mxu0
      %v1731 = vadd.f32 0.0, %v1730
      %1732 = vmatmul.bf16.gmra.mxu0 %v1650
      %v1733 = vpop.f32.mrf.mxu0
      %v1734 = vadd.f32 0.0, %v1733
      %v1735 = vpop.f32.mrf.mxu0
      %v1736 = vadd.f32 0.0, %v1735
      %1737 = vmatmul.bf16.gmra.mxu0 %v1653
      %v1738 = vpop.f32.mrf.mxu0
      %v1739 = vadd.f32 0.0, %v1738
      %v1740 = vpop.f32.mrf.mxu0
      %v1741 = vadd.f32 0.0, %v1740
      %1742 = vmatmul.bf16.gmra.mxu0 %v1656
      %v1743 = vpop.f32.mrf.mxu0
      %v1744 = vadd.f32 0.0, %v1743
      %v1745 = vpop.f32.mrf.mxu0
      %v1746 = vadd.f32 0.0, %v1745
      %1747 = vmatmul.bf16.gmra.mxu0 %v1659
      %v1748 = vpop.f32.mrf.mxu0
      %v1749 = vadd.f32 0.0, %v1748
      %v1750 = vpop.f32.mrf.mxu0
      %v1751 = vadd.f32 0.0, %v1750
      %1752 = vdwg.mxu0
      %v1753 = vadd.f32 %v1531, %v1674
      %v1754 = vadd.f32 %v1532, %v1676
      %v1755 = vadd.f32 %v1533, %v1679
      %v1756 = vadd.f32 %v1534, %v1681
      %v1757 = vadd.f32 %v1535, %v1684
      %v1758 = vadd.f32 %v1536, %v1686
      %v1759 = vadd.f32 %v1537, %v1689
      %v1760 = vadd.f32 %v1538, %v1691
      %v1761 = vadd.f32 %v1539, %v1694
      %v1762 = vadd.f32 %v1540, %v1696
      %v1763 = vadd.f32 %v1541, %v1699
      %v1764 = vadd.f32 %v1542, %v1701
      %v1765 = vadd.f32 %v1543, %v1704
      %v1766 = vadd.f32 %v1544, %v1706
      %v1767 = vadd.f32 %v1545, %v1709
      %v1768 = vadd.f32 %v1546, %v1711
      %v1769 = vadd.f32 %v1547, %v1714
      %v1770 = vadd.f32 %v1548, %v1716
      %v1771 = vadd.f32 %v1549, %v1719
      %v1772 = vadd.f32 %v1550, %v1721
      %v1773 = vadd.f32 %v1551, %v1724
      %v1774 = vadd.f32 %v1552, %v1726
      %v1775 = vadd.f32 %v1553, %v1729
      %v1776 = vadd.f32 %v1554, %v1731
      %v1777 = vadd.f32 %v1555, %v1734
      %v1778 = vadd.f32 %v1556, %v1736
      %v1779 = vadd.f32 %v1557, %v1739
      %v1780 = vadd.f32 %v1558, %v1741
      %v1781 = vadd.f32 %v1559, %v1744
      %v1782 = vadd.f32 %v1560, %v1746
      %v1783 = vadd.f32 %v1561, %v1749
      %v1784 = vadd.f32 %v1562, %v1751
      %v1785 = vld [vmem:[%s707 + $0x2] sm:$0xff]
      %v1786 = vld [vmem:[%s707 + $0xa] sm:$0xff]
      %v1787 = vld [vmem:[%s707 + $0x1a] sm:$0xff]
      %v1788 = vld [vmem:[%s707 + $0x22] sm:$0xff]
      %v1789 = vld [vmem:[%s707 + $0x32] sm:$0xff]
      %v1790 = vld [vmem:[%s707 + $0x3a] sm:$0xff]
      %v1791 = vld [vmem:[%s707 + $0x4a] sm:$0xff]
      %v1792 = vld [vmem:[%s707 + $0x52] sm:$0xff]
      %v1793 = vld [vmem:[%s707 + $0x62] sm:$0xff]
      %v1794 = vld [vmem:[%s707 + $0x6a] sm:$0xff]
      %v1795 = vld [vmem:[%s707 + $0x7a] sm:$0xff]
      %v1796 = vld [vmem:[%s707 + $0x82] sm:$0xff]
      %v1797 = vld [vmem:[%s707 + $0x92] sm:$0xff]
      %v1798 = vld [vmem:[%s707 + $0x9a] sm:$0xff]
      %v1799 = vld [vmem:[%s707 + $0xaa] sm:$0xff]
      %v1800 = vld [vmem:[%s707 + $0xb2] sm:$0xff]
      %v1801 = vld [vmem:[%s707 + $0xc2] sm:$0xff]
      %v1802 = vld [vmem:[%s707 + $0xca] sm:$0xff]
      %v1803 = vld [vmem:[%s707 + $0xda] sm:$0xff]
      %v1804 = vld [vmem:[%s707 + $0xe2] sm:$0xff]
      %v1805 = vld [vmem:[%s707 + $0xf2] sm:$0xff]
      %v1806 = vld [vmem:[%s707 + $0xfa] sm:$0xff]
      %v1807 = vld [vmem:[%s707 + $0x10a] sm:$0xff]
      %v1808 = vld [vmem:[%s707 + $0x112] sm:$0xff]
      %v1809 = vld [vmem:[%s707 + $0x122] sm:$0xff]
      %v1810 = vld [vmem:[%s707 + $0x12a] sm:$0xff]
      %v1811 = vld [vmem:[%s707 + $0x13a] sm:$0xff]
      %v1812 = vld [vmem:[%s707 + $0x142] sm:$0xff]
      %v1813 = vld [vmem:[%s707 + $0x152] sm:$0xff]
      %v1814 = vld [vmem:[%s707 + $0x15a] sm:$0xff]
      %v1815 = vld [vmem:[%s707 + $0x16a] sm:$0xff]
      %v1816 = vld [vmem:[%s707 + $0x172] sm:$0xff]
      %v1817 = vpack.c.bf16 %v1786, %v1785
      %v1818 = vpack.c.bf16 %v1788, %v1787
      %v1819 = vpack.c.bf16 %v1790, %v1789
      %v1820 = vpack.c.bf16 %v1792, %v1791
      %v1821 = vpack.c.bf16 %v1794, %v1793
      %v1822 = vpack.c.bf16 %v1796, %v1795
      %v1823 = vpack.c.bf16 %v1798, %v1797
      %v1824 = vpack.c.bf16 %v1800, %v1799
      %v1825 = vpack.c.bf16 %v1802, %v1801
      %v1826 = vpack.c.bf16 %v1804, %v1803
      %v1827 = vpack.c.bf16 %v1806, %v1805
      %v1828 = vpack.c.bf16 %v1808, %v1807
      %v1829 = vpack.c.bf16 %v1810, %v1809
      %v1830 = vpack.c.bf16 %v1812, %v1811
      %v1831 = vpack.c.bf16 %v1814, %v1813
      %v1832 = vpack.c.bf16 %v1816, %v1815
      %s1833 = scalar_lea.vmem %s4, 10
      %v1834 = vld [vmem:[%s1833] sm:$0x3]
      %v1836 = vsel %vm478, %v1817, 0
      %v1839 = vsel %vm478, %v1818, 0
      %v1842 = vsel %vm478, %v1819, 0
      %v1845 = vsel %vm478, %v1820, 0
      %v1848 = vsel %vm478, %v1821, 0
      %v1851 = vsel %vm478, %v1822, 0
      %v1854 = vsel %vm478, %v1823, 0
      %v1857 = vsel %vm478, %v1824, 0
      %v1860 = vsel %vm478, %v1825, 0
      %v1863 = vsel %vm478, %v1826, 0
      %v1866 = vsel %vm478, %v1827, 0
      %v1869 = vsel %vm478, %v1828, 0
      %v1872 = vsel %vm478, %v1829, 0
      %v1875 = vsel %vm478, %v1830, 0
      %v1878 = vsel %vm478, %v1831, 0
      %v1881 = vsel %vm478, %v1832, 0
      %v1884 = vsel %vm527, %v1834, 0
      %1886 = vmatpush.bf16.msra.mxu0 0
      %1887 = vmatpush.bf16.msra.mxu0 0
      %1888 = vmatpush.bf16.msra.mxu0 0
      %1889 = vmatpush.bf16.msra.mxu0 0
      %1890 = vmatpush.bf16.msra.mxu0 0
      %1891 = vmatpush.bf16.msra.mxu0 0
      %1892 = vmatpush.bf16.msra.mxu0 0
      %1893 = vmatpush.bf16.msra.mxu0 %v1884
      %1894 = vmatmul.bf16.gmra.mxu0 %v1836
      %v1895 = vpop.f32.mrf.mxu0
      %v1896 = vadd.f32 0.0, %v1895
      %v1897 = vpop.f32.mrf.mxu0
      %v1898 = vadd.f32 0.0, %v1897
      %1899 = vmatmul.bf16.gmra.mxu0 %v1839
      %v1900 = vpop.f32.mrf.mxu0
      %v1901 = vadd.f32 0.0, %v1900
      %v1902 = vpop.f32.mrf.mxu0
      %v1903 = vadd.f32 0.0, %v1902
      %1904 = vmatmul.bf16.gmra.mxu0 %v1842
      %v1905 = vpop.f32.mrf.mxu0
      %v1906 = vadd.f32 0.0, %v1905
      %v1907 = vpop.f32.mrf.mxu0
      %v1908 = vadd.f32 0.0, %v1907
      %1909 = vmatmul.bf16.gmra.mxu0 %v1845
      %v1910 = vpop.f32.mrf.mxu0
      %v1911 = vadd.f32 0.0, %v1910
      %v1912 = vpop.f32.mrf.mxu0
      %v1913 = vadd.f32 0.0, %v1912
      %1914 = vmatmul.bf16.gmra.mxu0 %v1848
      %v1915 = vpop.f32.mrf.mxu0
      %v1916 = vadd.f32 0.0, %v1915
      %v1917 = vpop.f32.mrf.mxu0
      %v1918 = vadd.f32 0.0, %v1917
      %1919 = vmatmul.bf16.gmra.mxu0 %v1851
      %v1920 = vpop.f32.mrf.mxu0
      %v1921 = vadd.f32 0.0, %v1920
      %v1922 = vpop.f32.mrf.mxu0
      %v1923 = vadd.f32 0.0, %v1922
      %1924 = vmatmul.bf16.gmra.mxu0 %v1854
      %v1925 = vpop.f32.mrf.mxu0
      %v1926 = vadd.f32 0.0, %v1925
      %v1927 = vpop.f32.mrf.mxu0
      %v1928 = vadd.f32 0.0, %v1927
      %1929 = vmatmul.bf16.gmra.mxu0 %v1857
      %v1930 = vpop.f32.mrf.mxu0
      %v1931 = vadd.f32 0.0, %v1930
      %v1932 = vpop.f32.mrf.mxu0
      %v1933 = vadd.f32 0.0, %v1932
      %1934 = vmatmul.bf16.gmra.mxu0 %v1860
      %v1935 = vpop.f32.mrf.mxu0
      %v1936 = vadd.f32 0.0, %v1935
      %v1937 = vpop.f32.mrf.mxu0
      %v1938 = vadd.f32 0.0, %v1937
      %1939 = vmatmul.bf16.gmra.mxu0 %v1863
      %v1940 = vpop.f32.mrf.mxu0
      %v1941 = vadd.f32 0.0, %v1940
      %v1942 = vpop.f32.mrf.mxu0
      %v1943 = vadd.f32 0.0, %v1942
      %1944 = vmatmul.bf16.gmra.mxu0 %v1866
      %v1945 = vpop.f32.mrf.mxu0
      %v1946 = vadd.f32 0.0, %v1945
      %v1947 = vpop.f32.mrf.mxu0
      %v1948 = vadd.f32 0.0, %v1947
      %1949 = vmatmul.bf16.gmra.mxu0 %v1869
      %v1950 = vpop.f32.mrf.mxu0
      %v1951 = vadd.f32 0.0, %v1950
      %v1952 = vpop.f32.mrf.mxu0
      %v1953 = vadd.f32 0.0, %v1952
      %1954 = vmatmul.bf16.gmra.mxu0 %v1872
      %v1955 = vpop.f32.mrf.mxu0
      %v1956 = vadd.f32 0.0, %v1955
      %v1957 = vpop.f32.mrf.mxu0
      %v1958 = vadd.f32 0.0, %v1957
      %1959 = vmatmul.bf16.gmra.mxu0 %v1875
      %v1960 = vpop.f32.mrf.mxu0
      %v1961 = vadd.f32 0.0, %v1960
      %v1962 = vpop.f32.mrf.mxu0
      %v1963 = vadd.f32 0.0, %v1962
      %1964 = vmatmul.bf16.gmra.mxu0 %v1878
      %v1965 = vpop.f32.mrf.mxu0
      %v1966 = vadd.f32 0.0, %v1965
      %v1967 = vpop.f32.mrf.mxu0
      %v1968 = vadd.f32 0.0, %v1967
      %1969 = vmatmul.bf16.gmra.mxu0 %v1881
      %v1970 = vpop.f32.mrf.mxu0
      %v1971 = vadd.f32 0.0, %v1970
      %v1972 = vpop.f32.mrf.mxu0
      %v1973 = vadd.f32 0.0, %v1972
      %1974 = vdwg.mxu0
      %v1975 = vadd.f32 %v1753, %v1896
      %v1976 = vadd.f32 %v1754, %v1898
      %v1977 = vadd.f32 %v1755, %v1901
      %v1978 = vadd.f32 %v1756, %v1903
      %v1979 = vadd.f32 %v1757, %v1906
      %v1980 = vadd.f32 %v1758, %v1908
      %v1981 = vadd.f32 %v1759, %v1911
      %v1982 = vadd.f32 %v1760, %v1913
      %v1983 = vadd.f32 %v1761, %v1916
      %v1984 = vadd.f32 %v1762, %v1918
      %v1985 = vadd.f32 %v1763, %v1921
      %v1986 = vadd.f32 %v1764, %v1923
      %v1987 = vadd.f32 %v1765, %v1926
      %v1988 = vadd.f32 %v1766, %v1928
      %v1989 = vadd.f32 %v1767, %v1931
      %v1990 = vadd.f32 %v1768, %v1933
      %v1991 = vadd.f32 %v1769, %v1936
      %v1992 = vadd.f32 %v1770, %v1938
      %v1993 = vadd.f32 %v1771, %v1941
      %v1994 = vadd.f32 %v1772, %v1943
      %v1995 = vadd.f32 %v1773, %v1946
      %v1996 = vadd.f32 %v1774, %v1948
      %v1997 = vadd.f32 %v1775, %v1951
      %v1998 = vadd.f32 %v1776, %v1953
      %v1999 = vadd.f32 %v1777, %v1956
      %v2000 = vadd.f32 %v1778, %v1958
      %v2001 = vadd.f32 %v1779, %v1961
      %v2002 = vadd.f32 %v1780, %v1963
      %v2003 = vadd.f32 %v1781, %v1966
      %v2004 = vadd.f32 %v1782, %v1968
      %v2005 = vadd.f32 %v1783, %v1971
      %v2006 = vadd.f32 %v1784, %v1973
      %s2007 = scalar_lea.vmem [#allocation2], 48
      %v2008 = vld [vmem:[%s2007] sm:$0xff]
      %v2009 = vld [vmem:[%s2007 + $0x8] sm:$0xff]
      %v2010 = vld [vmem:[%s2007 + $0x18] sm:$0xff]
      %v2011 = vld [vmem:[%s2007 + $0x20] sm:$0xff]
      %v2012 = vld [vmem:[%s2007 + $0x30] sm:$0xff]
      %v2013 = vld [vmem:[%s2007 + $0x38] sm:$0xff]
      %v2014 = vld [vmem:[%s2007 + $0x48] sm:$0xff]
      %v2015 = vld [vmem:[%s2007 + $0x50] sm:$0xff]
      %v2016 = vld [vmem:[%s2007 + $0x60] sm:$0xff]
      %v2017 = vld [vmem:[%s2007 + $0x68] sm:$0xff]
      %v2018 = vld [vmem:[%s2007 + $0x78] sm:$0xff]
      %v2019 = vld [vmem:[%s2007 + $0x80] sm:$0xff]
      %v2020 = vld [vmem:[%s2007 + $0x90] sm:$0xff]
      %v2021 = vld [vmem:[%s2007 + $0x98] sm:$0xff]
      %v2022 = vld [vmem:[%s2007 + $0xa8] sm:$0xff]
      %v2023 = vld [vmem:[%s2007 + $0xb0] sm:$0xff]
      %v2024 = vld [vmem:[%s2007 + $0xc0] sm:$0xff]
      %v2025 = vld [vmem:[%s2007 + $0xc8] sm:$0xff]
      %v2026 = vld [vmem:[%s2007 + $0xd8] sm:$0xff]
      %v2027 = vld [vmem:[%s2007 + $0xe0] sm:$0xff]
      %v2028 = vld [vmem:[%s2007 + $0xf0] sm:$0xff]
      %v2029 = vld [vmem:[%s2007 + $0xf8] sm:$0xff]
      %v2030 = vld [vmem:[%s2007 + $0x108] sm:$0xff]
      %v2031 = vld [vmem:[%s2007 + $0x110] sm:$0xff]
      %v2032 = vld [vmem:[%s2007 + $0x120] sm:$0xff]
      %v2033 = vld [vmem:[%s2007 + $0x128] sm:$0xff]
      %v2034 = vld [vmem:[%s2007 + $0x138] sm:$0xff]
      %v2035 = vld [vmem:[%s2007 + $0x140] sm:$0xff]
      %v2036 = vld [vmem:[%s2007 + $0x150] sm:$0xff]
      %v2037 = vld [vmem:[%s2007 + $0x158] sm:$0xff]
      %v2038 = vld [vmem:[%s2007 + $0x168] sm:$0xff]
      %v2039 = vld [vmem:[%s2007 + $0x170] sm:$0xff]
      %v2040 = vpack.c.bf16 %v2009, %v2008
      %v2041 = vpack.c.bf16 %v2011, %v2010
      %v2042 = vpack.c.bf16 %v2013, %v2012
      %v2043 = vpack.c.bf16 %v2015, %v2014
      %v2044 = vpack.c.bf16 %v2017, %v2016
      %v2045 = vpack.c.bf16 %v2019, %v2018
      %v2046 = vpack.c.bf16 %v2021, %v2020
      %v2047 = vpack.c.bf16 %v2023, %v2022
      %v2048 = vpack.c.bf16 %v2025, %v2024
      %v2049 = vpack.c.bf16 %v2027, %v2026
      %v2050 = vpack.c.bf16 %v2029, %v2028
      %v2051 = vpack.c.bf16 %v2031, %v2030
      %v2052 = vpack.c.bf16 %v2033, %v2032
      %v2053 = vpack.c.bf16 %v2035, %v2034
      %v2054 = vpack.c.bf16 %v2037, %v2036
      %v2055 = vpack.c.bf16 %v2039, %v2038
      %s2056 = scalar_lea.vmem %s4, 12
      %v2057 = vld [vmem:[%s2056] sm:$0x3]
      %v2059 = vsel %vm478, %v2040, 0
      %v2062 = vsel %vm478, %v2041, 0
      %v2065 = vsel %vm478, %v2042, 0
      %v2068 = vsel %vm478, %v2043, 0
      %v2071 = vsel %vm478, %v2044, 0
      %v2074 = vsel %vm478, %v2045, 0
      %v2077 = vsel %vm478, %v2046, 0
      %v2080 = vsel %vm478, %v2047, 0
      %v2083 = vsel %vm478, %v2048, 0
      %v2086 = vsel %vm478, %v2049, 0
      %v2089 = vsel %vm478, %v2050, 0
      %v2092 = vsel %vm478, %v2051, 0
      %v2095 = vsel %vm478, %v2052, 0
      %v2098 = vsel %vm478, %v2053, 0
      %v2101 = vsel %vm478, %v2054, 0
      %v2104 = vsel %vm478, %v2055, 0
      %v2107 = vsel %vm527, %v2057, 0
      %2109 = vmatpush.bf16.msra.mxu0 0
      %2110 = vmatpush.bf16.msra.mxu0 0
      %2111 = vmatpush.bf16.msra.mxu0 0
      %2112 = vmatpush.bf16.msra.mxu0 0
      %2113 = vmatpush.bf16.msra.mxu0 0
      %2114 = vmatpush.bf16.msra.mxu0 0
      %2115 = vmatpush.bf16.msra.mxu0 0
      %2116 = vmatpush.bf16.msra.mxu0 %v2107
      %2117 = vmatmul.bf16.gmra.mxu0 %v2059
      %v2118 = vpop.f32.mrf.mxu0
      %v2119 = vadd.f32 0.0, %v2118
      %v2120 = vpop.f32.mrf.mxu0
      %v2121 = vadd.f32 0.0, %v2120
      %2122 = vmatmul.bf16.gmra.mxu0 %v2062
      %v2123 = vpop.f32.mrf.mxu0
      %v2124 = vadd.f32 0.0, %v2123
      %v2125 = vpop.f32.mrf.mxu0
      %v2126 = vadd.f32 0.0, %v2125
      %2127 = vmatmul.bf16.gmra.mxu0 %v2065
      %v2128 = vpop.f32.mrf.mxu0
      %v2129 = vadd.f32 0.0, %v2128
      %v2130 = vpop.f32.mrf.mxu0
      %v2131 = vadd.f32 0.0, %v2130
      %2132 = vmatmul.bf16.gmra.mxu0 %v2068
      %v2133 = vpop.f32.mrf.mxu0
      %v2134 = vadd.f32 0.0, %v2133
      %v2135 = vpop.f32.mrf.mxu0
      %v2136 = vadd.f32 0.0, %v2135
      %2137 = vmatmul.bf16.gmra.mxu0 %v2071
      %v2138 = vpop.f32.mrf.mxu0
      %v2139 = vadd.f32 0.0, %v2138
      %v2140 = vpop.f32.mrf.mxu0
      %v2141 = vadd.f32 0.0, %v2140
      %2142 = vmatmul.bf16.gmra.mxu0 %v2074
      %v2143 = vpop.f32.mrf.mxu0
      %v2144 = vadd.f32 0.0, %v2143
      %v2145 = vpop.f32.mrf.mxu0
      %v2146 = vadd.f32 0.0, %v2145
      %2147 = vmatmul.bf16.gmra.mxu0 %v2077
      %v2148 = vpop.f32.mrf.mxu0
      %v2149 = vadd.f32 0.0, %v2148
      %v2150 = vpop.f32.mrf.mxu0
      %v2151 = vadd.f32 0.0, %v2150
      %2152 = vmatmul.bf16.gmra.mxu0 %v2080
      %v2153 = vpop.f32.mrf.mxu0
      %v2154 = vadd.f32 0.0, %v2153
      %v2155 = vpop.f32.mrf.mxu0
      %v2156 = vadd.f32 0.0, %v2155
      %2157 = vmatmul.bf16.gmra.mxu0 %v2083
      %v2158 = vpop.f32.mrf.mxu0
      %v2159 = vadd.f32 0.0, %v2158
      %v2160 = vpop.f32.mrf.mxu0
      %v2161 = vadd.f32 0.0, %v2160
      %2162 = vmatmul.bf16.gmra.mxu0 %v2086
      %v2163 = vpop.f32.mrf.mxu0
      %v2164 = vadd.f32 0.0, %v2163
      %v2165 = vpop.f32.mrf.mxu0
      %v2166 = vadd.f32 0.0, %v2165
      %2167 = vmatmul.bf16.gmra.mxu0 %v2089
      %v2168 = vpop.f32.mrf.mxu0
      %v2169 = vadd.f32 0.0, %v2168
      %v2170 = vpop.f32.mrf.mxu0
      %v2171 = vadd.f32 0.0, %v2170
      %2172 = vmatmul.bf16.gmra.mxu0 %v2092
      %v2173 = vpop.f32.mrf.mxu0
      %v2174 = vadd.f32 0.0, %v2173
      %v2175 = vpop.f32.mrf.mxu0
      %v2176 = vadd.f32 0.0, %v2175
      %2177 = vmatmul.bf16.gmra.mxu0 %v2095
      %v2178 = vpop.f32.mrf.mxu0
      %v2179 = vadd.f32 0.0, %v2178
      %v2180 = vpop.f32.mrf.mxu0
      %v2181 = vadd.f32 0.0, %v2180
      %2182 = vmatmul.bf16.gmra.mxu0 %v2098
      %v2183 = vpop.f32.mrf.mxu0
      %v2184 = vadd.f32 0.0, %v2183
      %v2185 = vpop.f32.mrf.mxu0
      %v2186 = vadd.f32 0.0, %v2185
      %2187 = vmatmul.bf16.gmra.mxu0 %v2101
      %v2188 = vpop.f32.mrf.mxu0
      %v2189 = vadd.f32 0.0, %v2188
      %v2190 = vpop.f32.mrf.mxu0
      %v2191 = vadd.f32 0.0, %v2190
      %2192 = vmatmul.bf16.gmra.mxu0 %v2104
      %v2193 = vpop.f32.mrf.mxu0
      %v2194 = vadd.f32 0.0, %v2193
      %v2195 = vpop.f32.mrf.mxu0
      %v2196 = vadd.f32 0.0, %v2195
      %2197 = vdwg.mxu0
      %v2198 = vadd.f32 %v1975, %v2119
      %v2199 = vadd.f32 %v1976, %v2121
      %v2200 = vadd.f32 %v1977, %v2124
      %v2201 = vadd.f32 %v1978, %v2126
      %v2202 = vadd.f32 %v1979, %v2129
      %v2203 = vadd.f32 %v1980, %v2131
      %v2204 = vadd.f32 %v1981, %v2134
      %v2205 = vadd.f32 %v1982, %v2136
      %v2206 = vadd.f32 %v1983, %v2139
      %v2207 = vadd.f32 %v1984, %v2141
      %v2208 = vadd.f32 %v1985, %v2144
      %v2209 = vadd.f32 %v1986, %v2146
      %v2210 = vadd.f32 %v1987, %v2149
      %v2211 = vadd.f32 %v1988, %v2151
      %v2212 = vadd.f32 %v1989, %v2154
      %v2213 = vadd.f32 %v1990, %v2156
      %v2214 = vadd.f32 %v1991, %v2159
      %v2215 = vadd.f32 %v1992, %v2161
      %v2216 = vadd.f32 %v1993, %v2164
      %v2217 = vadd.f32 %v1994, %v2166
      %v2218 = vadd.f32 %v1995, %v2169
      %v2219 = vadd.f32 %v1996, %v2171
      %v2220 = vadd.f32 %v1997, %v2174
      %v2221 = vadd.f32 %v1998, %v2176
      %v2222 = vadd.f32 %v1999, %v2179
      %v2223 = vadd.f32 %v2000, %v2181
      %v2224 = vadd.f32 %v2001, %v2184
      %v2225 = vadd.f32 %v2002, %v2186
      %v2226 = vadd.f32 %v2003, %v2189
      %v2227 = vadd.f32 %v2004, %v2191
      %v2228 = vadd.f32 %v2005, %v2194
      %v2229 = vadd.f32 %v2006, %v2196
      %v2230 = vld [vmem:[%s2007 + $0x1] sm:$0xff]
      %v2231 = vld [vmem:[%s2007 + $0x9] sm:$0xff]
      %v2232 = vld [vmem:[%s2007 + $0x19] sm:$0xff]
      %v2233 = vld [vmem:[%s2007 + $0x21] sm:$0xff]
      %v2234 = vld [vmem:[%s2007 + $0x31] sm:$0xff]
      %v2235 = vld [vmem:[%s2007 + $0x39] sm:$0xff]
      %v2236 = vld [vmem:[%s2007 + $0x49] sm:$0xff]
      %v2237 = vld [vmem:[%s2007 + $0x51] sm:$0xff]
      %v2238 = vld [vmem:[%s2007 + $0x61] sm:$0xff]
      %v2239 = vld [vmem:[%s2007 + $0x69] sm:$0xff]
      %v2240 = vld [vmem:[%s2007 + $0x79] sm:$0xff]
      %v2241 = vld [vmem:[%s2007 + $0x81] sm:$0xff]
      %v2242 = vld [vmem:[%s2007 + $0x91] sm:$0xff]
      %v2243 = vld [vmem:[%s2007 + $0x99] sm:$0xff]
      %v2244 = vld [vmem:[%s2007 + $0xa9] sm:$0xff]
      %v2245 = vld [vmem:[%s2007 + $0xb1] sm:$0xff]
      %v2246 = vld [vmem:[%s2007 + $0xc1] sm:$0xff]
      %v2247 = vld [vmem:[%s2007 + $0xc9] sm:$0xff]
      %v2248 = vld [vmem:[%s2007 + $0xd9] sm:$0xff]
      %v2249 = vld [vmem:[%s2007 + $0xe1] sm:$0xff]
      %v2250 = vld [vmem:[%s2007 + $0xf1] sm:$0xff]
      %v2251 = vld [vmem:[%s2007 + $0xf9] sm:$0xff]
      %v2252 = vld [vmem:[%s2007 + $0x109] sm:$0xff]
      %v2253 = vld [vmem:[%s2007 + $0x111] sm:$0xff]
      %v2254 = vld [vmem:[%s2007 + $0x121] sm:$0xff]
      %v2255 = vld [vmem:[%s2007 + $0x129] sm:$0xff]
      %v2256 = vld [vmem:[%s2007 + $0x139] sm:$0xff]
      %v2257 = vld [vmem:[%s2007 + $0x141] sm:$0xff]
      %v2258 = vld [vmem:[%s2007 + $0x151] sm:$0xff]
      %v2259 = vld [vmem:[%s2007 + $0x159] sm:$0xff]
      %v2260 = vld [vmem:[%s2007 + $0x169] sm:$0xff]
      %v2261 = vld [vmem:[%s2007 + $0x171] sm:$0xff]
      %v2262 = vpack.c.bf16 %v2231, %v2230
      %v2263 = vpack.c.bf16 %v2233, %v2232
      %v2264 = vpack.c.bf16 %v2235, %v2234
      %v2265 = vpack.c.bf16 %v2237, %v2236
      %v2266 = vpack.c.bf16 %v2239, %v2238
      %v2267 = vpack.c.bf16 %v2241, %v2240
      %v2268 = vpack.c.bf16 %v2243, %v2242
      %v2269 = vpack.c.bf16 %v2245, %v2244
      %v2270 = vpack.c.bf16 %v2247, %v2246
      %v2271 = vpack.c.bf16 %v2249, %v2248
      %v2272 = vpack.c.bf16 %v2251, %v2250
      %v2273 = vpack.c.bf16 %v2253, %v2252
      %v2274 = vpack.c.bf16 %v2255, %v2254
      %v2275 = vpack.c.bf16 %v2257, %v2256
      %v2276 = vpack.c.bf16 %v2259, %v2258
      %v2277 = vpack.c.bf16 %v2261, %v2260
      %s2278 = scalar_lea.vmem %s4, 14
      %v2279 = vld [vmem:[%s2278] sm:$0x3]
      %v2281 = vsel %vm478, %v2262, 0
      %v2284 = vsel %vm478, %v2263, 0
      %v2287 = vsel %vm478, %v2264, 0
      %v2290 = vsel %vm478, %v2265, 0
      %v2293 = vsel %vm478, %v2266, 0
      %v2296 = vsel %vm478, %v2267, 0
      %v2299 = vsel %vm478, %v2268, 0
      %v2302 = vsel %vm478, %v2269, 0
      %v2305 = vsel %vm478, %v2270, 0
      %v2308 = vsel %vm478, %v2271, 0
      %v2311 = vsel %vm478, %v2272, 0
      %v2314 = vsel %vm478, %v2273, 0
      %v2317 = vsel %vm478, %v2274, 0
      %v2320 = vsel %vm478, %v2275, 0
      %v2323 = vsel %vm478, %v2276, 0
      %v2326 = vsel %vm478, %v2277, 0
      %v2329 = vsel %vm527, %v2279, 0
      %2331 = vmatpush.bf16.msra.mxu0 0
      %2332 = vmatpush.bf16.msra.mxu0 0
      %2333 = vmatpush.bf16.msra.mxu0 0
      %2334 = vmatpush.bf16.msra.mxu0 0
      %2335 = vmatpush.bf16.msra.mxu0 0
      %2336 = vmatpush.bf16.msra.mxu0 0
      %2337 = vmatpush.bf16.msra.mxu0 0
      %2338 = vmatpush.bf16.msra.mxu0 %v2329
      %2339 = vmatmul.bf16.gmra.mxu0 %v2281
      %v2340 = vpop.f32.mrf.mxu0
      %v2341 = vadd.f32 0.0, %v2340
      %v2342 = vpop.f32.mrf.mxu0
      %v2343 = vadd.f32 0.0, %v2342
      %2344 = vmatmul.bf16.gmra.mxu0 %v2284
      %v2345 = vpop.f32.mrf.mxu0
      %v2346 = vadd.f32 0.0, %v2345
      %v2347 = vpop.f32.mrf.mxu0
      %v2348 = vadd.f32 0.0, %v2347
      %2349 = vmatmul.bf16.gmra.mxu0 %v2287
      %v2350 = vpop.f32.mrf.mxu0
      %v2351 = vadd.f32 0.0, %v2350
      %v2352 = vpop.f32.mrf.mxu0
      %v2353 = vadd.f32 0.0, %v2352
      %2354 = vmatmul.bf16.gmra.mxu0 %v2290
      %v2355 = vpop.f32.mrf.mxu0
      %v2356 = vadd.f32 0.0, %v2355
      %v2357 = vpop.f32.mrf.mxu0
      %v2358 = vadd.f32 0.0, %v2357
      %2359 = vmatmul.bf16.gmra.mxu0 %v2293
      %v2360 = vpop.f32.mrf.mxu0
      %v2361 = vadd.f32 0.0, %v2360
      %v2362 = vpop.f32.mrf.mxu0
      %v2363 = vadd.f32 0.0, %v2362
      %2364 = vmatmul.bf16.gmra.mxu0 %v2296
      %v2365 = vpop.f32.mrf.mxu0
      %v2366 = vadd.f32 0.0, %v2365
      %v2367 = vpop.f32.mrf.mxu0
      %v2368 = vadd.f32 0.0, %v2367
      %2369 = vmatmul.bf16.gmra.mxu0 %v2299
      %v2370 = vpop.f32.mrf.mxu0
      %v2371 = vadd.f32 0.0, %v2370
      %v2372 = vpop.f32.mrf.mxu0
      %v2373 = vadd.f32 0.0, %v2372
      %2374 = vmatmul.bf16.gmra.mxu0 %v2302
      %v2375 = vpop.f32.mrf.mxu0
      %v2376 = vadd.f32 0.0, %v2375
      %v2377 = vpop.f32.mrf.mxu0
      %v2378 = vadd.f32 0.0, %v2377
      %2379 = vmatmul.bf16.gmra.mxu0 %v2305
      %v2380 = vpop.f32.mrf.mxu0
      %v2381 = vadd.f32 0.0, %v2380
      %v2382 = vpop.f32.mrf.mxu0
      %v2383 = vadd.f32 0.0, %v2382
      %2384 = vmatmul.bf16.gmra.mxu0 %v2308
      %v2385 = vpop.f32.mrf.mxu0
      %v2386 = vadd.f32 0.0, %v2385
      %v2387 = vpop.f32.mrf.mxu0
      %v2388 = vadd.f32 0.0, %v2387
      %2389 = vmatmul.bf16.gmra.mxu0 %v2311
      %v2390 = vpop.f32.mrf.mxu0
      %v2391 = vadd.f32 0.0, %v2390
      %v2392 = vpop.f32.mrf.mxu0
      %v2393 = vadd.f32 0.0, %v2392
      %2394 = vmatmul.bf16.gmra.mxu0 %v2314
      %v2395 = vpop.f32.mrf.mxu0
      %v2396 = vadd.f32 0.0, %v2395
      %v2397 = vpop.f32.mrf.mxu0
      %v2398 = vadd.f32 0.0, %v2397
      %2399 = vmatmul.bf16.gmra.mxu0 %v2317
      %v2400 = vpop.f32.mrf.mxu0
      %v2401 = vadd.f32 0.0, %v2400
      %v2402 = vpop.f32.mrf.mxu0
      %v2403 = vadd.f32 0.0, %v2402
      %2404 = vmatmul.bf16.gmra.mxu0 %v2320
      %v2405 = vpop.f32.mrf.mxu0
      %v2406 = vadd.f32 0.0, %v2405
      %v2407 = vpop.f32.mrf.mxu0
      %v2408 = vadd.f32 0.0, %v2407
      %2409 = vmatmul.bf16.gmra.mxu0 %v2323
      %v2410 = vpop.f32.mrf.mxu0
      %v2411 = vadd.f32 0.0, %v2410
      %v2412 = vpop.f32.mrf.mxu0
      %v2413 = vadd.f32 0.0, %v2412
      %2414 = vmatmul.bf16.gmra.mxu0 %v2326
      %v2415 = vpop.f32.mrf.mxu0
      %v2416 = vadd.f32 0.0, %v2415
      %v2417 = vpop.f32.mrf.mxu0
      %v2418 = vadd.f32 0.0, %v2417
      %2419 = vdwg.mxu0
      %v2420 = vadd.f32 %v2198, %v2341
      %v2421 = vadd.f32 %v2199, %v2343
      %v2422 = vadd.f32 %v2200, %v2346
      %v2423 = vadd.f32 %v2201, %v2348
      %v2424 = vadd.f32 %v2202, %v2351
      %v2425 = vadd.f32 %v2203, %v2353
      %v2426 = vadd.f32 %v2204, %v2356
      %v2427 = vadd.f32 %v2205, %v2358
      %v2428 = vadd.f32 %v2206, %v2361
      %v2429 = vadd.f32 %v2207, %v2363
      %v2430 = vadd.f32 %v2208, %v2366
      %v2431 = vadd.f32 %v2209, %v2368
      %v2432 = vadd.f32 %v2210, %v2371
      %v2433 = vadd.f32 %v2211, %v2373
      %v2434 = vadd.f32 %v2212, %v2376
      %v2435 = vadd.f32 %v2213, %v2378
      %v2436 = vadd.f32 %v2214, %v2381
      %v2437 = vadd.f32 %v2215, %v2383
      %v2438 = vadd.f32 %v2216, %v2386
      %v2439 = vadd.f32 %v2217, %v2388
      %v2440 = vadd.f32 %v2218, %v2391
      %v2441 = vadd.f32 %v2219, %v2393
      %v2442 = vadd.f32 %v2220, %v2396
      %v2443 = vadd.f32 %v2221, %v2398
      %v2444 = vadd.f32 %v2222, %v2401
      %v2445 = vadd.f32 %v2223, %v2403
      %v2446 = vadd.f32 %v2224, %v2406
      %v2447 = vadd.f32 %v2225, %v2408
      %v2448 = vadd.f32 %v2226, %v2411
      %v2449 = vadd.f32 %v2227, %v2413
      %v2450 = vadd.f32 %v2228, %v2416
      %v2451 = vadd.f32 %v2229, %v2418
      %v2452 = vld [vmem:[%s2007 + $0x2] sm:$0xff]
      %v2453 = vld [vmem:[%s2007 + $0xa] sm:$0xff]
      %v2454 = vld [vmem:[%s2007 + $0x1a] sm:$0xff]
      %v2455 = vld [vmem:[%s2007 + $0x22] sm:$0xff]
      %v2456 = vld [vmem:[%s2007 + $0x32] sm:$0xff]
      %v2457 = vld [vmem:[%s2007 + $0x3a] sm:$0xff]
      %v2458 = vld [vmem:[%s2007 + $0x4a] sm:$0xff]
      %v2459 = vld [vmem:[%s2007 + $0x52] sm:$0xff]
      %v2460 = vld [vmem:[%s2007 + $0x62] sm:$0xff]
      %v2461 = vld [vmem:[%s2007 + $0x6a] sm:$0xff]
      %v2462 = vld [vmem:[%s2007 + $0x7a] sm:$0xff]
      %v2463 = vld [vmem:[%s2007 + $0x82] sm:$0xff]
      %v2464 = vld [vmem:[%s2007 + $0x92] sm:$0xff]
      %v2465 = vld [vmem:[%s2007 + $0x9a] sm:$0xff]
      %v2466 = vld [vmem:[%s2007 + $0xaa] sm:$0xff]
      %v2467 = vld [vmem:[%s2007 + $0xb2] sm:$0xff]
      %v2468 = vld [vmem:[%s2007 + $0xc2] sm:$0xff]
      %v2469 = vld [vmem:[%s2007 + $0xca] sm:$0xff]
      %v2470 = vld [vmem:[%s2007 + $0xda] sm:$0xff]
      %v2471 = vld [vmem:[%s2007 + $0xe2] sm:$0xff]
      %v2472 = vld [vmem:[%s2007 + $0xf2] sm:$0xff]
      %v2473 = vld [vmem:[%s2007 + $0xfa] sm:$0xff]
      %v2474 = vld [vmem:[%s2007 + $0x10a] sm:$0xff]
      %v2475 = vld [vmem:[%s2007 + $0x112] sm:$0xff]
      %v2476 = vld [vmem:[%s2007 + $0x122] sm:$0xff]
      %v2477 = vld [vmem:[%s2007 + $0x12a] sm:$0xff]
      %v2478 = vld [vmem:[%s2007 + $0x13a] sm:$0xff]
      %v2479 = vld [vmem:[%s2007 + $0x142] sm:$0xff]
      %v2480 = vld [vmem:[%s2007 + $0x152] sm:$0xff]
      %v2481 = vld [vmem:[%s2007 + $0x15a] sm:$0xff]
      %v2482 = vld [vmem:[%s2007 + $0x16a] sm:$0xff]
      %v2483 = vld [vmem:[%s2007 + $0x172] sm:$0xff]
      %v2484 = vpack.c.bf16 %v2453, %v2452
      %v2485 = vpack.c.bf16 %v2455, %v2454
      %v2486 = vpack.c.bf16 %v2457, %v2456
      %v2487 = vpack.c.bf16 %v2459, %v2458
      %v2488 = vpack.c.bf16 %v2461, %v2460
      %v2489 = vpack.c.bf16 %v2463, %v2462
      %v2490 = vpack.c.bf16 %v2465, %v2464
      %v2491 = vpack.c.bf16 %v2467, %v2466
      %v2492 = vpack.c.bf16 %v2469, %v2468
      %v2493 = vpack.c.bf16 %v2471, %v2470
      %v2494 = vpack.c.bf16 %v2473, %v2472
      %v2495 = vpack.c.bf16 %v2475, %v2474
      %v2496 = vpack.c.bf16 %v2477, %v2476
      %v2497 = vpack.c.bf16 %v2479, %v2478
      %v2498 = vpack.c.bf16 %v2481, %v2480
      %v2499 = vpack.c.bf16 %v2483, %v2482
      %s2500 = scalar_lea.vmem %s4, 16
      %v2501 = vld [vmem:[%s2500] sm:$0x3]
      %v2503 = vsel %vm478, %v2484, 0
      %v2506 = vsel %vm478, %v2485, 0
      %v2509 = vsel %vm478, %v2486, 0
      %v2512 = vsel %vm478, %v2487, 0
      %v2515 = vsel %vm478, %v2488, 0
      %v2518 = vsel %vm478, %v2489, 0
      %v2521 = vsel %vm478, %v2490, 0
      %v2524 = vsel %vm478, %v2491, 0
      %v2527 = vsel %vm478, %v2492, 0
      %v2530 = vsel %vm478, %v2493, 0
      %v2533 = vsel %vm478, %v2494, 0
      %v2536 = vsel %vm478, %v2495, 0
      %v2539 = vsel %vm478, %v2496, 0
      %v2542 = vsel %vm478, %v2497, 0
      %v2545 = vsel %vm478, %v2498, 0
      %v2548 = vsel %vm478, %v2499, 0
      %v2551 = vsel %vm527, %v2501, 0
      %2553 = vmatpush.bf16.msra.mxu0 0
      %2554 = vmatpush.bf16.msra.mxu0 0
      %2555 = vmatpush.bf16.msra.mxu0 0
      %2556 = vmatpush.bf16.msra.mxu0 0
      %2557 = vmatpush.bf16.msra.mxu0 0
      %2558 = vmatpush.bf16.msra.mxu0 0
      %2559 = vmatpush.bf16.msra.mxu0 0
      %2560 = vmatpush.bf16.msra.mxu0 %v2551
      %2561 = vmatmul.bf16.gmra.mxu0 %v2503
      %v2562 = vpop.f32.mrf.mxu0
      %v2563 = vadd.f32 0.0, %v2562
      %v2564 = vpop.f32.mrf.mxu0
      %v2565 = vadd.f32 0.0, %v2564
      %2566 = vmatmul.bf16.gmra.mxu0 %v2506
      %v2567 = vpop.f32.mrf.mxu0
      %v2568 = vadd.f32 0.0, %v2567
      %v2569 = vpop.f32.mrf.mxu0
      %v2570 = vadd.f32 0.0, %v2569
      %2571 = vmatmul.bf16.gmra.mxu0 %v2509
      %v2572 = vpop.f32.mrf.mxu0
      %v2573 = vadd.f32 0.0, %v2572
      %v2574 = vpop.f32.mrf.mxu0
      %v2575 = vadd.f32 0.0, %v2574
      %2576 = vmatmul.bf16.gmra.mxu0 %v2512
      %v2577 = vpop.f32.mrf.mxu0
      %v2578 = vadd.f32 0.0, %v2577
      %v2579 = vpop.f32.mrf.mxu0
      %v2580 = vadd.f32 0.0, %v2579
      %2581 = vmatmul.bf16.gmra.mxu0 %v2515
      %v2582 = vpop.f32.mrf.mxu0
      %v2583 = vadd.f32 0.0, %v2582
      %v2584 = vpop.f32.mrf.mxu0
      %v2585 = vadd.f32 0.0, %v2584
      %2586 = vmatmul.bf16.gmra.mxu0 %v2518
      %v2587 = vpop.f32.mrf.mxu0
      %v2588 = vadd.f32 0.0, %v2587
      %v2589 = vpop.f32.mrf.mxu0
      %v2590 = vadd.f32 0.0, %v2589
      %2591 = vmatmul.bf16.gmra.mxu0 %v2521
      %v2592 = vpop.f32.mrf.mxu0
      %v2593 = vadd.f32 0.0, %v2592
      %v2594 = vpop.f32.mrf.mxu0
      %v2595 = vadd.f32 0.0, %v2594
      %2596 = vmatmul.bf16.gmra.mxu0 %v2524
      %v2597 = vpop.f32.mrf.mxu0
      %v2598 = vadd.f32 0.0, %v2597
      %v2599 = vpop.f32.mrf.mxu0
      %v2600 = vadd.f32 0.0, %v2599
      %2601 = vmatmul.bf16.gmra.mxu0 %v2527
      %v2602 = vpop.f32.mrf.mxu0
      %v2603 = vadd.f32 0.0, %v2602
      %v2604 = vpop.f32.mrf.mxu0
      %v2605 = vadd.f32 0.0, %v2604
      %2606 = vmatmul.bf16.gmra.mxu0 %v2530
      %v2607 = vpop.f32.mrf.mxu0
      %v2608 = vadd.f32 0.0, %v2607
      %v2609 = vpop.f32.mrf.mxu0
      %v2610 = vadd.f32 0.0, %v2609
      %2611 = vmatmul.bf16.gmra.mxu0 %v2533
      %v2612 = vpop.f32.mrf.mxu0
      %v2613 = vadd.f32 0.0, %v2612
      %v2614 = vpop.f32.mrf.mxu0
      %v2615 = vadd.f32 0.0, %v2614
      %2616 = vmatmul.bf16.gmra.mxu0 %v2536
      %v2617 = vpop.f32.mrf.mxu0
      %v2618 = vadd.f32 0.0, %v2617
      %v2619 = vpop.f32.mrf.mxu0
      %v2620 = vadd.f32 0.0, %v2619
      %2621 = vmatmul.bf16.gmra.mxu0 %v2539
      %v2622 = vpop.f32.mrf.mxu0
      %v2623 = vadd.f32 0.0, %v2622
      %v2624 = vpop.f32.mrf.mxu0
      %v2625 = vadd.f32 0.0, %v2624
      %2626 = vmatmul.bf16.gmra.mxu0 %v2542
      %v2627 = vpop.f32.mrf.mxu0
      %v2628 = vadd.f32 0.0, %v2627
      %v2629 = vpop.f32.mrf.mxu0
      %v2630 = vadd.f32 0.0, %v2629
      %2631 = vmatmul.bf16.gmra.mxu0 %v2545
      %v2632 = vpop.f32.mrf.mxu0
      %v2633 = vadd.f32 0.0, %v2632
      %v2634 = vpop.f32.mrf.mxu0
      %v2635 = vadd.f32 0.0, %v2634
      %2636 = vmatmul.bf16.gmra.mxu0 %v2548
      %v2637 = vpop.f32.mrf.mxu0
      %v2638 = vadd.f32 0.0, %v2637
      %v2639 = vpop.f32.mrf.mxu0
      %v2640 = vadd.f32 0.0, %v2639
      %2641 = vdwg.mxu0
      %v2642 = vadd.f32 %v2420, %v2563
      %v2643 = vadd.f32 %v2421, %v2565
      %v2644 = vadd.f32 %v2422, %v2568
      %v2645 = vadd.f32 %v2423, %v2570
      %v2646 = vadd.f32 %v2424, %v2573
      %v2647 = vadd.f32 %v2425, %v2575
      %v2648 = vadd.f32 %v2426, %v2578
      %v2649 = vadd.f32 %v2427, %v2580
      %v2650 = vadd.f32 %v2428, %v2583
      %v2651 = vadd.f32 %v2429, %v2585
      %v2652 = vadd.f32 %v2430, %v2588
      %v2653 = vadd.f32 %v2431, %v2590
      %v2654 = vadd.f32 %v2432, %v2593
      %v2655 = vadd.f32 %v2433, %v2595
      %v2656 = vadd.f32 %v2434, %v2598
      %v2657 = vadd.f32 %v2435, %v2600
      %v2658 = vadd.f32 %v2436, %v2603
      %v2659 = vadd.f32 %v2437, %v2605
      %v2660 = vadd.f32 %v2438, %v2608
      %v2661 = vadd.f32 %v2439, %v2610
      %v2662 = vadd.f32 %v2440, %v2613
      %v2663 = vadd.f32 %v2441, %v2615
      %v2664 = vadd.f32 %v2442, %v2618
      %v2665 = vadd.f32 %v2443, %v2620
      %v2666 = vadd.f32 %v2444, %v2623
      %v2667 = vadd.f32 %v2445, %v2625
      %v2668 = vadd.f32 %v2446, %v2628
      %v2669 = vadd.f32 %v2447, %v2630
      %v2670 = vadd.f32 %v2448, %v2633
      %v2671 = vadd.f32 %v2449, %v2635
      %v2672 = vadd.f32 %v2450, %v2638
      %v2673 = vadd.f32 %v2451, %v2640
      %v2674 = vld [vmem:[%s5] sm:$0x1]
      %v2676 = vperm.slane %v2674, 0
      %v2678 = vadd.f32 %v2642, %v2676
      %v2679 = vadd.f32 %v2643, %v2676
      %v2680 = vadd.f32 %v2644, %v2676
      %v2681 = vadd.f32 %v2645, %v2676
      %v2682 = vadd.f32 %v2646, %v2676
      %v2683 = vadd.f32 %v2647, %v2676
      %v2684 = vadd.f32 %v2648, %v2676
      %v2685 = vadd.f32 %v2649, %v2676
      %v2686 = vadd.f32 %v2650, %v2676
      %v2687 = vadd.f32 %v2651, %v2676
      %v2688 = vadd.f32 %v2652, %v2676
      %v2689 = vadd.f32 %v2653, %v2676
      %v2690 = vadd.f32 %v2654, %v2676
      %v2691 = vadd.f32 %v2655, %v2676
      %v2692 = vadd.f32 %v2656, %v2676
      %v2693 = vadd.f32 %v2657, %v2676
      %v2694 = vadd.f32 %v2658, %v2676
      %v2695 = vadd.f32 %v2659, %v2676
      %v2696 = vadd.f32 %v2660, %v2676
      %v2697 = vadd.f32 %v2661, %v2676
      %v2698 = vadd.f32 %v2662, %v2676
      %v2699 = vadd.f32 %v2663, %v2676
      %v2700 = vadd.f32 %v2664, %v2676
      %v2701 = vadd.f32 %v2665, %v2676
      %v2702 = vadd.f32 %v2666, %v2676
      %v2703 = vadd.f32 %v2667, %v2676
      %v2704 = vadd.f32 %v2668, %v2676
      %v2705 = vadd.f32 %v2669, %v2676
      %v2706 = vadd.f32 %v2670, %v2676
      %v2707 = vadd.f32 %v2671, %v2676
      %v2708 = vadd.f32 %v2672, %v2676
      %v2709 = vadd.f32 %v2673, %v2676
      %v2710 = vmax.f32 %v2678, 0.0
      %v2711 = vmax.f32 %v2679, 0.0
      %v2712 = vmax.f32 %v2680, 0.0
      %v2713 = vmax.f32 %v2681, 0.0
      %v2714 = vmax.f32 %v2682, 0.0
      %v2715 = vmax.f32 %v2683, 0.0
      %v2716 = vmax.f32 %v2684, 0.0
      %v2717 = vmax.f32 %v2685, 0.0
      %v2718 = vmax.f32 %v2686, 0.0
      %v2719 = vmax.f32 %v2687, 0.0
      %v2720 = vmax.f32 %v2688, 0.0
      %v2721 = vmax.f32 %v2689, 0.0
      %v2722 = vmax.f32 %v2690, 0.0
      %v2723 = vmax.f32 %v2691, 0.0
      %v2724 = vmax.f32 %v2692, 0.0
      %v2725 = vmax.f32 %v2693, 0.0
      %v2726 = vmax.f32 %v2694, 0.0
      %v2727 = vmax.f32 %v2695, 0.0
      %v2728 = vmax.f32 %v2696, 0.0
      %v2729 = vmax.f32 %v2697, 0.0
      %v2730 = vmax.f32 %v2698, 0.0
      %v2731 = vmax.f32 %v2699, 0.0
      %v2732 = vmax.f32 %v2700, 0.0
      %v2733 = vmax.f32 %v2701, 0.0
      %v2734 = vmax.f32 %v2702, 0.0
      %v2735 = vmax.f32 %v2703, 0.0
      %v2736 = vmax.f32 %v2704, 0.0
      %v2737 = vmax.f32 %v2705, 0.0
      %v2738 = vmax.f32 %v2706, 0.0
      %v2739 = vmax.f32 %v2707, 0.0
      %v2740 = vmax.f32 %v2708, 0.0
      %v2741 = vmax.f32 %v2709, 0.0
      %v2742 = vpack.c.bf16 %v2711, %v2710
      %v2743 = vpack.c.bf16 %v2713, %v2712
      %v2744 = vpack.c.bf16 %v2715, %v2714
      %v2745 = vpack.c.bf16 %v2717, %v2716
      %v2746 = vpack.c.bf16 %v2719, %v2718
      %v2747 = vpack.c.bf16 %v2721, %v2720
      %v2748 = vpack.c.bf16 %v2723, %v2722
      %v2749 = vpack.c.bf16 %v2725, %v2724
      %v2750 = vpack.c.bf16 %v2727, %v2726
      %v2751 = vpack.c.bf16 %v2729, %v2728
      %v2752 = vpack.c.bf16 %v2731, %v2730
      %v2753 = vpack.c.bf16 %v2733, %v2732
      %v2754 = vpack.c.bf16 %v2735, %v2734
      %v2755 = vpack.c.bf16 %v2737, %v2736
      %v2756 = vpack.c.bf16 %v2739, %v2738
      %v2757 = vpack.c.bf16 %v2741, %v2740
      %v2758 = vld [vmem:[%s1] sm:$0xff]
      %v2759 = vld [vmem:[%s1 + $0x8] sm:$0xff]
      %v2760 = vld [vmem:[%s1 + $0x10] sm:$0xff]
      %v2761 = vld [vmem:[%s1 + $0x18] sm:$0xff]
      %v2762 = vld [vmem:[%s1 + $0x20] sm:$0xff]
      %v2763 = vld [vmem:[%s1 + $0x28] sm:$0xff]
      %v2764 = vld [vmem:[%s1 + $0x30] sm:$0xff]
      %v2765 = vld [vmem:[%s1 + $0x38] sm:$0xff]
      %v2774 = vunpack.c.l.b16 %v2758
      %v2775 = vunpack.c.h.b16 %v2758
      %v2776 = vunpack.c.l.b16 %v2759
      %v2777 = vunpack.c.h.b16 %v2759
      %v2778 = vunpack.c.l.b16 %v2760
      %v2779 = vunpack.c.h.b16 %v2760
      %v2780 = vunpack.c.l.b16 %v2761
      %v2781 = vunpack.c.h.b16 %v2761
      %v2782 = vunpack.c.l.b16 %v2762
      %v2783 = vunpack.c.h.b16 %v2762
      %v2784 = vunpack.c.l.b16 %v2763
      %v2785 = vunpack.c.h.b16 %v2763
      %v2786 = vunpack.c.l.b16 %v2764
      %v2787 = vunpack.c.h.b16 %v2764
      %v2788 = vunpack.c.l.b16 %v2765
      %v2789 = vunpack.c.h.b16 %v2765
      %v2790 = vpack.c.b16 %v2776, %v2774
      %v2791 = vpack.c.b16 %v2777, %v2775
      %v2792 = vpack.c.b16 %v2780, %v2778
      %v2793 = vpack.c.b16 %v2781, %v2779
      %v2794 = vpack.c.b16 %v2784, %v2782
      %v2795 = vpack.c.b16 %v2785, %v2783
      %v2796 = vpack.c.b16 %v2788, %v2786
      %v2797 = vpack.c.b16 %v2789, %v2787
      %2806 = vmatpush.bf16.msra.mxu0 %v2749
      %2807 = vmatpush.bf16.msra.mxu0 %v2748
      %2808 = vmatpush.bf16.msra.mxu0 %v2747
      %2809 = vmatpush.bf16.msra.mxu0 %v2746
      %2810 = vmatpush.bf16.msra.mxu0 %v2745
      %2811 = vmatpush.bf16.msra.mxu0 %v2744
      %2812 = vmatpush.bf16.msra.mxu0 %v2743
      %2813 = vmatpush.bf16.msra.mxu0 %v2742
      %2814 = vmatmul.bf16.gmra.mxu0 %v2790
      %v2815 = vpop.f32.mrf.mxu0
      %v2816 = vadd.f32 0.0, %v2815
      %v2817 = vpop.f32.mrf.mxu0
      %v2818 = vadd.f32 0.0, %v2817
      %2819 = vmatmul.bf16.gmra.mxu0 %v2792
      %v2820 = vpop.f32.mrf.mxu0
      %v2821 = vadd.f32 0.0, %v2820
      %v2822 = vpop.f32.mrf.mxu0
      %v2823 = vadd.f32 0.0, %v2822
      %2824 = vmatmul.bf16.gmra.mxu0 %v2794
      %v2825 = vpop.f32.mrf.mxu0
      %v2826 = vadd.f32 0.0, %v2825
      %v2827 = vpop.f32.mrf.mxu0
      %v2828 = vadd.f32 0.0, %v2827
      %2829 = vmatmul.bf16.gmra.mxu0 %v2796
      %v2830 = vpop.f32.mrf.mxu0
      %v2831 = vadd.f32 0.0, %v2830
      %v2832 = vpop.f32.mrf.mxu0
      %v2833 = vadd.f32 0.0, %v2832
      %2834 = vdwg.mxu0
      %2835 = vmatpush.bf16.msra.mxu0 %v2757
      %2836 = vmatpush.bf16.msra.mxu0 %v2756
      %2837 = vmatpush.bf16.msra.mxu0 %v2755
      %2838 = vmatpush.bf16.msra.mxu0 %v2754
      %2839 = vmatpush.bf16.msra.mxu0 %v2753
      %2840 = vmatpush.bf16.msra.mxu0 %v2752
      %2841 = vmatpush.bf16.msra.mxu0 %v2751
      %2842 = vmatpush.bf16.msra.mxu0 %v2750
      %2843 = vmatmul.bf16.gmra.mxu0 %v2791
      %v2844 = vpop.f32.mrf.mxu0
      %v2845 = vadd.f32 %v2816, %v2844
      %v2846 = vpop.f32.mrf.mxu0
      %v2847 = vadd.f32 %v2818, %v2846
      %2848 = vmatmul.bf16.gmra.mxu0 %v2793
      %v2849 = vpop.f32.mrf.mxu0
      %v2850 = vadd.f32 %v2821, %v2849
      %v2851 = vpop.f32.mrf.mxu0
      %v2852 = vadd.f32 %v2823, %v2851
      %2853 = vmatmul.bf16.gmra.mxu0 %v2795
      %v2854 = vpop.f32.mrf.mxu0
      %v2855 = vadd.f32 %v2826, %v2854
      %v2856 = vpop.f32.mrf.mxu0
      %v2857 = vadd.f32 %v2828, %v2856
      %2858 = vmatmul.bf16.gmra.mxu0 %v2797
      %v2859 = vpop.f32.mrf.mxu0
      %v2860 = vadd.f32 %v2831, %v2859
      %v2861 = vpop.f32.mrf.mxu0
      %v2862 = vadd.f32 %v2833, %v2861
      %2863 = vdwg.mxu0
      %v2864 = vpack.c.bf16 %v2847, %v2845
      %v2865 = vpack.c.bf16 %v2852, %v2850
      %v2866 = vpack.c.bf16 %v2857, %v2855
      %v2867 = vpack.c.bf16 %v2862, %v2860
      %2884 = vmatpush.bf16.msra.mxu0 %v469
      %2885 = vmatpush.bf16.msra.mxu0 %v468
      %2886 = vmatpush.bf16.msra.mxu0 %v467
      %2887 = vmatpush.bf16.msra.mxu0 %v466
      %2888 = vmatpush.bf16.msra.mxu0 %v465
      %2889 = vmatpush.bf16.msra.mxu0 %v464
      %2890 = vmatpush.bf16.msra.mxu0 %v463
      %2891 = vmatpush.bf16.msra.mxu0 %v462
      %2892 = vmatmul.bf16.gmra.mxu0 %v2790
      %v2893 = vpop.f32.mrf.mxu0
      %v2894 = vadd.f32 0.0, %v2893
      %v2895 = vpop.f32.mrf.mxu0
      %v2896 = vadd.f32 0.0, %v2895
      %2897 = vmatmul.bf16.gmra.mxu0 %v2792
      %v2898 = vpop.f32.mrf.mxu0
      %v2899 = vadd.f32 0.0, %v2898
      %v2900 = vpop.f32.mrf.mxu0
      %v2901 = vadd.f32 0.0, %v2900
      %2902 = vmatmul.bf16.gmra.mxu0 %v2794
      %v2903 = vpop.f32.mrf.mxu0
      %v2904 = vadd.f32 0.0, %v2903
      %v2905 = vpop.f32.mrf.mxu0
      %v2906 = vadd.f32 0.0, %v2905
      %2907 = vmatmul.bf16.gmra.mxu0 %v2796
      %v2908 = vpop.f32.mrf.mxu0
      %v2909 = vadd.f32 0.0, %v2908
      %v2910 = vpop.f32.mrf.mxu0
      %v2911 = vadd.f32 0.0, %v2910
      %2912 = vdwg.mxu0
      %2913 = vmatpush.bf16.msra.mxu0 %v477
      %2914 = vmatpush.bf16.msra.mxu0 %v476
      %2915 = vmatpush.bf16.msra.mxu0 %v475
      %2916 = vmatpush.bf16.msra.mxu0 %v474
      %2917 = vmatpush.bf16.msra.mxu0 %v473
      %2918 = vmatpush.bf16.msra.mxu0 %v472
      %2919 = vmatpush.bf16.msra.mxu0 %v471
      %2920 = vmatpush.bf16.msra.mxu0 %v470
      %2921 = vmatmul.bf16.gmra.mxu0 %v2791
      %v2922 = vpop.f32.mrf.mxu0
      %v2923 = vadd.f32 %v2894, %v2922
      %v2924 = vpop.f32.mrf.mxu0
      %v2925 = vadd.f32 %v2896, %v2924
      %2926 = vmatmul.bf16.gmra.mxu0 %v2793
      %v2927 = vpop.f32.mrf.mxu0
      %v2928 = vadd.f32 %v2899, %v2927
      %v2929 = vpop.f32.mrf.mxu0
      %v2930 = vadd.f32 %v2901, %v2929
      %2931 = vmatmul.bf16.gmra.mxu0 %v2795
      %v2932 = vpop.f32.mrf.mxu0
      %v2933 = vadd.f32 %v2904, %v2932
      %v2934 = vpop.f32.mrf.mxu0
      %v2935 = vadd.f32 %v2906, %v2934
      %2936 = vmatmul.bf16.gmra.mxu0 %v2797
      %v2937 = vpop.f32.mrf.mxu0
      %v2938 = vadd.f32 %v2909, %v2937
      %v2939 = vpop.f32.mrf.mxu0
      %v2940 = vadd.f32 %v2911, %v2939
      %2941 = vdwg.mxu0
      %v2942 = vpack.c.bf16 %v2925, %v2923
      %v2943 = vpack.c.bf16 %v2930, %v2928
      %v2944 = vpack.c.bf16 %v2935, %v2933
      %v2945 = vpack.c.bf16 %v2940, %v2938
      %v2946 = vld [vmem:[%s6] sm:$0x3]
      %v2947 = vld [vmem:[%s7] sm:$0x1]
      %v2949 = vperm.slane %v2947, 0
      %v2952 = vsel %vm478, %v2864, 0
      %v2955 = vsel %vm478, %v2865, 0
      %v2958 = vsel %vm478, %v2866, 0
      %v2961 = vsel %vm478, %v2867, 0
      %v2964 = vsel %vm527, %v2946, 0
      %2966 = vmatpush.bf16.msra.mxu0 0
      %2967 = vmatpush.bf16.msra.mxu0 0
      %2968 = vmatpush.bf16.msra.mxu0 0
      %2969 = vmatpush.bf16.msra.mxu0 0
      %2970 = vmatpush.bf16.msra.mxu0 0
      %2971 = vmatpush.bf16.msra.mxu0 0
      %2972 = vmatpush.bf16.msra.mxu0 0
      %2973 = vmatpush.bf16.msra.mxu0 %v2964
      %2974 = vmatmul.bf16.gmra.mxu0 %v2952
      %v2975 = vpop.f32.mrf.mxu0
      %v2976 = vadd.f32 %v2949, %v2975
      %v2977 = vpop.f32.mrf.mxu0
      %v2978 = vadd.f32 %v2949, %v2977
      %2979 = vmatmul.bf16.gmra.mxu0 %v2955
      %v2980 = vpop.f32.mrf.mxu0
      %v2981 = vadd.f32 %v2949, %v2980
      %v2982 = vpop.f32.mrf.mxu0
      %v2983 = vadd.f32 %v2949, %v2982
      %2984 = vmatmul.bf16.gmra.mxu0 %v2958
      %v2985 = vpop.f32.mrf.mxu0
      %v2986 = vadd.f32 %v2949, %v2985
      %v2987 = vpop.f32.mrf.mxu0
      %v2988 = vadd.f32 %v2949, %v2987
      %2989 = vmatmul.bf16.gmra.mxu0 %v2961
      %v2990 = vpop.f32.mrf.mxu0
      %v2991 = vadd.f32 %v2949, %v2990
      %v2992 = vpop.f32.mrf.mxu0
      %v2993 = vadd.f32 %v2949, %v2992
      %2994 = vdwg.mxu0
      %v2995 = vld [vmem:[%s8] sm:$0x3]
      %v2996 = vld [vmem:[%s9] sm:$0x1]
      %v2998 = vperm.slane %v2996, 0
      %v3001 = vsel %vm478, %v2942, 0
      %v3004 = vsel %vm478, %v2943, 0
      %v3007 = vsel %vm478, %v2944, 0
      %v3010 = vsel %vm478, %v2945, 0
      %v3013 = vsel %vm527, %v2995, 0
      %3015 = vmatpush.bf16.msra.mxu0 0
      %3016 = vmatpush.bf16.msra.mxu0 0
      %3017 = vmatpush.bf16.msra.mxu0 0
      %3018 = vmatpush.bf16.msra.mxu0 0
      %3019 = vmatpush.bf16.msra.mxu0 0
      %3020 = vmatpush.bf16.msra.mxu0 0
      %3021 = vmatpush.bf16.msra.mxu0 0
      %3022 = vmatpush.bf16.msra.mxu0 %v3013
      %3023 = vmatmul.bf16.gmra.mxu0 %v3001
      %v3024 = vpop.f32.mrf.mxu0
      %v3025 = vadd.f32 %v2998, %v3024
      %v3026 = vpop.f32.mrf.mxu0
      %v3027 = vadd.f32 %v2998, %v3026
      %3028 = vmatmul.bf16.gmra.mxu0 %v3004
      %v3029 = vpop.f32.mrf.mxu0
      %v3030 = vadd.f32 %v2998, %v3029
      %v3031 = vpop.f32.mrf.mxu0
      %v3032 = vadd.f32 %v2998, %v3031
      %3033 = vmatmul.bf16.gmra.mxu0 %v3007
      %v3034 = vpop.f32.mrf.mxu0
      %v3035 = vadd.f32 %v2998, %v3034
      %v3036 = vpop.f32.mrf.mxu0
      %v3037 = vadd.f32 %v2998, %v3036
      %3038 = vmatmul.bf16.gmra.mxu0 %v3010
      %v3039 = vpop.f32.mrf.mxu0
      %v3040 = vadd.f32 %v2998, %v3039
      %v3041 = vpop.f32.mrf.mxu0
      %v3042 = vadd.f32 %v2998, %v3041
      %3043 = vdwg.mxu0
      %v3044 = vadd.f32 %v2976, %v3025
      %v3045 = vadd.f32 %v2978, %v3027
      %v3046 = vadd.f32 %v2981, %v3030
      %v3047 = vadd.f32 %v2983, %v3032
      %v3048 = vadd.f32 %v2986, %v3035
      %v3049 = vadd.f32 %v2988, %v3037
      %v3050 = vadd.f32 %v2991, %v3040
      %v3051 = vadd.f32 %v2993, %v3042
      %v3052 = vmax.f32 %v3044, 0.0
      %v3053 = vmax.f32 %v3045, 0.0
      %v3054 = vmax.f32 %v3046, 0.0
      %v3055 = vmax.f32 %v3047, 0.0
      %v3056 = vmax.f32 %v3048, 0.0
      %v3057 = vmax.f32 %v3049, 0.0
      %v3058 = vmax.f32 %v3050, 0.0
      %v3059 = vmax.f32 %v3051, 0.0
      %vm3060 = vcmask 130048
      %3061 = vst.msk [vmem:[%s359] sm:$0xff] %vm3060, %v3052
      %3062 = vst.msk [vmem:[%s359 + $0x8] sm:$0xff] %vm3060, %v3053
      %3063 = vst.msk [vmem:[%s359 + $0x10] sm:$0xff] %vm3060, %v3054
      %3064 = vst.msk [vmem:[%s359 + $0x18] sm:$0xff] %vm3060, %v3055
      %3065 = vst.msk [vmem:[%s359 + $0x20] sm:$0xff] %vm3060, %v3056
      %3066 = vst.msk [vmem:[%s359 + $0x28] sm:$0xff] %vm3060, %v3057
      %3067 = vst.msk [vmem:[%s359 + $0x30] sm:$0xff] %vm3060, %v3058
      %3068 = vst.msk [vmem:[%s359 + $0x38] sm:$0xff] %vm3060, %v3059
      %p3069 = scmp.lt.s32.totalorder %s21, 1
      %s3070 = scalar_select %p3069, %s21, 1
      %s3071 = smul.addr %s3070, 8
      %s3072 = smul.addr %s3071, 8
      %s3073 = scalar_lea.vmem %s10, %s3072
      // Predicated region
      $region61: #{tpu_custom_call.1} parent=59 // pred_check
        %p3074 = pneg %p254
      $region62: #{tpu_custom_call.1} parent=59 // pred_check_branch
        %3076 = sbr.rel (%p3074) target = $region64
      $region63: #{tpu_custom_call.1} parent=59 // pred_region
        _
      $region64: #{tpu_custom_call.1} parent=59 // pred_fallthru
        _
    $region60: #{tpu_custom_call.1} parent=5 // pred_fallthru
      _
    %p3077 = scmp.le.s32.totalorder 2, %s16
    // Predicated region
    $region65: #{tpu_custom_call.1} parent=5 // pred_check
      %p3078 = pneg %p3077
    $region66: #{tpu_custom_call.1} parent=5 // pred_check_branch
      %3080 = sbr.rel (%p3078) target = $region68
    $region67: #{tpu_custom_call.1} parent=5 // pred_region
      %s3081 = ssub.s32 %s16, 2
      // Predicated region
      $region69: #{tpu_custom_call.1} parent=67 // pred_check
        %p3082 = pneg %p260
      $region70: #{tpu_custom_call.1} parent=67 // pred_check_branch
        %3084 = sbr.rel (%p3082) target = $region72
      $region71: #{tpu_custom_call.1} parent=67 // pred_region
        %p3085 = scmp.lt.s32.totalorder %s22, 1
        %s3086 = scalar_select %p3085, %s22, 1
        %s3087 = smul.addr %s3086, 8
        %s3088 = smul.addr %s3087, 8
        %s3089 = scalar_lea.vmem %s10, %s3088
      $region72: #{tpu_custom_call.1} parent=67 // pred_fallthru
        _
    $region68: #{tpu_custom_call.1} parent=5 // pred_fallthru
      _
  $region6: #{tpu_custom_call.1} parent=0 // loop_footer
    %s20 = sadd.s32 1, %s16
  $region7: #{tpu_custom_call.1} parent=0 // loop_footer_branch
    %15 = sbr.rel target = $region3
  $region8: #{tpu_custom_call.1} parent=0 // loop_exit
    _

</llo_original>
